<compile_context>
chip_gen: v7x
topology: tpu7x:2x2x1
jax: 0.10.0
libtpu: 0.0.40
codegen_flags: <defaults>
</compile_context>

<pallas_src>
import functools

import jax
import jax.numpy as jnp
from jax import lax
from jax.experimental import pallas as pl
from jax.experimental.pallas import tpu as pltpu

EPS = 1e-5  # nn.BatchNorm2d default eps


def fused_dense_block_kernel(x_ref, mask_ref, *refs, C0, Cg, W):
    """All DenseLayers of the block in one kernel invocation.

    The output ref doubles as the VMEM-resident (C_total, M) feature buffer:
    the block input is staged into it once and every layer appends its Cg new
    channels in place, reading back only its first Cin channels.
    """
    o_ref = refs[-1]
    layer_refs = refs[:-1]
    num_layers = len(layer_refs) // 4
    M = x_ref.shape[1]

    # Stage the block input into the feature buffer (channels [0, C0)).
    o_ref[0:C0, :] = x_ref[...].astype(o_ref.dtype)

    for l in range(num_layers):                    # static unroll over layers
        pre1, w1t, pre2, w2b = layer_refs[4 * l:4 * l + 4]
        Cin = C0 + l * Cg                          # channels visible to layer l

        # ---- BN1 (training-mode batch stats, biased var) + ReLU ------------
        # Folded to a single affine h = x*s1 + t1 (2 full-width VPU ops
        # instead of 4); variance is one-pass E[x^2] - m^2.
        x = o_ref[0:Cin, :]                        # (Cin, M)
        m1 = jnp.mean(x, axis=1, keepdims=True)
        v1 = jnp.mean(x * x, axis=1, keepdims=True) - m1 * m1
        s1 = pre1[:, 0:1] * lax.rsqrt(v1 + EPS)    # gamma1 * rsqrt(var+eps)
        t1 = pre1[:, 1:2] - m1 * s1                # beta1  - mean*s1
        h = jnp.maximum(x * s1 + t1, 0.0)

        # ---- conv1 (1x1) == one (C4, Cin) x (Cin, M) MXU matmul ------------
        # conv1's bias is skipped on purpose: the training-mode BN2 below
        # subtracts the per-channel batch mean, so a per-channel constant
        # added here cancels exactly.
        h = jnp.dot(w1t[...], h, preferred_element_type=jnp.float32)

        # ---- BN2 + ReLU, folded affine --------------------------------------
        m2 = jnp.mean(h, axis=1, keepdims=True)
        v2 = jnp.mean(h * h, axis=1, keepdims=True) - m2 * m2
        s2 = pre2[:, 0:1] * lax.rsqrt(v2 + EPS)
        t2 = pre2[:, 1:2] - m2 * s2
        h = jnp.maximum(h * s2 + t2, 0.0)          # (C4, M)

        # ---- conv2 (3x3, stride 1, pad 1) ------------------------------------
        # im2col on the lane axis: each tap aligns source and output pixels
        # with a lane rotation (XLU) of the (C4, M) plane; image-border lanes
        # are zeroed with the precomputed (9, M) masks.  All nine planes are
        # contracted in ONE (Cg, 9*C4) x (9*C4, M) MXU matmul; the bias is
        # added once after the contraction.
        planes = []
        for tap in range(9):                       # tap = ky*3 + kx
            dy, dx = tap // 3 - 1, tap % 3 - 1
            d = dy * W + dx                        # lane offset of the source
            if d == 0:
                planes.append(h)
            else:
                src = pltpu.roll(h, (-d) % M, 1)   # src[:, m] = h[:, m + d]
                planes.append(src * mask_ref[tap:tap + 1, :])
        stacked = jnp.concatenate(planes, axis=0)  # (9*C4, M)
        # TODO(synk): on v5e (1 vst slot) accumulate 9 per-tap dots instead of
        # materializing `stacked`; on v6e/v7x the single big-K matmul is best.
        out = jnp.dot(w2b[...], stacked, preferred_element_type=jnp.float32)
        o_ref[Cin:Cin + Cg, :] = (out + pre2[0:Cg, 2:3]).astype(o_ref.dtype)


def _tap_masks(N, H, W):
    """(9, M) f32 border-validity masks for the 3x3 taps, M = N*H*W."""
    m = jnp.arange(N * H * W, dtype=jnp.int32)
    yy = (m // W) % H
    xx = m % W
    rows = []
    for tap in range(9):
        dy, dx = tap // 3 - 1, tap % 3 - 1
        ok = (yy + dy >= 0) & (yy + dy < H) & (xx + dx >= 0) & (xx + dx < W)
        rows.append(ok)
    return jnp.stack(rows, axis=0).astype(jnp.float32)


def _repack_layer(p):
    """Repack one layer's parameters into kernel-friendly packed arrays."""
    Cin, C4 = p["w1"].shape
    Cg = p["w2"].shape[2]
    # (Cin, 2): columns [gamma1, beta1]
    pre1 = jnp.stack([p["g1"].reshape(Cin), p["b1"].reshape(Cin)], axis=1)
    w1t = p["w1"].T                                           # (C4, Cin)
    # (C4, 3): columns [gamma2, beta2, conv2-bias padded to C4 rows]
    c2b_pad = jnp.zeros((C4,), jnp.float32).at[:Cg].set(p["c2b"].reshape(Cg))
    pre2 = jnp.stack([p["g2"].reshape(C4), p["b2"].reshape(C4), c2b_pad], axis=1)
    # conv2 weight flattened to (Cg, 9*C4), K index = tap*C4 + c, tap = ky*3+kx
    w2b = jnp.transpose(p["w2"], (2, 0, 1)).reshape(Cg, 9 * C4)
    # conv1's bias is intentionally NOT shipped to the kernel: it is cancelled
    # exactly by the training-mode BN2 mean subtraction that follows it.
    return pre1, w1t, pre2, w2b


def dense_block(x_nchw, params):
    """DenseBlock.forward: x = cat((x, layer(x)), dim=1) for each layer."""
    N, C0, H, W = x_nchw.shape
    M = N * H * W
    Cg = params[0]["w2"].shape[2]
    L = len(params)
    C_total = C0 + Cg * L

    # NCHW -> pixels-in-lanes (C, M), m = n*H*W + y*W + x (row-major).
    x_cm = jnp.transpose(x_nchw, (1, 0, 2, 3)).reshape(C0, M)
    masks = _tap_masks(N, H, W)

    flat = []
    for p in params:
        flat.extend(_repack_layer(p))

    in_specs = [pl.BlockSpec(a.shape, lambda i: (0, 0))
                for a in (x_cm, masks, *flat)]

    kernel = functools.partial(fused_dense_block_kernel, C0=C0, Cg=Cg, W=W)

    out_cm = pl.pallas_call(
        kernel,
        out_shape=jax.ShapeDtypeStruct((C_total, M), x_nchw.dtype),
        grid=(1,),
        in_specs=in_specs,
        out_specs=pl.BlockSpec((C_total, M), lambda i: (0, 0)),
        compiler_params=pltpu.CompilerParams(
            dimension_semantics=("arbitrary",),
            vmem_limit_bytes=32 * 1024 * 1024),
    )(x_cm, masks, *flat)

    return jnp.transpose(out_cm.reshape(C_total, N, H, W), (1, 0, 2, 3))


def init_params(key, growth_rate, num_layers):
    """Deterministic synthetic parameters with the module's shapes.

    conv1: (Cin -> 4*g, 1x1) stored as (Cin, C4)
    conv2: (4*g -> g, 3x3)   stored as (9, C4, Cg) with tap = ky*3 + kx
    """
    params = []
    for n in range(num_layers):
        Cin = growth_rate * (n + 1)
        C4 = growth_rate * 4
        Cg = growth_rate
        key, *ks = jax.random.split(key, 9)
        params.append(dict(
            g1=1.0 + 0.1 * jax.random.normal(ks[0], (1, Cin), jnp.float32),
            b1=0.1 * jax.random.normal(ks[1], (1, Cin), jnp.float32),
            w1=jax.random.normal(ks[2], (Cin, C4), jnp.float32) / jnp.sqrt(Cin),
            c1b=0.1 * jax.random.normal(ks[3], (1, C4), jnp.float32),
            g2=1.0 + 0.1 * jax.random.normal(ks[4], (1, C4), jnp.float32),
            b2=0.1 * jax.random.normal(ks[5], (1, C4), jnp.float32),
            w2=jax.random.normal(ks[6], (9, C4, Cg), jnp.float32) / jnp.sqrt(9.0 * C4),
            c2b=0.1 * jax.random.normal(ks[7], (1, Cg), jnp.float32),
        ))
    return params


# ------------------------- pure-JAX reference -------------------------------
def _ref_layer(x, p):
    def bn(t, g, b):
        m = jnp.mean(t, axis=(0, 1, 2), keepdims=True)
        v = jnp.mean((t - m) ** 2, axis=(0, 1, 2), keepdims=True)
        return (t - m) * lax.rsqrt(v + EPS) * g.reshape(1, 1, 1, -1) + b.reshape(1, 1, 1, -1)

    h = jax.nn.relu(bn(x, p["g1"], p["b1"]))
    h = jnp.einsum("nhwc,cd->nhwd", h, p["w1"]) + p["c1b"].reshape(1, 1, 1, -1)
    h = jax.nn.relu(bn(h, p["g2"], p["b2"]))
    C4, Cg = p["w2"].shape[1], p["w2"].shape[2]
    w = p["w2"].reshape(3, 3, C4, Cg)
    h = lax.conv_general_dilated(h, w, (1, 1), "SAME",
                                 dimension_numbers=("NHWC", "HWIO", "NHWC"))
    return h + p["c2b"].reshape(1, 1, 1, -1)


def _ref_block(x_nchw, params):
    x = jnp.transpose(x_nchw, (0, 2, 3, 1))
    for p in params:
        x = jnp.concatenate([x, _ref_layer(x, p)], axis=-1)
    return jnp.transpose(x, (0, 3, 1, 2))


if __name__ == "__main__":
    growth_rate, num_layers = 8, 3
    N, H, W = 2, 16, 16

    key = jax.random.PRNGKey(0)
    kx, kp = jax.random.split(key)
    # PyTorch-convention NCHW input; first layer expects growth_rate channels.
    x = jax.random.normal(kx, (N, growth_rate, H, W), jnp.float32)
    params = init_params(kp, growth_rate, num_layers)

    block_fn = jax.jit(dense_block)
    out = jax.block_until_ready(block_fn(x, params))
    assert out.shape == (N, growth_rate * (num_layers + 1), H, W), out.shape

    ref = _ref_block(x, params)
    max_err = float(jnp.max(jnp.abs(out - ref)))
    assert jnp.allclose(out, ref, atol=2e-3, rtol=2e-3), max_err

    print("KERNEL_OK")
</pallas_src>

<mosaic_0001>
module attributes {stable_mosaic.version = 11 : i64} {
  func.func @fused_dense_block_kernel(%arg0: i32, %arg1: memref<8x512xf32, #tpu.memory_space<vmem>>, %arg2: memref<9x512xf32, #tpu.memory_space<vmem>>, %arg3: memref<8x2xf32, #tpu.memory_space<vmem>>, %arg4: memref<32x8xf32, #tpu.memory_space<vmem>>, %arg5: memref<32x3xf32, #tpu.memory_space<vmem>>, %arg6: memref<8x288xf32, #tpu.memory_space<vmem>>, %arg7: memref<16x2xf32, #tpu.memory_space<vmem>>, %arg8: memref<32x16xf32, #tpu.memory_space<vmem>>, %arg9: memref<32x3xf32, #tpu.memory_space<vmem>>, %arg10: memref<8x288xf32, #tpu.memory_space<vmem>>, %arg11: memref<24x2xf32, #tpu.memory_space<vmem>>, %arg12: memref<32x24xf32, #tpu.memory_space<vmem>>, %arg13: memref<32x3xf32, #tpu.memory_space<vmem>>, %arg14: memref<8x288xf32, #tpu.memory_space<vmem>>, %arg15: memref<32x512xf32, #tpu.memory_space<vmem>>) attributes {dimension_semantics = [#tpu.dimension_semantics<arbitrary>], iteration_bounds = array<i64: 1>, scalar_prefetch = 0 : i64, scratch_operands = 0 : i64, tpu.core_type = #tpu.core_type<tc>, window_params = [{pipeline_mode = #tpu.pipeline_mode<synchronous>, transform_indices = @transform_0, window_bounds = array<i64: 8, 512>}, {pipeline_mode = #tpu.pipeline_mode<synchronous>, transform_indices = @transform_1, window_bounds = array<i64: 9, 512>}, {pipeline_mode = #tpu.pipeline_mode<synchronous>, transform_indices = @transform_2, window_bounds = array<i64: 8, 2>}, {pipeline_mode = #tpu.pipeline_mode<synchronous>, transform_indices = @transform_3, window_bounds = array<i64: 32, 8>}, {pipeline_mode = #tpu.pipeline_mode<synchronous>, transform_indices = @transform_4, window_bounds = array<i64: 32, 3>}, {pipeline_mode = #tpu.pipeline_mode<synchronous>, transform_indices = @transform_5, window_bounds = array<i64: 8, 288>}, {pipeline_mode = #tpu.pipeline_mode<synchronous>, transform_indices = @transform_6, window_bounds = array<i64: 16, 2>}, {pipeline_mode = #tpu.pipeline_mode<synchronous>, transform_indices = @transform_7, window_bounds = array<i64: 32, 16>}, {pipeline_mode = #tpu.pipeline_mode<synchronous>, transform_indices = @transform_8, window_bounds = array<i64: 32, 3>}, {pipeline_mode = #tpu.pipeline_mode<synchronous>, transform_indices = @transform_9, window_bounds = array<i64: 8, 288>}, {pipeline_mode = #tpu.pipeline_mode<synchronous>, transform_indices = @transform_10, window_bounds = array<i64: 24, 2>}, {pipeline_mode = #tpu.pipeline_mode<synchronous>, transform_indices = @transform_11, window_bounds = array<i64: 32, 24>}, {pipeline_mode = #tpu.pipeline_mode<synchronous>, transform_indices = @transform_12, window_bounds = array<i64: 32, 3>}, {pipeline_mode = #tpu.pipeline_mode<synchronous>, transform_indices = @transform_13, window_bounds = array<i64: 8, 288>}, {pipeline_mode = #tpu.pipeline_mode<synchronous>, transform_indices = @transform_14, window_bounds = array<i64: 32, 512>}]} {
    %c0 = arith.constant 0 : index
    %c0_0 = arith.constant 0 : index
    %0 = vector.load %arg1[%c0, %c0_0] : memref<8x512xf32, #tpu.memory_space<vmem>>, vector<8x512xf32>
    %c0_1 = arith.constant 0 : index
    %c0_2 = arith.constant 0 : index
    %1 = vector.load %arg15[%c0_1, %c0_2] : memref<32x512xf32, #tpu.memory_space<vmem>>, vector<8x512xf32>
    tpu.vector_store %arg15[%c0_1, %c0_2], %0 {strides = array<i32>} : memref<32x512xf32, #tpu.memory_space<vmem>>, vector<8x512xf32>,
    %c0_3 = arith.constant 0 : index
    %c0_4 = arith.constant 0 : index
    %2 = vector.load %arg15[%c0_3, %c0_4] : memref<32x512xf32, #tpu.memory_space<vmem>>, vector<8x512xf32>
    %cst = arith.constant dense<0.000000e+00> : vector<8xf32>
    %3 = vector.multi_reduction <add>, %2, %cst [1] : vector<8x512xf32> to vector<8xf32>
    %4 = vector.shape_cast %3 : vector<8xf32> to vector<8x1xf32>
    %cst_5 = arith.constant 5.120000e+02 : f32
    %5 = vector.broadcast %cst_5 : f32 to vector<8x1xf32>
    %6 = arith.divf %4, %5 : vector<8x1xf32>
    %7 = arith.mulf %2, %2 : vector<8x512xf32>
    %cst_6 = arith.constant dense<0.000000e+00> : vector<8xf32>
    %8 = vector.multi_reduction <add>, %7, %cst_6 [1] : vector<8x512xf32> to vector<8xf32>
    %9 = vector.shape_cast %8 : vector<8xf32> to vector<8x1xf32>
    %cst_7 = arith.constant 5.120000e+02 : f32
    %10 = vector.broadcast %cst_7 : f32 to vector<8x1xf32>
    %11 = arith.divf %9, %10 : vector<8x1xf32>
    %12 = arith.mulf %6, %6 : vector<8x1xf32>
    %13 = arith.subf %11, %12 : vector<8x1xf32>
    %c0_8 = arith.constant 0 : index
    %c0_9 = arith.constant 0 : index
    %14 = vector.load %arg3[%c0_8, %c0_9] : memref<8x2xf32, #tpu.memory_space<vmem>>, vector<8x1xf32>
    %cst_10 = arith.constant 9.99999974E-6 : f32
    %15 = vector.broadcast %cst_10 : f32 to vector<8x1xf32>
    %16 = arith.addf %13, %15 : vector<8x1xf32>
    %17 = math.rsqrt %16 : vector<8x1xf32>
    %18 = arith.mulf %14, %17 : vector<8x1xf32>
    %c0_11 = arith.constant 0 : index
    %c1 = arith.constant 1 : index
    %19 = vector.load %arg3[%c0_11, %c1] : memref<8x2xf32, #tpu.memory_space<vmem>>, vector<8x1xf32>
    %20 = arith.mulf %6, %18 : vector<8x1xf32>
    %21 = arith.subf %19, %20 : vector<8x1xf32>
    %22 = vector.broadcast %18 : vector<8x1xf32> to vector<8x512xf32>
    %23 = arith.mulf %2, %22 : vector<8x512xf32>
    %24 = vector.broadcast %21 : vector<8x1xf32> to vector<8x512xf32>
    %25 = arith.addf %23, %24 : vector<8x512xf32>
    %cst_12 = arith.constant 0.000000e+00 : f32
    %26 = vector.broadcast %cst_12 : f32 to vector<8x512xf32>
    %27 = arith.maximumf %25, %26 : vector<8x512xf32>
    %c0_13 = arith.constant 0 : index
    %c0_14 = arith.constant 0 : index
    %28 = vector.load %arg4[%c0_13, %c0_14] : memref<32x8xf32, #tpu.memory_space<vmem>>, vector<32x8xf32>
    %cst_15 = arith.constant dense<0.000000e+00> : vector<32x512xf32>
    %29 = tpu.matmul %28, %27, %cst_15 {dimension_numbers = #tpu.dot_dimension_numbers<[1], [0], [0], [1], [0, 0, 1, 1], [], []>} : vector<32x8xf32>, vector<8x512xf32>, vector<32x512xf32> -> vector<32x512xf32>
    %cst_16 = arith.constant dense<0.000000e+00> : vector<32xf32>
    %30 = vector.multi_reduction <add>, %29, %cst_16 [1] : vector<32x512xf32> to vector<32xf32>
    %31 = vector.shape_cast %30 : vector<32xf32> to vector<32x1xf32>
    %cst_17 = arith.constant 5.120000e+02 : f32
    %32 = vector.broadcast %cst_17 : f32 to vector<32x1xf32>
    %33 = arith.divf %31, %32 : vector<32x1xf32>
    %34 = arith.mulf %29, %29 : vector<32x512xf32>
    %cst_18 = arith.constant dense<0.000000e+00> : vector<32xf32>
    %35 = vector.multi_reduction <add>, %34, %cst_18 [1] : vector<32x512xf32> to vector<32xf32>
    %36 = vector.shape_cast %35 : vector<32xf32> to vector<32x1xf32>
    %cst_19 = arith.constant 5.120000e+02 : f32
    %37 = vector.broadcast %cst_19 : f32 to vector<32x1xf32>
    %38 = arith.divf %36, %37 : vector<32x1xf32>
    %39 = arith.mulf %33, %33 : vector<32x1xf32>
    %40 = arith.subf %38, %39 : vector<32x1xf32>
    %c0_20 = arith.constant 0 : index
    %c0_21 = arith.constant 0 : index
    %41 = vector.load %arg5[%c0_20, %c0_21] : memref<32x3xf32, #tpu.memory_space<vmem>>, vector<32x1xf32>
    %cst_22 = arith.constant 9.99999974E-6 : f32
    %42 = vector.broadcast %cst_22 : f32 to vector<32x1xf32>
    %43 = arith.addf %40, %42 : vector<32x1xf32>
    %44 = math.rsqrt %43 : vector<32x1xf32>
    %45 = arith.mulf %41, %44 : vector<32x1xf32>
    %c0_23 = arith.constant 0 : index
    %c1_24 = arith.constant 1 : index
    %46 = vector.load %arg5[%c0_23, %c1_24] : memref<32x3xf32, #tpu.memory_space<vmem>>, vector<32x1xf32>
    %47 = arith.mulf %33, %45 : vector<32x1xf32>
    %48 = arith.subf %46, %47 : vector<32x1xf32>
    %49 = vector.broadcast %45 : vector<32x1xf32> to vector<32x512xf32>
    %50 = arith.mulf %29, %49 : vector<32x512xf32>
    %51 = vector.broadcast %48 : vector<32x1xf32> to vector<32x512xf32>
    %52 = arith.addf %50, %51 : vector<32x512xf32>
    %cst_25 = arith.constant 0.000000e+00 : f32
    %53 = vector.broadcast %cst_25 : f32 to vector<32x512xf32>
    %54 = arith.maximumf %52, %53 : vector<32x512xf32>
    %c17_i32 = arith.constant 17 : i32
    %55 = tpu.dynamic_rotate %54 by %c17_i32 dim 1 : vector<32x512xf32>, i32 -> vector<32x512xf32>
    %c0_26 = arith.constant 0 : index
    %c0_27 = arith.constant 0 : index
    %56 = vector.load %arg2[%c0_26, %c0_27] : memref<9x512xf32, #tpu.memory_space<vmem>>, vector<1x512xf32>
    %57 = vector.broadcast %56 : vector<1x512xf32> to vector<32x512xf32>
    %58 = arith.mulf %55, %57 : vector<32x512xf32>
    %c16_i32 = arith.constant 16 : i32
    %59 = tpu.dynamic_rotate %54 by %c16_i32 dim 1 : vector<32x512xf32>, i32 -> vector<32x512xf32>
    %c1_28 = arith.constant 1 : index
    %c0_29 = arith.constant 0 : index
    %60 = vector.load %arg2[%c1_28, %c0_29] : memref<9x512xf32, #tpu.memory_space<vmem>>, vector<1x512xf32>
    %61 = vector.broadcast %60 : vector<1x512xf32> to vector<32x512xf32>
    %62 = arith.mulf %59, %61 : vector<32x512xf32>
    %c15_i32 = arith.constant 15 : i32
    %63 = tpu.dynamic_rotate %54 by %c15_i32 dim 1 : vector<32x512xf32>, i32 -> vector<32x512xf32>
    %c2 = arith.constant 2 : index
    %c0_30 = arith.constant 0 : index
    %64 = vector.load %arg2[%c2, %c0_30] : memref<9x512xf32, #tpu.memory_space<vmem>>, vector<1x512xf32>
    %65 = vector.broadcast %64 : vector<1x512xf32> to vector<32x512xf32>
    %66 = arith.mulf %63, %65 : vector<32x512xf32>
    %c1_i32 = arith.constant 1 : i32
    %67 = tpu.dynamic_rotate %54 by %c1_i32 dim 1 : vector<32x512xf32>, i32 -> vector<32x512xf32>
    %c3 = arith.constant 3 : index
    %c0_31 = arith.constant 0 : index
    %68 = vector.load %arg2[%c3, %c0_31] : memref<9x512xf32, #tpu.memory_space<vmem>>, vector<1x512xf32>
    %69 = vector.broadcast %68 : vector<1x512xf32> to vector<32x512xf32>
    %70 = arith.mulf %67, %69 : vector<32x512xf32>
    %c511_i32 = arith.constant 511 : i32
    %71 = tpu.dynamic_rotate %54 by %c511_i32 dim 1 : vector<32x512xf32>, i32 -> vector<32x512xf32>
    %c5 = arith.constant 5 : index
    %c0_32 = arith.constant 0 : index
    %72 = vector.load %arg2[%c5, %c0_32] : memref<9x512xf32, #tpu.memory_space<vmem>>, vector<1x512xf32>
    %73 = vector.broadcast %72 : vector<1x512xf32> to vector<32x512xf32>
    %74 = arith.mulf %71, %73 : vector<32x512xf32>
    %c497_i32 = arith.constant 497 : i32
    %75 = tpu.dynamic_rotate %54 by %c497_i32 dim 1 : vector<32x512xf32>, i32 -> vector<32x512xf32>
    %c6 = arith.constant 6 : index
    %c0_33 = arith.constant 0 : index
    %76 = vector.load %arg2[%c6, %c0_33] : memref<9x512xf32, #tpu.memory_space<vmem>>, vector<1x512xf32>
    %77 = vector.broadcast %76 : vector<1x512xf32> to vector<32x512xf32>
    %78 = arith.mulf %75, %77 : vector<32x512xf32>
    %c496_i32 = arith.constant 496 : i32
    %79 = tpu.dynamic_rotate %54 by %c496_i32 dim 1 : vector<32x512xf32>, i32 -> vector<32x512xf32>
    %c7 = arith.constant 7 : index
    %c0_34 = arith.constant 0 : index
    %80 = vector.load %arg2[%c7, %c0_34] : memref<9x512xf32, #tpu.memory_space<vmem>>, vector<1x512xf32>
    %81 = vector.broadcast %80 : vector<1x512xf32> to vector<32x512xf32>
    %82 = arith.mulf %79, %81 : vector<32x512xf32>
    %c495_i32 = arith.constant 495 : i32
    %83 = tpu.dynamic_rotate %54 by %c495_i32 dim 1 : vector<32x512xf32>, i32 -> vector<32x512xf32>
    %c8 = arith.constant 8 : index
    %c0_35 = arith.constant 0 : index
    %84 = vector.load %arg2[%c8, %c0_35] : memref<9x512xf32, #tpu.memory_space<vmem>>, vector<1x512xf32>
    %85 = vector.broadcast %84 : vector<1x512xf32> to vector<32x512xf32>
    %86 = arith.mulf %83, %85 : vector<32x512xf32>
    %87 = tpu.concatenate %58, %62, %66, %70, %54, %74, %78, %82, %86 in 0 : vector<32x512xf32>, vector<32x512xf32>, vector<32x512xf32>, vector<32x512xf32>, vector<32x512xf32>, vector<32x512xf32>, vector<32x512xf32>, vector<32x512xf32>, vector<32x512xf32> -> vector<288x512xf32>
    %c0_36 = arith.constant 0 : index
    %c0_37 = arith.constant 0 : index
    %88 = vector.load %arg6[%c0_36, %c0_37] : memref<8x288xf32, #tpu.memory_space<vmem>>, vector<8x288xf32>
    %cst_38 = arith.constant dense<0.000000e+00> : vector<8x512xf32>
    %89 = tpu.matmul %88, %87, %cst_38 {dimension_numbers = #tpu.dot_dimension_numbers<[1], [0], [0], [1], [0, 0, 1, 1], [], []>} : vector<8x288xf32>, vector<288x512xf32>, vector<8x512xf32> -> vector<8x512xf32>
    %c0_39 = arith.constant 0 : index
    %c2_40 = arith.constant 2 : index
    %90 = vector.load %arg5[%c0_39, %c2_40] : memref<32x3xf32, #tpu.memory_space<vmem>>, vector<8x1xf32>
    %91 = vector.broadcast %90 : vector<8x1xf32> to vector<8x512xf32>
    %92 = arith.addf %89, %91 : vector<8x512xf32>
    %c8_41 = arith.constant 8 : index
    %c0_42 = arith.constant 0 : index
    %93 = vector.load %arg15[%c8_41, %c0_42] : memref<32x512xf32, #tpu.memory_space<vmem>>, vector<8x512xf32>
    tpu.vector_store %arg15[%c8_41, %c0_42], %92 {strides = array<i32>} : memref<32x512xf32, #tpu.memory_space<vmem>>, vector<8x512xf32>,
    %c0_43 = arith.constant 0 : index
    %c0_44 = arith.constant 0 : index
    %94 = vector.load %arg15[%c0_43, %c0_44] : memref<32x512xf32, #tpu.memory_space<vmem>>, vector<16x512xf32>
    %cst_45 = arith.constant dense<0.000000e+00> : vector<16xf32>
    %95 = vector.multi_reduction <add>, %94, %cst_45 [1] : vector<16x512xf32> to vector<16xf32>
    %96 = vector.shape_cast %95 : vector<16xf32> to vector<16x1xf32>
    %cst_46 = arith.constant 5.120000e+02 : f32
    %97 = vector.broadcast %cst_46 : f32 to vector<16x1xf32>
    %98 = arith.divf %96, %97 : vector<16x1xf32>
    %99 = arith.mulf %94, %94 : vector<16x512xf32>
    %cst_47 = arith.constant dense<0.000000e+00> : vector<16xf32>
    %100 = vector.multi_reduction <add>, %99, %cst_47 [1] : vector<16x512xf32> to vector<16xf32>
    %101 = vector.shape_cast %100 : vector<16xf32> to vector<16x1xf32>
    %cst_48 = arith.constant 5.120000e+02 : f32
    %102 = vector.broadcast %cst_48 : f32 to vector<16x1xf32>
    %103 = arith.divf %101, %102 : vector<16x1xf32>
    %104 = arith.mulf %98, %98 : vector<16x1xf32>
    %105 = arith.subf %103, %104 : vector<16x1xf32>
    %c0_49 = arith.constant 0 : index
    %c0_50 = arith.constant 0 : index
    %106 = vector.load %arg7[%c0_49, %c0_50] : memref<16x2xf32, #tpu.memory_space<vmem>>, vector<16x1xf32>
    %cst_51 = arith.constant 9.99999974E-6 : f32
    %107 = vector.broadcast %cst_51 : f32 to vector<16x1xf32>
    %108 = arith.addf %105, %107 : vector<16x1xf32>
    %109 = math.rsqrt %108 : vector<16x1xf32>
    %110 = arith.mulf %106, %109 : vector<16x1xf32>
    %c0_52 = arith.constant 0 : index
    %c1_53 = arith.constant 1 : index
    %111 = vector.load %arg7[%c0_52, %c1_53] : memref<16x2xf32, #tpu.memory_space<vmem>>, vector<16x1xf32>
    %112 = arith.mulf %98, %110 : vector<16x1xf32>
    %113 = arith.subf %111, %112 : vector<16x1xf32>
    %114 = vector.broadcast %110 : vector<16x1xf32> to vector<16x512xf32>
    %115 = arith.mulf %94, %114 : vector<16x512xf32>
    %116 = vector.broadcast %113 : vector<16x1xf32> to vector<16x512xf32>
    %117 = arith.addf %115, %116 : vector<16x512xf32>
    %cst_54 = arith.constant 0.000000e+00 : f32
    %118 = vector.broadcast %cst_54 : f32 to vector<16x512xf32>
    %119 = arith.maximumf %117, %118 : vector<16x512xf32>
    %c0_55 = arith.constant 0 : index
    %c0_56 = arith.constant 0 : index
    %120 = vector.load %arg8[%c0_55, %c0_56] : memref<32x16xf32, #tpu.memory_space<vmem>>, vector<32x16xf32>
    %cst_57 = arith.constant dense<0.000000e+00> : vector<32x512xf32>
    %121 = tpu.matmul %120, %119, %cst_57 {dimension_numbers = #tpu.dot_dimension_numbers<[1], [0], [0], [1], [0, 0, 1, 1], [], []>} : vector<32x16xf32>, vector<16x512xf32>, vector<32x512xf32> -> vector<32x512xf32>
    %cst_58 = arith.constant dense<0.000000e+00> : vector<32xf32>
    %122 = vector.multi_reduction <add>, %121, %cst_58 [1] : vector<32x512xf32> to vector<32xf32>
    %123 = vector.shape_cast %122 : vector<32xf32> to vector<32x1xf32>
    %cst_59 = arith.constant 5.120000e+02 : f32
    %124 = vector.broadcast %cst_59 : f32 to vector<32x1xf32>
    %125 = arith.divf %123, %124 : vector<32x1xf32>
    %126 = arith.mulf %121, %121 : vector<32x512xf32>
    %cst_60 = arith.constant dense<0.000000e+00> : vector<32xf32>
    %127 = vector.multi_reduction <add>, %126, %cst_60 [1] : vector<32x512xf32> to vector<32xf32>
    %128 = vector.shape_cast %127 : vector<32xf32> to vector<32x1xf32>
    %cst_61 = arith.constant 5.120000e+02 : f32
    %129 = vector.broadcast %cst_61 : f32 to vector<32x1xf32>
    %130 = arith.divf %128, %129 : vector<32x1xf32>
    %131 = arith.mulf %125, %125 : vector<32x1xf32>
    %132 = arith.subf %130, %131 : vector<32x1xf32>
    %c0_62 = arith.constant 0 : index
    %c0_63 = arith.constant 0 : index
    %133 = vector.load %arg9[%c0_62, %c0_63] : memref<32x3xf32, #tpu.memory_space<vmem>>, vector<32x1xf32>
    %cst_64 = arith.constant 9.99999974E-6 : f32
    %134 = vector.broadcast %cst_64 : f32 to vector<32x1xf32>
    %135 = arith.addf %132, %134 : vector<32x1xf32>
    %136 = math.rsqrt %135 : vector<32x1xf32>
    %137 = arith.mulf %133, %136 : vector<32x1xf32>
    %c0_65 = arith.constant 0 : index
    %c1_66 = arith.constant 1 : index
    %138 = vector.load %arg9[%c0_65, %c1_66] : memref<32x3xf32, #tpu.memory_space<vmem>>, vector<32x1xf32>
    %139 = arith.mulf %125, %137 : vector<32x1xf32>
    %140 = arith.subf %138, %139 : vector<32x1xf32>
    %141 = vector.broadcast %137 : vector<32x1xf32> to vector<32x512xf32>
    %142 = arith.mulf %121, %141 : vector<32x512xf32>
    %143 = vector.broadcast %140 : vector<32x1xf32> to vector<32x512xf32>
    %144 = arith.addf %142, %143 : vector<32x512xf32>
    %cst_67 = arith.constant 0.000000e+00 : f32
    %145 = vector.broadcast %cst_67 : f32 to vector<32x512xf32>
    %146 = arith.maximumf %144, %145 : vector<32x512xf32>
    %c17_i32_68 = arith.constant 17 : i32
    %147 = tpu.dynamic_rotate %146 by %c17_i32_68 dim 1 : vector<32x512xf32>, i32 -> vector<32x512xf32>
    %c0_69 = arith.constant 0 : index
    %c0_70 = arith.constant 0 : index
    %148 = vector.load %arg2[%c0_69, %c0_70] : memref<9x512xf32, #tpu.memory_space<vmem>>, vector<1x512xf32>
    %149 = vector.broadcast %148 : vector<1x512xf32> to vector<32x512xf32>
    %150 = arith.mulf %147, %149 : vector<32x512xf32>
    %c16_i32_71 = arith.constant 16 : i32
    %151 = tpu.dynamic_rotate %146 by %c16_i32_71 dim 1 : vector<32x512xf32>, i32 -> vector<32x512xf32>
    %c1_72 = arith.constant 1 : index
    %c0_73 = arith.constant 0 : index
    %152 = vector.load %arg2[%c1_72, %c0_73] : memref<9x512xf32, #tpu.memory_space<vmem>>, vector<1x512xf32>
    %153 = vector.broadcast %152 : vector<1x512xf32> to vector<32x512xf32>
    %154 = arith.mulf %151, %153 : vector<32x512xf32>
    %c15_i32_74 = arith.constant 15 : i32
    %155 = tpu.dynamic_rotate %146 by %c15_i32_74 dim 1 : vector<32x512xf32>, i32 -> vector<32x512xf32>
    %c2_75 = arith.constant 2 : index
    %c0_76 = arith.constant 0 : index
    %156 = vector.load %arg2[%c2_75, %c0_76] : memref<9x512xf32, #tpu.memory_space<vmem>>, vector<1x512xf32>
    %157 = vector.broadcast %156 : vector<1x512xf32> to vector<32x512xf32>
    %158 = arith.mulf %155, %157 : vector<32x512xf32>
    %c1_i32_77 = arith.constant 1 : i32
    %159 = tpu.dynamic_rotate %146 by %c1_i32_77 dim 1 : vector<32x512xf32>, i32 -> vector<32x512xf32>
    %c3_78 = arith.constant 3 : index
    %c0_79 = arith.constant 0 : index
    %160 = vector.load %arg2[%c3_78, %c0_79] : memref<9x512xf32, #tpu.memory_space<vmem>>, vector<1x512xf32>
    %161 = vector.broadcast %160 : vector<1x512xf32> to vector<32x512xf32>
    %162 = arith.mulf %159, %161 : vector<32x512xf32>
    %c511_i32_80 = arith.constant 511 : i32
    %163 = tpu.dynamic_rotate %146 by %c511_i32_80 dim 1 : vector<32x512xf32>, i32 -> vector<32x512xf32>
    %c5_81 = arith.constant 5 : index
    %c0_82 = arith.constant 0 : index
    %164 = vector.load %arg2[%c5_81, %c0_82] : memref<9x512xf32, #tpu.memory_space<vmem>>, vector<1x512xf32>
    %165 = vector.broadcast %164 : vector<1x512xf32> to vector<32x512xf32>
    %166 = arith.mulf %163, %165 : vector<32x512xf32>
    %c497_i32_83 = arith.constant 497 : i32
    %167 = tpu.dynamic_rotate %146 by %c497_i32_83 dim 1 : vector<32x512xf32>, i32 -> vector<32x512xf32>
    %c6_84 = arith.constant 6 : index
    %c0_85 = arith.constant 0 : index
    %168 = vector.load %arg2[%c6_84, %c0_85] : memref<9x512xf32, #tpu.memory_space<vmem>>, vector<1x512xf32>
    %169 = vector.broadcast %168 : vector<1x512xf32> to vector<32x512xf32>
    %170 = arith.mulf %167, %169 : vector<32x512xf32>
    %c496_i32_86 = arith.constant 496 : i32
    %171 = tpu.dynamic_rotate %146 by %c496_i32_86 dim 1 : vector<32x512xf32>, i32 -> vector<32x512xf32>
    %c7_87 = arith.constant 7 : index
    %c0_88 = arith.constant 0 : index
    %172 = vector.load %arg2[%c7_87, %c0_88] : memref<9x512xf32, #tpu.memory_space<vmem>>, vector<1x512xf32>
    %173 = vector.broadcast %172 : vector<1x512xf32> to vector<32x512xf32>
    %174 = arith.mulf %171, %173 : vector<32x512xf32>
    %c495_i32_89 = arith.constant 495 : i32
    %175 = tpu.dynamic_rotate %146 by %c495_i32_89 dim 1 : vector<32x512xf32>, i32 -> vector<32x512xf32>
    %c8_90 = arith.constant 8 : index
    %c0_91 = arith.constant 0 : index
    %176 = vector.load %arg2[%c8_90, %c0_91] : memref<9x512xf32, #tpu.memory_space<vmem>>, vector<1x512xf32>
    %177 = vector.broadcast %176 : vector<1x512xf32> to vector<32x512xf32>
    %178 = arith.mulf %175, %177 : vector<32x512xf32>
    %179 = tpu.concatenate %150, %154, %158, %162, %146, %166, %170, %174, %178 in 0 : vector<32x512xf32>, vector<32x512xf32>, vector<32x512xf32>, vector<32x512xf32>, vector<32x512xf32>, vector<32x512xf32>, vector<32x512xf32>, vector<32x512xf32>, vector<32x512xf32> -> vector<288x512xf32>
    %c0_92 = arith.constant 0 : index
    %c0_93 = arith.constant 0 : index
    %180 = vector.load %arg10[%c0_92, %c0_93] : memref<8x288xf32, #tpu.memory_space<vmem>>, vector<8x288xf32>
    %cst_94 = arith.constant dense<0.000000e+00> : vector<8x512xf32>
    %181 = tpu.matmul %180, %179, %cst_94 {dimension_numbers = #tpu.dot_dimension_numbers<[1], [0], [0], [1], [0, 0, 1, 1], [], []>} : vector<8x288xf32>, vector<288x512xf32>, vector<8x512xf32> -> vector<8x512xf32>
    %c0_95 = arith.constant 0 : index
    %c2_96 = arith.constant 2 : index
    %182 = vector.load %arg9[%c0_95, %c2_96] : memref<32x3xf32, #tpu.memory_space<vmem>>, vector<8x1xf32>
    %183 = vector.broadcast %182 : vector<8x1xf32> to vector<8x512xf32>
    %184 = arith.addf %181, %183 : vector<8x512xf32>
    %c16 = arith.constant 16 : index
    %c0_97 = arith.constant 0 : index
    %185 = vector.load %arg15[%c16, %c0_97] : memref<32x512xf32, #tpu.memory_space<vmem>>, vector<8x512xf32>
    tpu.vector_store %arg15[%c16, %c0_97], %184 {strides = array<i32>} : memref<32x512xf32, #tpu.memory_space<vmem>>, vector<8x512xf32>,
    %c0_98 = arith.constant 0 : index
    %c0_99 = arith.constant 0 : index
    %186 = vector.load %arg15[%c0_98, %c0_99] : memref<32x512xf32, #tpu.memory_space<vmem>>, vector<24x512xf32>
    %cst_100 = arith.constant dense<0.000000e+00> : vector<24xf32>
    %187 = vector.multi_reduction <add>, %186, %cst_100 [1] : vector<24x512xf32> to vector<24xf32>
    %188 = vector.shape_cast %187 : vector<24xf32> to vector<24x1xf32>
    %cst_101 = arith.constant 5.120000e+02 : f32
    %189 = vector.broadcast %cst_101 : f32 to vector<24x1xf32>
    %190 = arith.divf %188, %189 : vector<24x1xf32>
    %191 = arith.mulf %186, %186 : vector<24x512xf32>
    %cst_102 = arith.constant dense<0.000000e+00> : vector<24xf32>
    %192 = vector.multi_reduction <add>, %191, %cst_102 [1] : vector<24x512xf32> to vector<24xf32>
    %193 = vector.shape_cast %192 : vector<24xf32> to vector<24x1xf32>
    %cst_103 = arith.constant 5.120000e+02 : f32
    %194 = vector.broadcast %cst_103 : f32 to vector<24x1xf32>
    %195 = arith.divf %193, %194 : vector<24x1xf32>
    %196 = arith.mulf %190, %190 : vector<24x1xf32>
    %197 = arith.subf %195, %196 : vector<24x1xf32>
    %c0_104 = arith.constant 0 : index
    %c0_105 = arith.constant 0 : index
    %198 = vector.load %arg11[%c0_104, %c0_105] : memref<24x2xf32, #tpu.memory_space<vmem>>, vector<24x1xf32>
    %cst_106 = arith.constant 9.99999974E-6 : f32
    %199 = vector.broadcast %cst_106 : f32 to vector<24x1xf32>
    %200 = arith.addf %197, %199 : vector<24x1xf32>
    %201 = math.rsqrt %200 : vector<24x1xf32>
    %202 = arith.mulf %198, %201 : vector<24x1xf32>
    %c0_107 = arith.constant 0 : index
    %c1_108 = arith.constant 1 : index
    %203 = vector.load %arg11[%c0_107, %c1_108] : memref<24x2xf32, #tpu.memory_space<vmem>>, vector<24x1xf32>
    %204 = arith.mulf %190, %202 : vector<24x1xf32>
    %205 = arith.subf %203, %204 : vector<24x1xf32>
    %206 = vector.broadcast %202 : vector<24x1xf32> to vector<24x512xf32>
    %207 = arith.mulf %186, %206 : vector<24x512xf32>
    %208 = vector.broadcast %205 : vector<24x1xf32> to vector<24x512xf32>
    %209 = arith.addf %207, %208 : vector<24x512xf32>
    %cst_109 = arith.constant 0.000000e+00 : f32
    %210 = vector.broadcast %cst_109 : f32 to vector<24x512xf32>
    %211 = arith.maximumf %209, %210 : vector<24x512xf32>
    %c0_110 = arith.constant 0 : index
    %c0_111 = arith.constant 0 : index
    %212 = vector.load %arg12[%c0_110, %c0_111] : memref<32x24xf32, #tpu.memory_space<vmem>>, vector<32x24xf32>
    %cst_112 = arith.constant dense<0.000000e+00> : vector<32x512xf32>
    %213 = tpu.matmul %212, %211, %cst_112 {dimension_numbers = #tpu.dot_dimension_numbers<[1], [0], [0], [1], [0, 0, 1, 1], [], []>} : vector<32x24xf32>, vector<24x512xf32>, vector<32x512xf32> -> vector<32x512xf32>
    %cst_113 = arith.constant dense<0.000000e+00> : vector<32xf32>
    %214 = vector.multi_reduction <add>, %213, %cst_113 [1] : vector<32x512xf32> to vector<32xf32>
    %215 = vector.shape_cast %214 : vector<32xf32> to vector<32x1xf32>
    %cst_114 = arith.constant 5.120000e+02 : f32
    %216 = vector.broadcast %cst_114 : f32 to vector<32x1xf32>
    %217 = arith.divf %215, %216 : vector<32x1xf32>
    %218 = arith.mulf %213, %213 : vector<32x512xf32>
    %cst_115 = arith.constant dense<0.000000e+00> : vector<32xf32>
    %219 = vector.multi_reduction <add>, %218, %cst_115 [1] : vector<32x512xf32> to vector<32xf32>
    %220 = vector.shape_cast %219 : vector<32xf32> to vector<32x1xf32>
    %cst_116 = arith.constant 5.120000e+02 : f32
    %221 = vector.broadcast %cst_116 : f32 to vector<32x1xf32>
    %222 = arith.divf %220, %221 : vector<32x1xf32>
    %223 = arith.mulf %217, %217 : vector<32x1xf32>
    %224 = arith.subf %222, %223 : vector<32x1xf32>
    %c0_117 = arith.constant 0 : index
    %c0_118 = arith.constant 0 : index
    %225 = vector.load %arg13[%c0_117, %c0_118] : memref<32x3xf32, #tpu.memory_space<vmem>>, vector<32x1xf32>
    %cst_119 = arith.constant 9.99999974E-6 : f32
    %226 = vector.broadcast %cst_119 : f32 to vector<32x1xf32>
    %227 = arith.addf %224, %226 : vector<32x1xf32>
    %228 = math.rsqrt %227 : vector<32x1xf32>
    %229 = arith.mulf %225, %228 : vector<32x1xf32>
    %c0_120 = arith.constant 0 : index
    %c1_121 = arith.constant 1 : index
    %230 = vector.load %arg13[%c0_120, %c1_121] : memref<32x3xf32, #tpu.memory_space<vmem>>, vector<32x1xf32>
    %231 = arith.mulf %217, %229 : vector<32x1xf32>
    %232 = arith.subf %230, %231 : vector<32x1xf32>
    %233 = vector.broadcast %229 : vector<32x1xf32> to vector<32x512xf32>
    %234 = arith.mulf %213, %233 : vector<32x512xf32>
    %235 = vector.broadcast %232 : vector<32x1xf32> to vector<32x512xf32>
    %236 = arith.addf %234, %235 : vector<32x512xf32>
    %cst_122 = arith.constant 0.000000e+00 : f32
    %237 = vector.broadcast %cst_122 : f32 to vector<32x512xf32>
    %238 = arith.maximumf %236, %237 : vector<32x512xf32>
    %c17_i32_123 = arith.constant 17 : i32
    %239 = tpu.dynamic_rotate %238 by %c17_i32_123 dim 1 : vector<32x512xf32>, i32 -> vector<32x512xf32>
    %c0_124 = arith.constant 0 : index
    %c0_125 = arith.constant 0 : index
    %240 = vector.load %arg2[%c0_124, %c0_125] : memref<9x512xf32, #tpu.memory_space<vmem>>, vector<1x512xf32>
    %241 = vector.broadcast %240 : vector<1x512xf32> to vector<32x512xf32>
    %242 = arith.mulf %239, %241 : vector<32x512xf32>
    %c16_i32_126 = arith.constant 16 : i32
    %243 = tpu.dynamic_rotate %238 by %c16_i32_126 dim 1 : vector<32x512xf32>, i32 -> vector<32x512xf32>
    %c1_127 = arith.constant 1 : index
    %c0_128 = arith.constant 0 : index
    %244 = vector.load %arg2[%c1_127, %c0_128] : memref<9x512xf32, #tpu.memory_space<vmem>>, vector<1x512xf32>
    %245 = vector.broadcast %244 : vector<1x512xf32> to vector<32x512xf32>
    %246 = arith.mulf %243, %245 : vector<32x512xf32>
    %c15_i32_129 = arith.constant 15 : i32
    %247 = tpu.dynamic_rotate %238 by %c15_i32_129 dim 1 : vector<32x512xf32>, i32 -> vector<32x512xf32>
    %c2_130 = arith.constant 2 : index
    %c0_131 = arith.constant 0 : index
    %248 = vector.load %arg2[%c2_130, %c0_131] : memref<9x512xf32, #tpu.memory_space<vmem>>, vector<1x512xf32>
    %249 = vector.broadcast %248 : vector<1x512xf32> to vector<32x512xf32>
    %250 = arith.mulf %247, %249 : vector<32x512xf32>
    %c1_i32_132 = arith.constant 1 : i32
    %251 = tpu.dynamic_rotate %238 by %c1_i32_132 dim 1 : vector<32x512xf32>, i32 -> vector<32x512xf32>
    %c3_133 = arith.constant 3 : index
    %c0_134 = arith.constant 0 : index
    %252 = vector.load %arg2[%c3_133, %c0_134] : memref<9x512xf32, #tpu.memory_space<vmem>>, vector<1x512xf32>
    %253 = vector.broadcast %252 : vector<1x512xf32> to vector<32x512xf32>
    %254 = arith.mulf %251, %253 : vector<32x512xf32>
    %c511_i32_135 = arith.constant 511 : i32
    %255 = tpu.dynamic_rotate %238 by %c511_i32_135 dim 1 : vector<32x512xf32>, i32 -> vector<32x512xf32>
    %c5_136 = arith.constant 5 : index
    %c0_137 = arith.constant 0 : index
    %256 = vector.load %arg2[%c5_136, %c0_137] : memref<9x512xf32, #tpu.memory_space<vmem>>, vector<1x512xf32>
    %257 = vector.broadcast %256 : vector<1x512xf32> to vector<32x512xf32>
    %258 = arith.mulf %255, %257 : vector<32x512xf32>
    %c497_i32_138 = arith.constant 497 : i32
    %259 = tpu.dynamic_rotate %238 by %c497_i32_138 dim 1 : vector<32x512xf32>, i32 -> vector<32x512xf32>
    %c6_139 = arith.constant 6 : index
    %c0_140 = arith.constant 0 : index
    %260 = vector.load %arg2[%c6_139, %c0_140] : memref<9x512xf32, #tpu.memory_space<vmem>>, vector<1x512xf32>
    %261 = vector.broadcast %260 : vector<1x512xf32> to vector<32x512xf32>
    %262 = arith.mulf %259, %261 : vector<32x512xf32>
    %c496_i32_141 = arith.constant 496 : i32
    %263 = tpu.dynamic_rotate %238 by %c496_i32_141 dim 1 : vector<32x512xf32>, i32 -> vector<32x512xf32>
    %c7_142 = arith.constant 7 : index
    %c0_143 = arith.constant 0 : index
    %264 = vector.load %arg2[%c7_142, %c0_143] : memref<9x512xf32, #tpu.memory_space<vmem>>, vector<1x512xf32>
    %265 = vector.broadcast %264 : vector<1x512xf32> to vector<32x512xf32>
    %266 = arith.mulf %263, %265 : vector<32x512xf32>
    %c495_i32_144 = arith.constant 495 : i32
    %267 = tpu.dynamic_rotate %238 by %c495_i32_144 dim 1 : vector<32x512xf32>, i32 -> vector<32x512xf32>
    %c8_145 = arith.constant 8 : index
    %c0_146 = arith.constant 0 : index
    %268 = vector.load %arg2[%c8_145, %c0_146] : memref<9x512xf32, #tpu.memory_space<vmem>>, vector<1x512xf32>
    %269 = vector.broadcast %268 : vector<1x512xf32> to vector<32x512xf32>
    %270 = arith.mulf %267, %269 : vector<32x512xf32>
    %271 = tpu.concatenate %242, %246, %250, %254, %238, %258, %262, %266, %270 in 0 : vector<32x512xf32>, vector<32x512xf32>, vector<32x512xf32>, vector<32x512xf32>, vector<32x512xf32>, vector<32x512xf32>, vector<32x512xf32>, vector<32x512xf32>, vector<32x512xf32> -> vector<288x512xf32>
    %c0_147 = arith.constant 0 : index
    %c0_148 = arith.constant 0 : index
    %272 = vector.load %arg14[%c0_147, %c0_148] : memref<8x288xf32, #tpu.memory_space<vmem>>, vector<8x288xf32>
    %cst_149 = arith.constant dense<0.000000e+00> : vector<8x512xf32>
    %273 = tpu.matmul %272, %271, %cst_149 {dimension_numbers = #tpu.dot_dimension_numbers<[1], [0], [0], [1], [0, 0, 1, 1], [], []>} : vector<8x288xf32>, vector<288x512xf32>, vector<8x512xf32> -> vector<8x512xf32>
    %c0_150 = arith.constant 0 : index
    %c2_151 = arith.constant 2 : index
    %274 = vector.load %arg13[%c0_150, %c2_151] : memref<32x3xf32, #tpu.memory_space<vmem>>, vector<8x1xf32>
    %275 = vector.broadcast %274 : vector<8x1xf32> to vector<8x512xf32>
    %276 = arith.addf %273, %275 : vector<8x512xf32>
    %c24 = arith.constant 24 : index
    %c0_152 = arith.constant 0 : index
    %277 = vector.load %arg15[%c24, %c0_152] : memref<32x512xf32, #tpu.memory_space<vmem>>, vector<8x512xf32>
    tpu.vector_store %arg15[%c24, %c0_152], %276 {strides = array<i32>} : memref<32x512xf32, #tpu.memory_space<vmem>>, vector<8x512xf32>,
    return
  }
  func.func @transform_0(%arg0: i32) -> (i32, i32) {
    %c0_i32 = arith.constant 0 : i32
    %c0_i32_0 = arith.constant 0 : i32
    %c0_i32_1 = arith.constant 0 : i32
    return %c0_i32, %c0_i32_0 : i32, i32
  }
  func.func @transform_1(%arg0: i32) -> (i32, i32) {
    %c0_i32 = arith.constant 0 : i32
    %c0_i32_0 = arith.constant 0 : i32
    %c0_i32_1 = arith.constant 0 : i32
    return %c0_i32, %c0_i32_0 : i32, i32
  }
  func.func @transform_2(%arg0: i32) -> (i32, i32) {
    %c0_i32 = arith.constant 0 : i32
    %c0_i32_0 = arith.constant 0 : i32
    %c0_i32_1 = arith.constant 0 : i32
    return %c0_i32, %c0_i32_0 : i32, i32
  }
  func.func @transform_3(%arg0: i32) -> (i32, i32) {
    %c0_i32 = arith.constant 0 : i32
    %c0_i32_0 = arith.constant 0 : i32
    %c0_i32_1 = arith.constant 0 : i32
    return %c0_i32, %c0_i32_0 : i32, i32
  }
  func.func @transform_4(%arg0: i32) -> (i32, i32) {
    %c0_i32 = arith.constant 0 : i32
    %c0_i32_0 = arith.constant 0 : i32
    %c0_i32_1 = arith.constant 0 : i32
    return %c0_i32, %c0_i32_0 : i32, i32
  }
  func.func @transform_5(%arg0: i32) -> (i32, i32) {
    %c0_i32 = arith.constant 0 : i32
    %c0_i32_0 = arith.constant 0 : i32
    %c0_i32_1 = arith.constant 0 : i32
    return %c0_i32, %c0_i32_0 : i32, i32
  }
  func.func @transform_6(%arg0: i32) -> (i32, i32) {
    %c0_i32 = arith.constant 0 : i32
    %c0_i32_0 = arith.constant 0 : i32
    %c0_i32_1 = arith.constant 0 : i32
    return %c0_i32, %c0_i32_0 : i32, i32
  }
  func.func @transform_7(%arg0: i32) -> (i32, i32) {
    %c0_i32 = arith.constant 0 : i32
    %c0_i32_0 = arith.constant 0 : i32
    %c0_i32_1 = arith.constant 0 : i32
    return %c0_i32, %c0_i32_0 : i32, i32
  }
  func.func @transform_8(%arg0: i32) -> (i32, i32) {
    %c0_i32 = arith.constant 0 : i32
    %c0_i32_0 = arith.constant 0 : i32
    %c0_i32_1 = arith.constant 0 : i32
    return %c0_i32, %c0_i32_0 : i32, i32
  }
  func.func @transform_9(%arg0: i32) -> (i32, i32) {
    %c0_i32 = arith.constant 0 : i32
    %c0_i32_0 = arith.constant 0 : i32
    %c0_i32_1 = arith.constant 0 : i32
    return %c0_i32, %c0_i32_0 : i32, i32
  }
  func.func @transform_10(%arg0: i32) -> (i32, i32) {
    %c0_i32 = arith.constant 0 : i32
    %c0_i32_0 = arith.constant 0 : i32
    %c0_i32_1 = arith.constant 0 : i32
    return %c0_i32, %c0_i32_0 : i32, i32
  }
  func.func @transform_11(%arg0: i32) -> (i32, i32) {
    %c0_i32 = arith.constant 0 : i32
    %c0_i32_0 = arith.constant 0 : i32
    %c0_i32_1 = arith.constant 0 : i32
    return %c0_i32, %c0_i32_0 : i32, i32
  }
  func.func @transform_12(%arg0: i32) -> (i32, i32) {
    %c0_i32 = arith.constant 0 : i32
    %c0_i32_0 = arith.constant 0 : i32
    %c0_i32_1 = arith.constant 0 : i32
    return %c0_i32, %c0_i32_0 : i32, i32
  }
  func.func @transform_13(%arg0: i32) -> (i32, i32) {
    %c0_i32 = arith.constant 0 : i32
    %c0_i32_0 = arith.constant 0 : i32
    %c0_i32_1 = arith.constant 0 : i32
    return %c0_i32, %c0_i32_0 : i32, i32
  }
  func.func @transform_14(%arg0: i32) -> (i32, i32) {
    %c0_i32 = arith.constant 0 : i32
    %c0_i32_0 = arith.constant 0 : i32
    %c0_i32_1 = arith.constant 0 : i32
    return %c0_i32, %c0_i32_0 : i32, i32
  }
}

</mosaic_0001>

<llo_original>
// kernel: dense_block.1
$region0: #{dense_block.1}
  #allocation0 [shape = 'u32[]', space=smem, size = 0x4, offset = 0x4, fixed_abs, tag = 'smem constant byte address 0x4 - core index']
  #allocation1 [shape = 'u32[144,128]{1,0:T(1,128)}', space=vmem, size = 0x12000, scoped, tag = 'internal scratch']
  %s0 = inlined_call_operand.vmem [shape: f32[8,512], index: 0, kind: input, shape index: {}]
  %s1 = inlined_call_operand.vmem [shape: f32[9,512], index: 1, kind: input, shape index: {}]
  %s2 = inlined_call_operand.vmem [shape: f32[8,2], index: 2, kind: input, shape index: {}]
  %s3 = inlined_call_operand.vmem [shape: f32[32,8], index: 3, kind: input, shape index: {}]
  %s4 = inlined_call_operand.vmem [shape: f32[32,3], index: 4, kind: input, shape index: {}]
  %s5 = inlined_call_operand.vmem [shape: f32[8,288], index: 5, kind: input, shape index: {}]
  %s6 = inlined_call_operand.vmem [shape: f32[16,2], index: 6, kind: input, shape index: {}]
  %s7 = inlined_call_operand.vmem [shape: f32[32,16], index: 7, kind: input, shape index: {}]
  %s8 = inlined_call_operand.vmem [shape: f32[32,3], index: 8, kind: input, shape index: {}]
  %s9 = inlined_call_operand.vmem [shape: f32[8,288], index: 9, kind: input, shape index: {}]
  %s10 = inlined_call_operand.vmem [shape: f32[24,2], index: 10, kind: input, shape index: {}]
  %s11 = inlined_call_operand.vmem [shape: f32[32,24], index: 11, kind: input, shape index: {}]
  %s12 = inlined_call_operand.vmem [shape: f32[32,3], index: 12, kind: input, shape index: {}]
  %s13 = inlined_call_operand.vmem [shape: f32[8,288], index: 13, kind: input, shape index: {}]
  %s14 = inlined_call_operand.vmem [shape: f32[32,512], index: 14, kind: output, shape index: {}]
  %s15 = sld [smem:[#allocation0]]
  $region66: #{dense_block.1} parent=0
    _
  %s17 = ssub.s32 1, %s15
  %s18 = scalar_select 0, %s17, %s15
  // Predicated region
  $region2: #{dense_block.1} parent=0 // pred_check
    _
  $region3: #{dense_block.1} parent=0 // pred_check_branch
    %20 = sbr.rel (0) target = $region5
  $region4: #{dense_block.1} parent=0 // pred_region
    _
  $region5: #{dense_block.1} parent=0 // pred_fallthru
    _
  // Predicated region
  $region6: #{dense_block.1} parent=0 // pred_check
    _
  $region7: #{dense_block.1} parent=0 // pred_check_branch
    %22 = sbr.rel (0) target = $region9
  $region8: #{dense_block.1} parent=0 // pred_region
    _
  $region9: #{dense_block.1} parent=0 // pred_fallthru
    _
  // Predicated region
  $region10: #{dense_block.1} parent=0 // pred_check
    _
  $region11: #{dense_block.1} parent=0 // pred_check_branch
    %24 = sbr.rel (0) target = $region13
  $region12: #{dense_block.1} parent=0 // pred_region
    _
  $region13: #{dense_block.1} parent=0 // pred_fallthru
    _
  // Predicated region
  $region14: #{dense_block.1} parent=0 // pred_check
    _
  $region15: #{dense_block.1} parent=0 // pred_check_branch
    %26 = sbr.rel (0) target = $region17
  $region16: #{dense_block.1} parent=0 // pred_region
    _
  $region17: #{dense_block.1} parent=0 // pred_fallthru
    _
  // Predicated region
  $region18: #{dense_block.1} parent=0 // pred_check
    _
  $region19: #{dense_block.1} parent=0 // pred_check_branch
    %28 = sbr.rel (0) target = $region21
  $region20: #{dense_block.1} parent=0 // pred_region
    _
  $region21: #{dense_block.1} parent=0 // pred_fallthru
    _
  // Predicated region
  $region22: #{dense_block.1} parent=0 // pred_check
    _
  $region23: #{dense_block.1} parent=0 // pred_check_branch
    %30 = sbr.rel (0) target = $region25
  $region24: #{dense_block.1} parent=0 // pred_region
    _
  $region25: #{dense_block.1} parent=0 // pred_fallthru
    _
  // Predicated region
  $region26: #{dense_block.1} parent=0 // pred_check
    _
  $region27: #{dense_block.1} parent=0 // pred_check_branch
    %32 = sbr.rel (0) target = $region29
  $region28: #{dense_block.1} parent=0 // pred_region
    _
  $region29: #{dense_block.1} parent=0 // pred_fallthru
    _
  // Predicated region
  $region30: #{dense_block.1} parent=0 // pred_check
    _
  $region31: #{dense_block.1} parent=0 // pred_check_branch
    %34 = sbr.rel (0) target = $region33
  $region32: #{dense_block.1} parent=0 // pred_region
    _
  $region33: #{dense_block.1} parent=0 // pred_fallthru
    _
  // Predicated region
  $region34: #{dense_block.1} parent=0 // pred_check
    _
  $region35: #{dense_block.1} parent=0 // pred_check_branch
    %36 = sbr.rel (0) target = $region37
  $region36: #{dense_block.1} parent=0 // pred_region
    _
  $region37: #{dense_block.1} parent=0 // pred_fallthru
    _
  // Predicated region
  $region38: #{dense_block.1} parent=0 // pred_check
    _
  $region39: #{dense_block.1} parent=0 // pred_check_branch
    %38 = sbr.rel (0) target = $region41
  $region40: #{dense_block.1} parent=0 // pred_region
    _
  $region41: #{dense_block.1} parent=0 // pred_fallthru
    _
  // Predicated region
  $region42: #{dense_block.1} parent=0 // pred_check
    _
  $region43: #{dense_block.1} parent=0 // pred_check_branch
    %40 = sbr.rel (0) target = $region45
  $region44: #{dense_block.1} parent=0 // pred_region
    _
  $region45: #{dense_block.1} parent=0 // pred_fallthru
    _
  // Predicated region
  $region46: #{dense_block.1} parent=0 // pred_check
    _
  $region47: #{dense_block.1} parent=0 // pred_check_branch
    %42 = sbr.rel (0) target = $region49
  $region48: #{dense_block.1} parent=0 // pred_region
    _
  $region49: #{dense_block.1} parent=0 // pred_fallthru
    _
  // Predicated region
  $region50: #{dense_block.1} parent=0 // pred_check
    _
  $region51: #{dense_block.1} parent=0 // pred_check_branch
    %44 = sbr.rel (0) target = $region53
  $region52: #{dense_block.1} parent=0 // pred_region
    _
  $region53: #{dense_block.1} parent=0 // pred_fallthru
    _
  // Predicated region
  $region54: #{dense_block.1} parent=0 // pred_check
    _
  $region55: #{dense_block.1} parent=0 // pred_check_branch
    %46 = sbr.rel (0) target = $region57
  $region56: #{dense_block.1} parent=0 // pred_region
    _
  $region57: #{dense_block.1} parent=0 // pred_fallthru
    _
  %v47 = vld [vmem:[%s0] sm:$0xff]
  %v48 = vld [vmem:[%s0 + $0x8] sm:$0xff]
  %v49 = vld [vmem:[%s0 + $0x10] sm:$0xff]
  %v50 = vld [vmem:[%s0 + $0x18] sm:$0xff]
  %51 = vst [vmem:[%s14] sm:$0xff] %v47
  %52 = vst [vmem:[%s14 + $0x8] sm:$0xff] %v48
  %53 = vst [vmem:[%s14 + $0x10] sm:$0xff] %v49
  %54 = vst [vmem:[%s14 + $0x18] sm:$0xff] %v50
  %v55 = vld [vmem:[%s14] sm:$0xff]
  %v56 = vld [vmem:[%s14 + $0x8] sm:$0xff]
  %v57 = vld [vmem:[%s14 + $0x10] sm:$0xff]
  %v58 = vld [vmem:[%s14 + $0x18] sm:$0xff]
  %v59 = vadd.f32 %v55, %v56
  %v60 = vadd.f32 %v59, %v57
  %v61 = vadd.f32 %v60, %v58
  %62 = vadd.xlane.f32.xlu0 %v61
  %v63 = vpop.xlane.xlu0 %62
  %v64 = vrcp.pop 512.0
  %v65 = vmul.f32 %v63, %v64
  %v66 = vmul.f32 %v55, %v55
  %v67 = vmul.f32 %v56, %v56
  %v68 = vmul.f32 %v57, %v57
  %v69 = vmul.f32 %v58, %v58
  %v70 = vadd.f32 %v66, %v67
  %v71 = vadd.f32 %v70, %v68
  %v72 = vadd.f32 %v71, %v69
  %73 = vadd.xlane.f32.xlu0 %v72
  %v74 = vpop.xlane.xlu0 %73
  %v75 = vmul.f32 %v74, %v64
  %v76 = vmul.f32 %v65, %v65
  %v77 = vsub.f32 %v75, %v76
  %v78 = vld [vmem:[%s2] sm:$0xff]
  %v79 = vadd.f32 %v77, 1e-05
  %v80 = vrsqrt.pop %v79
  %v81 = vmul.f32 %v78, %v80
  %v82 = vmul.f32 %v65, %v81
  %84 = vrot.lane.b32.xlu0 %v82, 1
  %v85 = vpop.permute.xlu0 %84
  %v87 = vsub.f32 %v78, %v85
  %89 = vset.pattern.permute.xlu0 0
  %90 = vperm.xlu0 %89, %v81
  %v91 = vpop.permute.xlu0 %90
  %v93 = vmul.f32 %v55, %v91
  %v94 = vmul.f32 %v56, %v91
  %v95 = vmul.f32 %v57, %v91
  %v96 = vmul.f32 %v58, %v91
  %98 = vset.pattern.permute.xlu0 1
  %99 = vperm.xlu0 %98, %v87
  %v100 = vpop.permute.xlu0 %99
  %v102 = vadd.f32 %v93, %v100
  %v103 = vadd.f32 %v94, %v100
  %v104 = vadd.f32 %v95, %v100
  %v105 = vadd.f32 %v96, %v100
  %v106 = vmax.f32 %v102, 0.0
  %v107 = vmax.f32 %v103, 0.0
  %v108 = vmax.f32 %v104, 0.0
  %v109 = vmax.f32 %v105, 0.0
  %v110 = vld [vmem:[%s3] sm:$0xff]
  %v111 = vld [vmem:[%s3 + $0x8] sm:$0xff]
  %v112 = vld [vmem:[%s3 + $0x10] sm:$0xff]
  %v113 = vld [vmem:[%s3 + $0x18] sm:$0xff]
  %vm114 = vcmask 64512
  %v116 = vsel %vm114, %v110, 0
  %v119 = vsel %vm114, %v111, 0
  %v122 = vsel %vm114, %v112, 0
  %v125 = vsel %vm114, %v113, 0
  %127 = vmatprep.subr.mxu0 %v107
  %128 = vmatpush1.msra.mxu0 %v106
  %129 = vmatprep.subr.mxu0 0.0
  %130 = vmatpush1.msra.mxu0 0.0
  %131 = vmatprep.subr.mxu0 0.0
  %132 = vmatpush1.msra.mxu0 0.0
  %133 = vmatprep.subr.mxu0 0.0
  %134 = vmatpush1.msra.mxu0 0.0
  %135 = vmatprep.subr.mxu0 0.0
  %136 = vmatpush1.msra.mxu0 0.0
  %137 = vmatprep.subr.mxu0 0.0
  %138 = vmatpush1.msra.mxu0 0.0
  %139 = vmatprep.subr.mxu0 0.0
  %140 = vmatpush1.msra.mxu0 0.0
  %141 = vmatprep.subr.mxu0 0.0
  %142 = vmatpush1.msra.mxu0 0.0
  %143 = vmatprep.subr.mxu0 0.0
  %144 = vmatpush1.msra.mxu0 0.0
  %145 = vmatprep.subr.mxu0 0.0
  %146 = vmatpush1.msra.mxu0 0.0
  %147 = vmatprep.subr.mxu0 0.0
  %148 = vmatpush1.msra.mxu0 0.0
  %149 = vmatprep.subr.mxu0 0.0
  %150 = vmatpush1.msra.mxu0 0.0
  %151 = vmatprep.subr.mxu0 0.0
  %152 = vmatpush1.msra.mxu0 0.0
  %153 = vmatprep.subr.mxu0 0.0
  %154 = vmatpush1.msra.mxu0 0.0
  %155 = vmatprep.subr.mxu0 0.0
  %156 = vmatpush1.msra.mxu0 0.0
  %157 = vmatprep.subr.mxu0 0.0
  %158 = vmatpush1.msra.mxu0 0.0
  %159 = vmatprep.subr.mxu0 0.0
  %160 = vmatpush1.msra.mxu0 0.0
  %161 = vmatprep.subr.mxu0 0.0
  %162 = vmatpush1.msra.mxu0 0.0
  %163 = vmatprep.subr.mxu0 0.0
  %164 = vmatpush1.msra.mxu0 0.0
  %165 = vmatprep.subr.mxu0 0.0
  %166 = vmatpush1.msra.mxu0 0.0
  %167 = vmatprep.subr.mxu0 0.0
  %168 = vmatpush1.msra.mxu0 0.0
  %169 = vmatprep.subr.mxu0 0.0
  %170 = vmatpush1.msra.mxu0 0.0
  %171 = vmatprep.subr.mxu0 0.0
  %172 = vmatpush1.msra.mxu0 0.0
  %173 = vmatprep.subr.mxu0 0.0
  %174 = vmatpush1.msra.mxu0 0.0
  %175 = vmatprep.subr.mxu0 0.0
  %176 = vmatpush1.msra.mxu0 0.0
  %177 = vmatprep.subr.mxu0 0.0
  %178 = vmatpush1.msra.mxu0 0.0
  %179 = vmatprep.subr.mxu0 0.0
  %180 = vmatpush1.msra.mxu0 0.0
  %181 = vmatprep.subr.mxu0 0.0
  %182 = vmatpush1.msra.mxu0 0.0
  %183 = vmatprep.subr.mxu0 0.0
  %184 = vmatpush1.msra.mxu0 0.0
  %185 = vmatprep.subr.mxu0 0.0
  %186 = vmatpush1.msra.mxu0 0.0
  %187 = vmatprep.subr.mxu0 0.0
  %188 = vmatpush1.msra.mxu0 0.0
  %189 = vmatprep.subr.mxu0 0.0
  %190 = vmatpush1.msra.mxu0 0.0
  %191 = vmatprep.mubr.f32.mxu0 0.0
  %192 = vmatmul.mubr.f32.gmra.mrb[0].mxu0 %v116
  %v193 = vpop.f32.mrb[0].mxu0
  %v194 = vadd.f32 0.0, %v193
  %v195 = vpop.f32.mrb[0].mxu0
  %v196 = vadd.f32 0.0, %v195
  %197 = vmatprep.mubr.f32.mxu0 0.0
  %198 = vmatmul.mubr.f32.gmra.mrb[0].mxu0 %v119
  %v199 = vpop.f32.mrb[0].mxu0
  %v200 = vadd.f32 0.0, %v199
  %v201 = vpop.f32.mrb[0].mxu0
  %v202 = vadd.f32 0.0, %v201
  %203 = vmatprep.mubr.f32.mxu0 0.0
  %204 = vmatmul.mubr.f32.gmra.mrb[0].mxu0 %v122
  %v205 = vpop.f32.mrb[0].mxu0
  %v206 = vadd.f32 0.0, %v205
  %v207 = vpop.f32.mrb[0].mxu0
  %v208 = vadd.f32 0.0, %v207
  %209 = vmatprep.mubr.f32.mxu0 0.0
  %210 = vmatmul.mubr.f32.gmra.mrb[0].mxu0 %v125
  %v211 = vpop.f32.mrb[0].mxu0
  %v212 = vadd.f32 0.0, %v211
  %v213 = vpop.f32.mrb[0].mxu0
  %v214 = vadd.f32 0.0, %v213
  %215 = vdwg.mxu0
  %216 = vmatprep.subr.mxu0 %v109
  %217 = vmatpush1.msra.mxu0 %v108
  %218 = vmatprep.subr.mxu0 0.0
  %219 = vmatpush1.msra.mxu0 0.0
  %220 = vmatprep.subr.mxu0 0.0
  %221 = vmatpush1.msra.mxu0 0.0
  %222 = vmatprep.subr.mxu0 0.0
  %223 = vmatpush1.msra.mxu0 0.0
  %224 = vmatprep.subr.mxu0 0.0
  %225 = vmatpush1.msra.mxu0 0.0
  %226 = vmatprep.subr.mxu0 0.0
  %227 = vmatpush1.msra.mxu0 0.0
  %228 = vmatprep.subr.mxu0 0.0
  %229 = vmatpush1.msra.mxu0 0.0
  %230 = vmatprep.subr.mxu0 0.0
  %231 = vmatpush1.msra.mxu0 0.0
  %232 = vmatprep.subr.mxu0 0.0
  %233 = vmatpush1.msra.mxu0 0.0
  %234 = vmatprep.subr.mxu0 0.0
  %235 = vmatpush1.msra.mxu0 0.0
  %236 = vmatprep.subr.mxu0 0.0
  %237 = vmatpush1.msra.mxu0 0.0
  %238 = vmatprep.subr.mxu0 0.0
  %239 = vmatpush1.msra.mxu0 0.0
  %240 = vmatprep.subr.mxu0 0.0
  %241 = vmatpush1.msra.mxu0 0.0
  %242 = vmatprep.subr.mxu0 0.0
  %243 = vmatpush1.msra.mxu0 0.0
  %244 = vmatprep.subr.mxu0 0.0
  %245 = vmatpush1.msra.mxu0 0.0
  %246 = vmatprep.subr.mxu0 0.0
  %247 = vmatpush1.msra.mxu0 0.0
  %248 = vmatprep.subr.mxu0 0.0
  %249 = vmatpush1.msra.mxu0 0.0
  %250 = vmatprep.subr.mxu0 0.0
  %251 = vmatpush1.msra.mxu0 0.0
  %252 = vmatprep.subr.mxu0 0.0
  %253 = vmatpush1.msra.mxu0 0.0
  %254 = vmatprep.subr.mxu0 0.0
  %255 = vmatpush1.msra.mxu0 0.0
  %256 = vmatprep.subr.mxu0 0.0
  %257 = vmatpush1.msra.mxu0 0.0
  %258 = vmatprep.subr.mxu0 0.0
  %259 = vmatpush1.msra.mxu0 0.0
  %260 = vmatprep.subr.mxu0 0.0
  %261 = vmatpush1.msra.mxu0 0.0
  %262 = vmatprep.subr.mxu0 0.0
  %263 = vmatpush1.msra.mxu0 0.0
  %264 = vmatprep.subr.mxu0 0.0
  %265 = vmatpush1.msra.mxu0 0.0
  %266 = vmatprep.subr.mxu0 0.0
  %267 = vmatpush1.msra.mxu0 0.0
  %268 = vmatprep.subr.mxu0 0.0
  %269 = vmatpush1.msra.mxu0 0.0
  %270 = vmatprep.subr.mxu0 0.0
  %271 = vmatpush1.msra.mxu0 0.0
  %272 = vmatprep.subr.mxu0 0.0
  %273 = vmatpush1.msra.mxu0 0.0
  %274 = vmatprep.subr.mxu0 0.0
  %275 = vmatpush1.msra.mxu0 0.0
  %276 = vmatprep.subr.mxu0 0.0
  %277 = vmatpush1.msra.mxu0 0.0
  %278 = vmatprep.subr.mxu0 0.0
  %279 = vmatpush1.msra.mxu0 0.0
  %280 = vmatprep.mubr.f32.mxu0 0.0
  %281 = vmatmul.mubr.f32.gmra.mrb[0].mxu0 %v116
  %v282 = vpop.f32.mrb[0].mxu0
  %v283 = vadd.f32 0.0, %v282
  %v284 = vpop.f32.mrb[0].mxu0
  %v285 = vadd.f32 0.0, %v284
  %286 = vmatprep.mubr.f32.mxu0 0.0
  %287 = vmatmul.mubr.f32.gmra.mrb[0].mxu0 %v119
  %v288 = vpop.f32.mrb[0].mxu0
  %v289 = vadd.f32 0.0, %v288
  %v290 = vpop.f32.mrb[0].mxu0
  %v291 = vadd.f32 0.0, %v290
  %292 = vmatprep.mubr.f32.mxu0 0.0
  %293 = vmatmul.mubr.f32.gmra.mrb[0].mxu0 %v122
  %v294 = vpop.f32.mrb[0].mxu0
  %v295 = vadd.f32 0.0, %v294
  %v296 = vpop.f32.mrb[0].mxu0
  %v297 = vadd.f32 0.0, %v296
  %298 = vmatprep.mubr.f32.mxu0 0.0
  %299 = vmatmul.mubr.f32.gmra.mrb[0].mxu0 %v125
  %v300 = vpop.f32.mrb[0].mxu0
  %v301 = vadd.f32 0.0, %v300
  %v302 = vpop.f32.mrb[0].mxu0
  %v303 = vadd.f32 0.0, %v302
  %304 = vdwg.mxu0
  %v305 = vadd.f32 %v194, %v196
  %v306 = vadd.f32 %v305, %v283
  %v307 = vadd.f32 %v306, %v285
  %308 = vadd.xlane.f32.xlu0 %v307
  %v309 = vpop.xlane.xlu0 %308
  %v310 = vadd.f32 %v200, %v202
  %v311 = vadd.f32 %v310, %v289
  %v312 = vadd.f32 %v311, %v291
  %313 = vadd.xlane.f32.xlu0 %v312
  %v314 = vpop.xlane.xlu0 %313
  %v315 = vadd.f32 %v206, %v208
  %v316 = vadd.f32 %v315, %v295
  %v317 = vadd.f32 %v316, %v297
  %318 = vadd.xlane.f32.xlu0 %v317
  %v319 = vpop.xlane.xlu0 %318
  %v320 = vadd.f32 %v212, %v214
  %v321 = vadd.f32 %v320, %v301
  %v322 = vadd.f32 %v321, %v303
  %323 = vadd.xlane.f32.xlu0 %v322
  %v324 = vpop.xlane.xlu0 %323
  %v325 = vmul.f32 %v309, %v64
  %v326 = vmul.f32 %v314, %v64
  %v327 = vmul.f32 %v319, %v64
  %v328 = vmul.f32 %v324, %v64
  %v329 = vmul.f32 %v194, %v194
  %v330 = vmul.f32 %v196, %v196
  %v331 = vmul.f32 %v283, %v283
  %v332 = vmul.f32 %v285, %v285
  %v333 = vmul.f32 %v200, %v200
  %v334 = vmul.f32 %v202, %v202
  %v335 = vmul.f32 %v289, %v289
  %v336 = vmul.f32 %v291, %v291
  %v337 = vmul.f32 %v206, %v206
  %v338 = vmul.f32 %v208, %v208
  %v339 = vmul.f32 %v295, %v295
  %v340 = vmul.f32 %v297, %v297
  %v341 = vmul.f32 %v212, %v212
  %v342 = vmul.f32 %v214, %v214
  %v343 = vmul.f32 %v301, %v301
  %v344 = vmul.f32 %v303, %v303
  %v345 = vadd.f32 %v329, %v330
  %v346 = vadd.f32 %v345, %v331
  %v347 = vadd.f32 %v346, %v332
  %348 = vadd.xlane.f32.xlu0 %v347
  %v349 = vpop.xlane.xlu0 %348
  %v350 = vadd.f32 %v333, %v334
  %v351 = vadd.f32 %v350, %v335
  %v352 = vadd.f32 %v351, %v336
  %353 = vadd.xlane.f32.xlu0 %v352
  %v354 = vpop.xlane.xlu0 %353
  %v355 = vadd.f32 %v337, %v338
  %v356 = vadd.f32 %v355, %v339
  %v357 = vadd.f32 %v356, %v340
  %358 = vadd.xlane.f32.xlu0 %v357
  %v359 = vpop.xlane.xlu0 %358
  %v360 = vadd.f32 %v341, %v342
  %v361 = vadd.f32 %v360, %v343
  %v362 = vadd.f32 %v361, %v344
  %363 = vadd.xlane.f32.xlu0 %v362
  %v364 = vpop.xlane.xlu0 %363
  %v365 = vmul.f32 %v349, %v64
  %v366 = vmul.f32 %v354, %v64
  %v367 = vmul.f32 %v359, %v64
  %v368 = vmul.f32 %v364, %v64
  %v369 = vmul.f32 %v325, %v325
  %v370 = vmul.f32 %v326, %v326
  %v371 = vmul.f32 %v327, %v327
  %v372 = vmul.f32 %v328, %v328
  %v373 = vsub.f32 %v365, %v369
  %v374 = vsub.f32 %v366, %v370
  %v375 = vsub.f32 %v367, %v371
  %v376 = vsub.f32 %v368, %v372
  %v377 = vld [vmem:[%s4] sm:$0xff]
  %v378 = vld [vmem:[%s4 + $0x8] sm:$0xff]
  %v379 = vld [vmem:[%s4 + $0x10] sm:$0xff]
  %v380 = vld [vmem:[%s4 + $0x18] sm:$0xff]
  %v381 = vadd.f32 %v373, 1e-05
  %v382 = vadd.f32 %v374, 1e-05
  %v383 = vadd.f32 %v375, 1e-05
  %v384 = vadd.f32 %v376, 1e-05
  %v385 = vrsqrt.pop %v381
  %v386 = vrsqrt.pop %v382
  %v387 = vrsqrt.pop %v383
  %v388 = vrsqrt.pop %v384
  %v389 = vmul.f32 %v377, %v385
  %v390 = vmul.f32 %v378, %v386
  %v391 = vmul.f32 %v379, %v387
  %v392 = vmul.f32 %v380, %v388
  %v393 = vmul.f32 %v325, %v389
  %v394 = vmul.f32 %v326, %v390
  %v395 = vmul.f32 %v327, %v391
  %v396 = vmul.f32 %v328, %v392
  %401 = vrot.lane.b32.xlu0 %v393, 1
  %v402 = vpop.permute.xlu0 %401
  %403 = vrot.lane.b32.xlu0 %v394, 1
  %v404 = vpop.permute.xlu0 %403
  %405 = vrot.lane.b32.xlu0 %v395, 1
  %v406 = vpop.permute.xlu0 %405
  %407 = vrot.lane.b32.xlu0 %v396, 1
  %v408 = vpop.permute.xlu0 %407
  %v413 = vsub.f32 %v377, %v402
  %v414 = vsub.f32 %v378, %v404
  %v415 = vsub.f32 %v379, %v406
  %v416 = vsub.f32 %v380, %v408
  %418 = vset.pattern.permute.xlu0 0
  %419 = vperm.xlu0 %418, %v389
  %v420 = vpop.permute.xlu0 %419
  %423 = vset.pattern.permute.xlu0 0
  %424 = vperm.xlu0 %423, %v390
  %v425 = vpop.permute.xlu0 %424
  %428 = vset.pattern.permute.xlu0 0
  %429 = vperm.xlu0 %428, %v391
  %v430 = vpop.permute.xlu0 %429
  %433 = vset.pattern.permute.xlu0 0
  %434 = vperm.xlu0 %433, %v392
  %v435 = vpop.permute.xlu0 %434
  %v437 = vmul.f32 %v194, %v420
  %v438 = vmul.f32 %v196, %v420
  %v439 = vmul.f32 %v283, %v420
  %v440 = vmul.f32 %v285, %v420
  %v441 = vmul.f32 %v200, %v425
  %v442 = vmul.f32 %v202, %v425
  %v443 = vmul.f32 %v289, %v425
  %v444 = vmul.f32 %v291, %v425
  %v445 = vmul.f32 %v206, %v430
  %v446 = vmul.f32 %v208, %v430
  %v447 = vmul.f32 %v295, %v430
  %v448 = vmul.f32 %v297, %v430
  %v449 = vmul.f32 %v212, %v435
  %v450 = vmul.f32 %v214, %v435
  %v451 = vmul.f32 %v301, %v435
  %v452 = vmul.f32 %v303, %v435
  %454 = vset.pattern.permute.xlu0 1
  %455 = vperm.xlu0 %454, %v413
  %v456 = vpop.permute.xlu0 %455
  %459 = vset.pattern.permute.xlu0 1
  %460 = vperm.xlu0 %459, %v414
  %v461 = vpop.permute.xlu0 %460
  %464 = vset.pattern.permute.xlu0 1
  %465 = vperm.xlu0 %464, %v415
  %v466 = vpop.permute.xlu0 %465
  %469 = vset.pattern.permute.xlu0 1
  %470 = vperm.xlu0 %469, %v416
  %v471 = vpop.permute.xlu0 %470
  %v473 = vadd.f32 %v437, %v456
  %v474 = vadd.f32 %v438, %v456
  %v475 = vadd.f32 %v439, %v456
  %v476 = vadd.f32 %v440, %v456
  %v477 = vadd.f32 %v441, %v461
  %v478 = vadd.f32 %v442, %v461
  %v479 = vadd.f32 %v443, %v461
  %v480 = vadd.f32 %v444, %v461
  %v481 = vadd.f32 %v445, %v466
  %v482 = vadd.f32 %v446, %v466
  %v483 = vadd.f32 %v447, %v466
  %v484 = vadd.f32 %v448, %v466
  %v485 = vadd.f32 %v449, %v471
  %v486 = vadd.f32 %v450, %v471
  %v487 = vadd.f32 %v451, %v471
  %v488 = vadd.f32 %v452, %v471
  %v489 = vmax.f32 %v473, 0.0
  %v490 = vmax.f32 %v474, 0.0
  %v491 = vmax.f32 %v475, 0.0
  %v492 = vmax.f32 %v476, 0.0
  %v493 = vmax.f32 %v477, 0.0
  %v494 = vmax.f32 %v478, 0.0
  %v495 = vmax.f32 %v479, 0.0
  %v496 = vmax.f32 %v480, 0.0
  %v497 = vmax.f32 %v481, 0.0
  %v498 = vmax.f32 %v482, 0.0
  %v499 = vmax.f32 %v483, 0.0
  %v500 = vmax.f32 %v484, 0.0
  %v501 = vmax.f32 %v485, 0.0
  %v502 = vmax.f32 %v486, 0.0
  %v503 = vmax.f32 %v487, 0.0
  %v504 = vmax.f32 %v488, 0.0
  %505 = vrot.lane.b32.xlu0 %v489, 17
  %v506 = vpop.permute.xlu0 %505
  %507 = vrot.lane.b32.xlu0 %v493, 17
  %v508 = vpop.permute.xlu0 %507
  %509 = vrot.lane.b32.xlu0 %v497, 17
  %v510 = vpop.permute.xlu0 %509
  %511 = vrot.lane.b32.xlu0 %v501, 17
  %v512 = vpop.permute.xlu0 %511
  %513 = vrot.lane.b32.xlu0 %v490, 17
  %v514 = vpop.permute.xlu0 %513
  %515 = vrot.lane.b32.xlu0 %v494, 17
  %v516 = vpop.permute.xlu0 %515
  %517 = vrot.lane.b32.xlu0 %v498, 17
  %v518 = vpop.permute.xlu0 %517
  %519 = vrot.lane.b32.xlu0 %v502, 17
  %v520 = vpop.permute.xlu0 %519
  %521 = vrot.lane.b32.xlu0 %v491, 17
  %v522 = vpop.permute.xlu0 %521
  %523 = vrot.lane.b32.xlu0 %v495, 17
  %v524 = vpop.permute.xlu0 %523
  %525 = vrot.lane.b32.xlu0 %v499, 17
  %v526 = vpop.permute.xlu0 %525
  %527 = vrot.lane.b32.xlu0 %v503, 17
  %v528 = vpop.permute.xlu0 %527
  %529 = vrot.lane.b32.xlu0 %v492, 17
  %v530 = vpop.permute.xlu0 %529
  %531 = vrot.lane.b32.xlu0 %v496, 17
  %v532 = vpop.permute.xlu0 %531
  %533 = vrot.lane.b32.xlu0 %v500, 17
  %v534 = vpop.permute.xlu0 %533
  %535 = vrot.lane.b32.xlu0 %v504, 17
  %v536 = vpop.permute.xlu0 %535
  %v537 = vlaneseq
  %v538 = vand.u32 %v537, 127
  %vm539 = vcmp.lt.s32.totalorder %v538, 17
  %v540 = vsel %vm539, %v522, %v530
  %v541 = vsel %vm539, %v524, %v532
  %v542 = vsel %vm539, %v526, %v534
  %v543 = vsel %vm539, %v528, %v536
  %v544 = vsel %vm539, %v514, %v522
  %v545 = vsel %vm539, %v516, %v524
  %v546 = vsel %vm539, %v518, %v526
  %v547 = vsel %vm539, %v520, %v528
  %v548 = vsel %vm539, %v506, %v514
  %v549 = vsel %vm539, %v508, %v516
  %v550 = vsel %vm539, %v510, %v518
  %v551 = vsel %vm539, %v512, %v520
  %v552 = vsel %vm539, %v530, %v506
  %v553 = vsel %vm539, %v532, %v508
  %v554 = vsel %vm539, %v534, %v510
  %v555 = vsel %vm539, %v536, %v512
  %v556 = vld [vmem:[%s1] ss:$8 sm:$0xf]
  %v558 = vlaneseq
  %v559 = vshrl.u32 %v558, 7
  %v560 = vsub.s32 0, %v559
  %v561 = vrot.slane %v556, %v560
  %v562 = vlaneseq
  %v563 = vshrl.u32 %v562, 7
  %v564 = vsub.s32 1, %v563
  %v565 = vrot.slane %v556, %v564
  %v566 = vlaneseq
  %v567 = vshrl.u32 %v566, 7
  %v568 = vsub.s32 2, %v567
  %v569 = vrot.slane %v556, %v568
  %v570 = vlaneseq
  %v571 = vshrl.u32 %v570, 7
  %v572 = vsub.s32 3, %v571
  %v573 = vrot.slane %v556, %v572
  %v578 = vmul.f32 %v552, %v561
  %v579 = vmul.f32 %v548, %v565
  %v580 = vmul.f32 %v544, %v569
  %v581 = vmul.f32 %v540, %v573
  %v582 = vmul.f32 %v553, %v561
  %v583 = vmul.f32 %v549, %v565
  %v584 = vmul.f32 %v545, %v569
  %v585 = vmul.f32 %v541, %v573
  %v586 = vmul.f32 %v554, %v561
  %v587 = vmul.f32 %v550, %v565
  %v588 = vmul.f32 %v546, %v569
  %v589 = vmul.f32 %v542, %v573
  %v590 = vmul.f32 %v555, %v561
  %v591 = vmul.f32 %v551, %v565
  %v592 = vmul.f32 %v547, %v569
  %v593 = vmul.f32 %v543, %v573
  %594 = vrot.lane.b32.xlu0 %v489, 16
  %v595 = vpop.permute.xlu0 %594
  %596 = vrot.lane.b32.xlu0 %v493, 16
  %v597 = vpop.permute.xlu0 %596
  %598 = vrot.lane.b32.xlu0 %v497, 16
  %v599 = vpop.permute.xlu0 %598
  %600 = vrot.lane.b32.xlu0 %v501, 16
  %v601 = vpop.permute.xlu0 %600
  %602 = vrot.lane.b32.xlu0 %v490, 16
  %v603 = vpop.permute.xlu0 %602
  %604 = vrot.lane.b32.xlu0 %v494, 16
  %v605 = vpop.permute.xlu0 %604
  %606 = vrot.lane.b32.xlu0 %v498, 16
  %v607 = vpop.permute.xlu0 %606
  %608 = vrot.lane.b32.xlu0 %v502, 16
  %v609 = vpop.permute.xlu0 %608
  %610 = vrot.lane.b32.xlu0 %v491, 16
  %v611 = vpop.permute.xlu0 %610
  %612 = vrot.lane.b32.xlu0 %v495, 16
  %v613 = vpop.permute.xlu0 %612
  %614 = vrot.lane.b32.xlu0 %v499, 16
  %v615 = vpop.permute.xlu0 %614
  %616 = vrot.lane.b32.xlu0 %v503, 16
  %v617 = vpop.permute.xlu0 %616
  %618 = vrot.lane.b32.xlu0 %v492, 16
  %v619 = vpop.permute.xlu0 %618
  %620 = vrot.lane.b32.xlu0 %v496, 16
  %v621 = vpop.permute.xlu0 %620
  %622 = vrot.lane.b32.xlu0 %v500, 16
  %v623 = vpop.permute.xlu0 %622
  %624 = vrot.lane.b32.xlu0 %v504, 16
  %v625 = vpop.permute.xlu0 %624
  %vm626 = vcmp.lt.s32.totalorder %v538, 16
  %v627 = vsel %vm626, %v611, %v619
  %v628 = vsel %vm626, %v613, %v621
  %v629 = vsel %vm626, %v615, %v623
  %v630 = vsel %vm626, %v617, %v625
  %v631 = vsel %vm626, %v603, %v611
  %v632 = vsel %vm626, %v605, %v613
  %v633 = vsel %vm626, %v607, %v615
  %v634 = vsel %vm626, %v609, %v617
  %v635 = vsel %vm626, %v595, %v603
  %v636 = vsel %vm626, %v597, %v605
  %v637 = vsel %vm626, %v599, %v607
  %v638 = vsel %vm626, %v601, %v609
  %v639 = vsel %vm626, %v619, %v595
  %v640 = vsel %vm626, %v621, %v597
  %v641 = vsel %vm626, %v623, %v599
  %v642 = vsel %vm626, %v625, %v601
  %s643 = scalar_lea.vmem %s1, 1
  %v644 = vld [vmem:[%s643] ss:$8 sm:$0xf]
  %v646 = vlaneseq
  %v647 = vshrl.u32 %v646, 7
  %v648 = vsub.s32 0, %v647
  %v649 = vrot.slane %v644, %v648
  %v650 = vlaneseq
  %v651 = vshrl.u32 %v650, 7
  %v652 = vsub.s32 1, %v651
  %v653 = vrot.slane %v644, %v652
  %v654 = vlaneseq
  %v655 = vshrl.u32 %v654, 7
  %v656 = vsub.s32 2, %v655
  %v657 = vrot.slane %v644, %v656
  %v658 = vlaneseq
  %v659 = vshrl.u32 %v658, 7
  %v660 = vsub.s32 3, %v659
  %v661 = vrot.slane %v644, %v660
  %v666 = vmul.f32 %v639, %v649
  %v667 = vmul.f32 %v635, %v653
  %v668 = vmul.f32 %v631, %v657
  %v669 = vmul.f32 %v627, %v661
  %v670 = vmul.f32 %v640, %v649
  %v671 = vmul.f32 %v636, %v653
  %v672 = vmul.f32 %v632, %v657
  %v673 = vmul.f32 %v628, %v661
  %v674 = vmul.f32 %v641, %v649
  %v675 = vmul.f32 %v637, %v653
  %v676 = vmul.f32 %v633, %v657
  %v677 = vmul.f32 %v629, %v661
  %v678 = vmul.f32 %v642, %v649
  %v679 = vmul.f32 %v638, %v653
  %v680 = vmul.f32 %v634, %v657
  %v681 = vmul.f32 %v630, %v661
  %682 = vrot.lane.b32.xlu0 %v489, 15
  %v683 = vpop.permute.xlu0 %682
  %684 = vrot.lane.b32.xlu0 %v493, 15
  %v685 = vpop.permute.xlu0 %684
  %686 = vrot.lane.b32.xlu0 %v497, 15
  %v687 = vpop.permute.xlu0 %686
  %688 = vrot.lane.b32.xlu0 %v501, 15
  %v689 = vpop.permute.xlu0 %688
  %690 = vrot.lane.b32.xlu0 %v490, 15
  %v691 = vpop.permute.xlu0 %690
  %692 = vrot.lane.b32.xlu0 %v494, 15
  %v693 = vpop.permute.xlu0 %692
  %694 = vrot.lane.b32.xlu0 %v498, 15
  %v695 = vpop.permute.xlu0 %694
  %696 = vrot.lane.b32.xlu0 %v502, 15
  %v697 = vpop.permute.xlu0 %696
  %698 = vrot.lane.b32.xlu0 %v491, 15
  %v699 = vpop.permute.xlu0 %698
  %700 = vrot.lane.b32.xlu0 %v495, 15
  %v701 = vpop.permute.xlu0 %700
  %702 = vrot.lane.b32.xlu0 %v499, 15
  %v703 = vpop.permute.xlu0 %702
  %704 = vrot.lane.b32.xlu0 %v503, 15
  %v705 = vpop.permute.xlu0 %704
  %706 = vrot.lane.b32.xlu0 %v492, 15
  %v707 = vpop.permute.xlu0 %706
  %708 = vrot.lane.b32.xlu0 %v496, 15
  %v709 = vpop.permute.xlu0 %708
  %710 = vrot.lane.b32.xlu0 %v500, 15
  %v711 = vpop.permute.xlu0 %710
  %712 = vrot.lane.b32.xlu0 %v504, 15
  %v713 = vpop.permute.xlu0 %712
  %vm714 = vcmp.lt.s32.totalorder %v538, 15
  %v715 = vsel %vm714, %v699, %v707
  %v716 = vsel %vm714, %v701, %v709
  %v717 = vsel %vm714, %v703, %v711
  %v718 = vsel %vm714, %v705, %v713
  %v719 = vsel %vm714, %v691, %v699
  %v720 = vsel %vm714, %v693, %v701
  %v721 = vsel %vm714, %v695, %v703
  %v722 = vsel %vm714, %v697, %v705
  %v723 = vsel %vm714, %v683, %v691
  %v724 = vsel %vm714, %v685, %v693
  %v725 = vsel %vm714, %v687, %v695
  %v726 = vsel %vm714, %v689, %v697
  %v727 = vsel %vm714, %v707, %v683
  %v728 = vsel %vm714, %v709, %v685
  %v729 = vsel %vm714, %v711, %v687
  %v730 = vsel %vm714, %v713, %v689
  %s731 = scalar_lea.vmem %s1, 2
  %v732 = vld [vmem:[%s731] ss:$8 sm:$0xf]
  %v734 = vlaneseq
  %v735 = vshrl.u32 %v734, 7
  %v736 = vsub.s32 0, %v735
  %v737 = vrot.slane %v732, %v736
  %v738 = vlaneseq
  %v739 = vshrl.u32 %v738, 7
  %v740 = vsub.s32 1, %v739
  %v741 = vrot.slane %v732, %v740
  %v742 = vlaneseq
  %v743 = vshrl.u32 %v742, 7
  %v744 = vsub.s32 2, %v743
  %v745 = vrot.slane %v732, %v744
  %v746 = vlaneseq
  %v747 = vshrl.u32 %v746, 7
  %v748 = vsub.s32 3, %v747
  %v749 = vrot.slane %v732, %v748
  %v754 = vmul.f32 %v727, %v737
  %v755 = vmul.f32 %v723, %v741
  %v756 = vmul.f32 %v719, %v745
  %v757 = vmul.f32 %v715, %v749
  %v758 = vmul.f32 %v728, %v737
  %v759 = vmul.f32 %v724, %v741
  %v760 = vmul.f32 %v720, %v745
  %v761 = vmul.f32 %v716, %v749
  %v762 = vmul.f32 %v729, %v737
  %v763 = vmul.f32 %v725, %v741
  %v764 = vmul.f32 %v721, %v745
  %v765 = vmul.f32 %v717, %v749
  %v766 = vmul.f32 %v730, %v737
  %v767 = vmul.f32 %v726, %v741
  %v768 = vmul.f32 %v722, %v745
  %v769 = vmul.f32 %v718, %v749
  %770 = vrot.lane.b32.xlu0 %v489, 1
  %v771 = vpop.permute.xlu0 %770
  %772 = vrot.lane.b32.xlu0 %v493, 1
  %v773 = vpop.permute.xlu0 %772
  %774 = vrot.lane.b32.xlu0 %v497, 1
  %v775 = vpop.permute.xlu0 %774
  %776 = vrot.lane.b32.xlu0 %v501, 1
  %v777 = vpop.permute.xlu0 %776
  %778 = vrot.lane.b32.xlu0 %v490, 1
  %v779 = vpop.permute.xlu0 %778
  %780 = vrot.lane.b32.xlu0 %v494, 1
  %v781 = vpop.permute.xlu0 %780
  %782 = vrot.lane.b32.xlu0 %v498, 1
  %v783 = vpop.permute.xlu0 %782
  %784 = vrot.lane.b32.xlu0 %v502, 1
  %v785 = vpop.permute.xlu0 %784
  %786 = vrot.lane.b32.xlu0 %v491, 1
  %v787 = vpop.permute.xlu0 %786
  %788 = vrot.lane.b32.xlu0 %v495, 1
  %v789 = vpop.permute.xlu0 %788
  %790 = vrot.lane.b32.xlu0 %v499, 1
  %v791 = vpop.permute.xlu0 %790
  %792 = vrot.lane.b32.xlu0 %v503, 1
  %v793 = vpop.permute.xlu0 %792
  %794 = vrot.lane.b32.xlu0 %v492, 1
  %v795 = vpop.permute.xlu0 %794
  %796 = vrot.lane.b32.xlu0 %v496, 1
  %v797 = vpop.permute.xlu0 %796
  %798 = vrot.lane.b32.xlu0 %v500, 1
  %v799 = vpop.permute.xlu0 %798
  %800 = vrot.lane.b32.xlu0 %v504, 1
  %v801 = vpop.permute.xlu0 %800
  %vm802 = vcmp.lt.s32.totalorder %v538, 1
  %v803 = vsel %vm802, %v787, %v795
  %v804 = vsel %vm802, %v789, %v797
  %v805 = vsel %vm802, %v791, %v799
  %v806 = vsel %vm802, %v793, %v801
  %v807 = vsel %vm802, %v779, %v787
  %v808 = vsel %vm802, %v781, %v789
  %v809 = vsel %vm802, %v783, %v791
  %v810 = vsel %vm802, %v785, %v793
  %v811 = vsel %vm802, %v771, %v779
  %v812 = vsel %vm802, %v773, %v781
  %v813 = vsel %vm802, %v775, %v783
  %v814 = vsel %vm802, %v777, %v785
  %v815 = vsel %vm802, %v795, %v771
  %v816 = vsel %vm802, %v797, %v773
  %v817 = vsel %vm802, %v799, %v775
  %v818 = vsel %vm802, %v801, %v777
  %s819 = scalar_lea.vmem %s1, 3
  %v820 = vld [vmem:[%s819] ss:$8 sm:$0xf]
  %v822 = vlaneseq
  %v823 = vshrl.u32 %v822, 7
  %v824 = vsub.s32 0, %v823
  %v825 = vrot.slane %v820, %v824
  %v826 = vlaneseq
  %v827 = vshrl.u32 %v826, 7
  %v828 = vsub.s32 1, %v827
  %v829 = vrot.slane %v820, %v828
  %v830 = vlaneseq
  %v831 = vshrl.u32 %v830, 7
  %v832 = vsub.s32 2, %v831
  %v833 = vrot.slane %v820, %v832
  %v834 = vlaneseq
  %v835 = vshrl.u32 %v834, 7
  %v836 = vsub.s32 3, %v835
  %v837 = vrot.slane %v820, %v836
  %v842 = vmul.f32 %v815, %v825
  %v843 = vmul.f32 %v811, %v829
  %v844 = vmul.f32 %v807, %v833
  %v845 = vmul.f32 %v803, %v837
  %v846 = vmul.f32 %v816, %v825
  %v847 = vmul.f32 %v812, %v829
  %v848 = vmul.f32 %v808, %v833
  %v849 = vmul.f32 %v804, %v837
  %v850 = vmul.f32 %v817, %v825
  %v851 = vmul.f32 %v813, %v829
  %v852 = vmul.f32 %v809, %v833
  %v853 = vmul.f32 %v805, %v837
  %v854 = vmul.f32 %v818, %v825
  %v855 = vmul.f32 %v814, %v829
  %v856 = vmul.f32 %v810, %v833
  %v857 = vmul.f32 %v806, %v837
  %858 = vrot.lane.b32.xlu0 %v489, 127
  %v859 = vpop.permute.xlu0 %858
  %860 = vrot.lane.b32.xlu0 %v493, 127
  %v861 = vpop.permute.xlu0 %860
  %862 = vrot.lane.b32.xlu0 %v497, 127
  %v863 = vpop.permute.xlu0 %862
  %864 = vrot.lane.b32.xlu0 %v501, 127
  %v865 = vpop.permute.xlu0 %864
  %866 = vrot.lane.b32.xlu0 %v490, 127
  %v867 = vpop.permute.xlu0 %866
  %868 = vrot.lane.b32.xlu0 %v494, 127
  %v869 = vpop.permute.xlu0 %868
  %870 = vrot.lane.b32.xlu0 %v498, 127
  %v871 = vpop.permute.xlu0 %870
  %872 = vrot.lane.b32.xlu0 %v502, 127
  %v873 = vpop.permute.xlu0 %872
  %874 = vrot.lane.b32.xlu0 %v491, 127
  %v875 = vpop.permute.xlu0 %874
  %876 = vrot.lane.b32.xlu0 %v495, 127
  %v877 = vpop.permute.xlu0 %876
  %878 = vrot.lane.b32.xlu0 %v499, 127
  %v879 = vpop.permute.xlu0 %878
  %880 = vrot.lane.b32.xlu0 %v503, 127
  %v881 = vpop.permute.xlu0 %880
  %882 = vrot.lane.b32.xlu0 %v492, 127
  %v883 = vpop.permute.xlu0 %882
  %884 = vrot.lane.b32.xlu0 %v496, 127
  %v885 = vpop.permute.xlu0 %884
  %886 = vrot.lane.b32.xlu0 %v500, 127
  %v887 = vpop.permute.xlu0 %886
  %888 = vrot.lane.b32.xlu0 %v504, 127
  %v889 = vpop.permute.xlu0 %888
  %vm890 = vcmp.lt.s32.totalorder %v538, 127
  %v891 = vsel %vm890, %v875, %v883
  %v892 = vsel %vm890, %v877, %v885
  %v893 = vsel %vm890, %v879, %v887
  %v894 = vsel %vm890, %v881, %v889
  %v895 = vsel %vm890, %v867, %v875
  %v896 = vsel %vm890, %v869, %v877
  %v897 = vsel %vm890, %v871, %v879
  %v898 = vsel %vm890, %v873, %v881
  %v899 = vsel %vm890, %v859, %v867
  %v900 = vsel %vm890, %v861, %v869
  %v901 = vsel %vm890, %v863, %v871
  %v902 = vsel %vm890, %v865, %v873
  %v903 = vsel %vm890, %v883, %v859
  %v904 = vsel %vm890, %v885, %v861
  %v905 = vsel %vm890, %v887, %v863
  %v906 = vsel %vm890, %v889, %v865
  %s907 = scalar_lea.vmem %s1, 5
  %v908 = vld [vmem:[%s907] ss:$8 sm:$0xf]
  %v910 = vlaneseq
  %v911 = vshrl.u32 %v910, 7
  %v912 = vsub.s32 0, %v911
  %v913 = vrot.slane %v908, %v912
  %v914 = vlaneseq
  %v915 = vshrl.u32 %v914, 7
  %v916 = vsub.s32 1, %v915
  %v917 = vrot.slane %v908, %v916
  %v918 = vlaneseq
  %v919 = vshrl.u32 %v918, 7
  %v920 = vsub.s32 2, %v919
  %v921 = vrot.slane %v908, %v920
  %v922 = vlaneseq
  %v923 = vshrl.u32 %v922, 7
  %v924 = vsub.s32 3, %v923
  %v925 = vrot.slane %v908, %v924
  %v930 = vmul.f32 %v899, %v913
  %v931 = vmul.f32 %v895, %v917
  %v932 = vmul.f32 %v891, %v921
  %v933 = vmul.f32 %v903, %v925
  %v934 = vmul.f32 %v900, %v913
  %v935 = vmul.f32 %v896, %v917
  %v936 = vmul.f32 %v892, %v921
  %v937 = vmul.f32 %v904, %v925
  %v938 = vmul.f32 %v901, %v913
  %v939 = vmul.f32 %v897, %v917
  %v940 = vmul.f32 %v893, %v921
  %v941 = vmul.f32 %v905, %v925
  %v942 = vmul.f32 %v902, %v913
  %v943 = vmul.f32 %v898, %v917
  %v944 = vmul.f32 %v894, %v921
  %v945 = vmul.f32 %v906, %v925
  %946 = vrot.lane.b32.xlu0 %v489, 113
  %v947 = vpop.permute.xlu0 %946
  %948 = vrot.lane.b32.xlu0 %v493, 113
  %v949 = vpop.permute.xlu0 %948
  %950 = vrot.lane.b32.xlu0 %v497, 113
  %v951 = vpop.permute.xlu0 %950
  %952 = vrot.lane.b32.xlu0 %v501, 113
  %v953 = vpop.permute.xlu0 %952
  %954 = vrot.lane.b32.xlu0 %v490, 113
  %v955 = vpop.permute.xlu0 %954
  %956 = vrot.lane.b32.xlu0 %v494, 113
  %v957 = vpop.permute.xlu0 %956
  %958 = vrot.lane.b32.xlu0 %v498, 113
  %v959 = vpop.permute.xlu0 %958
  %960 = vrot.lane.b32.xlu0 %v502, 113
  %v961 = vpop.permute.xlu0 %960
  %962 = vrot.lane.b32.xlu0 %v491, 113
  %v963 = vpop.permute.xlu0 %962
  %964 = vrot.lane.b32.xlu0 %v495, 113
  %v965 = vpop.permute.xlu0 %964
  %966 = vrot.lane.b32.xlu0 %v499, 113
  %v967 = vpop.permute.xlu0 %966
  %968 = vrot.lane.b32.xlu0 %v503, 113
  %v969 = vpop.permute.xlu0 %968
  %970 = vrot.lane.b32.xlu0 %v492, 113
  %v971 = vpop.permute.xlu0 %970
  %972 = vrot.lane.b32.xlu0 %v496, 113
  %v973 = vpop.permute.xlu0 %972
  %974 = vrot.lane.b32.xlu0 %v500, 113
  %v975 = vpop.permute.xlu0 %974
  %976 = vrot.lane.b32.xlu0 %v504, 113
  %v977 = vpop.permute.xlu0 %976
  %vm978 = vcmp.lt.s32.totalorder %v538, 113
  %v979 = vsel %vm978, %v963, %v971
  %v980 = vsel %vm978, %v965, %v973
  %v981 = vsel %vm978, %v967, %v975
  %v982 = vsel %vm978, %v969, %v977
  %v983 = vsel %vm978, %v955, %v963
  %v984 = vsel %vm978, %v957, %v965
  %v985 = vsel %vm978, %v959, %v967
  %v986 = vsel %vm978, %v961, %v969
  %v987 = vsel %vm978, %v947, %v955
  %v988 = vsel %vm978, %v949, %v957
  %v989 = vsel %vm978, %v951, %v959
  %v990 = vsel %vm978, %v953, %v961
  %v991 = vsel %vm978, %v971, %v947
  %v992 = vsel %vm978, %v973, %v949
  %v993 = vsel %vm978, %v975, %v951
  %v994 = vsel %vm978, %v977, %v953
  %s995 = scalar_lea.vmem %s1, 6
  %v996 = vld [vmem:[%s995] ss:$8 sm:$0xf]
  %v998 = vlaneseq
  %v999 = vshrl.u32 %v998, 7
  %v1000 = vsub.s32 0, %v999
  %v1001 = vrot.slane %v996, %v1000
  %v1002 = vlaneseq
  %v1003 = vshrl.u32 %v1002, 7
  %v1004 = vsub.s32 1, %v1003
  %v1005 = vrot.slane %v996, %v1004
  %v1006 = vlaneseq
  %v1007 = vshrl.u32 %v1006, 7
  %v1008 = vsub.s32 2, %v1007
  %v1009 = vrot.slane %v996, %v1008
  %v1010 = vlaneseq
  %v1011 = vshrl.u32 %v1010, 7
  %v1012 = vsub.s32 3, %v1011
  %v1013 = vrot.slane %v996, %v1012
  %v1018 = vmul.f32 %v987, %v1001
  %v1019 = vmul.f32 %v983, %v1005
  %v1020 = vmul.f32 %v979, %v1009
  %v1021 = vmul.f32 %v991, %v1013
  %v1022 = vmul.f32 %v988, %v1001
  %v1023 = vmul.f32 %v984, %v1005
  %v1024 = vmul.f32 %v980, %v1009
  %v1025 = vmul.f32 %v992, %v1013
  %v1026 = vmul.f32 %v989, %v1001
  %v1027 = vmul.f32 %v985, %v1005
  %v1028 = vmul.f32 %v981, %v1009
  %v1029 = vmul.f32 %v993, %v1013
  %v1030 = vmul.f32 %v990, %v1001
  %v1031 = vmul.f32 %v986, %v1005
  %v1032 = vmul.f32 %v982, %v1009
  %v1033 = vmul.f32 %v994, %v1013
  %1034 = vrot.lane.b32.xlu0 %v489, 112
  %v1035 = vpop.permute.xlu0 %1034
  %1036 = vrot.lane.b32.xlu0 %v493, 112
  %v1037 = vpop.permute.xlu0 %1036
  %1038 = vrot.lane.b32.xlu0 %v497, 112
  %v1039 = vpop.permute.xlu0 %1038
  %1040 = vrot.lane.b32.xlu0 %v501, 112
  %v1041 = vpop.permute.xlu0 %1040
  %1042 = vrot.lane.b32.xlu0 %v490, 112
  %v1043 = vpop.permute.xlu0 %1042
  %1044 = vrot.lane.b32.xlu0 %v494, 112
  %v1045 = vpop.permute.xlu0 %1044
  %1046 = vrot.lane.b32.xlu0 %v498, 112
  %v1047 = vpop.permute.xlu0 %1046
  %1048 = vrot.lane.b32.xlu0 %v502, 112
  %v1049 = vpop.permute.xlu0 %1048
  %1050 = vrot.lane.b32.xlu0 %v491, 112
  %v1051 = vpop.permute.xlu0 %1050
  %1052 = vrot.lane.b32.xlu0 %v495, 112
  %v1053 = vpop.permute.xlu0 %1052
  %1054 = vrot.lane.b32.xlu0 %v499, 112
  %v1055 = vpop.permute.xlu0 %1054
  %1056 = vrot.lane.b32.xlu0 %v503, 112
  %v1057 = vpop.permute.xlu0 %1056
  %1058 = vrot.lane.b32.xlu0 %v492, 112
  %v1059 = vpop.permute.xlu0 %1058
  %1060 = vrot.lane.b32.xlu0 %v496, 112
  %v1061 = vpop.permute.xlu0 %1060
  %1062 = vrot.lane.b32.xlu0 %v500, 112
  %v1063 = vpop.permute.xlu0 %1062
  %1064 = vrot.lane.b32.xlu0 %v504, 112
  %v1065 = vpop.permute.xlu0 %1064
  %vm1066 = vcmp.lt.s32.totalorder %v538, 112
  %v1067 = vsel %vm1066, %v1051, %v1059
  %v1068 = vsel %vm1066, %v1053, %v1061
  %v1069 = vsel %vm1066, %v1055, %v1063
  %v1070 = vsel %vm1066, %v1057, %v1065
  %v1071 = vsel %vm1066, %v1043, %v1051
  %v1072 = vsel %vm1066, %v1045, %v1053
  %v1073 = vsel %vm1066, %v1047, %v1055
  %v1074 = vsel %vm1066, %v1049, %v1057
  %v1075 = vsel %vm1066, %v1035, %v1043
  %v1076 = vsel %vm1066, %v1037, %v1045
  %v1077 = vsel %vm1066, %v1039, %v1047
  %v1078 = vsel %vm1066, %v1041, %v1049
  %v1079 = vsel %vm1066, %v1059, %v1035
  %v1080 = vsel %vm1066, %v1061, %v1037
  %v1081 = vsel %vm1066, %v1063, %v1039
  %v1082 = vsel %vm1066, %v1065, %v1041
  %s1083 = scalar_lea.vmem %s1, 7
  %v1084 = vld [vmem:[%s1083] ss:$8 sm:$0xf]
  %v1086 = vlaneseq
  %v1087 = vshrl.u32 %v1086, 7
  %v1088 = vsub.s32 0, %v1087
  %v1089 = vrot.slane %v1084, %v1088
  %v1090 = vlaneseq
  %v1091 = vshrl.u32 %v1090, 7
  %v1092 = vsub.s32 1, %v1091
  %v1093 = vrot.slane %v1084, %v1092
  %v1094 = vlaneseq
  %v1095 = vshrl.u32 %v1094, 7
  %v1096 = vsub.s32 2, %v1095
  %v1097 = vrot.slane %v1084, %v1096
  %v1098 = vlaneseq
  %v1099 = vshrl.u32 %v1098, 7
  %v1100 = vsub.s32 3, %v1099
  %v1101 = vrot.slane %v1084, %v1100
  %v1106 = vmul.f32 %v1075, %v1089
  %v1107 = vmul.f32 %v1071, %v1093
  %v1108 = vmul.f32 %v1067, %v1097
  %v1109 = vmul.f32 %v1079, %v1101
  %v1110 = vmul.f32 %v1076, %v1089
  %v1111 = vmul.f32 %v1072, %v1093
  %v1112 = vmul.f32 %v1068, %v1097
  %v1113 = vmul.f32 %v1080, %v1101
  %v1114 = vmul.f32 %v1077, %v1089
  %v1115 = vmul.f32 %v1073, %v1093
  %v1116 = vmul.f32 %v1069, %v1097
  %v1117 = vmul.f32 %v1081, %v1101
  %v1118 = vmul.f32 %v1078, %v1089
  %v1119 = vmul.f32 %v1074, %v1093
  %v1120 = vmul.f32 %v1070, %v1097
  %v1121 = vmul.f32 %v1082, %v1101
  %1122 = vrot.lane.b32.xlu0 %v489, 111
  %v1123 = vpop.permute.xlu0 %1122
  %1124 = vrot.lane.b32.xlu0 %v493, 111
  %v1125 = vpop.permute.xlu0 %1124
  %1126 = vrot.lane.b32.xlu0 %v497, 111
  %v1127 = vpop.permute.xlu0 %1126
  %1128 = vrot.lane.b32.xlu0 %v501, 111
  %v1129 = vpop.permute.xlu0 %1128
  %1130 = vrot.lane.b32.xlu0 %v490, 111
  %v1131 = vpop.permute.xlu0 %1130
  %1132 = vrot.lane.b32.xlu0 %v494, 111
  %v1133 = vpop.permute.xlu0 %1132
  %1134 = vrot.lane.b32.xlu0 %v498, 111
  %v1135 = vpop.permute.xlu0 %1134
  %1136 = vrot.lane.b32.xlu0 %v502, 111
  %v1137 = vpop.permute.xlu0 %1136
  %1138 = vrot.lane.b32.xlu0 %v491, 111
  %v1139 = vpop.permute.xlu0 %1138
  %1140 = vrot.lane.b32.xlu0 %v495, 111
  %v1141 = vpop.permute.xlu0 %1140
  %1142 = vrot.lane.b32.xlu0 %v499, 111
  %v1143 = vpop.permute.xlu0 %1142
  %1144 = vrot.lane.b32.xlu0 %v503, 111
  %v1145 = vpop.permute.xlu0 %1144
  %1146 = vrot.lane.b32.xlu0 %v492, 111
  %v1147 = vpop.permute.xlu0 %1146
  %1148 = vrot.lane.b32.xlu0 %v496, 111
  %v1149 = vpop.permute.xlu0 %1148
  %1150 = vrot.lane.b32.xlu0 %v500, 111
  %v1151 = vpop.permute.xlu0 %1150
  %1152 = vrot.lane.b32.xlu0 %v504, 111
  %v1153 = vpop.permute.xlu0 %1152
  %vm1154 = vcmp.lt.s32.totalorder %v538, 111
  %v1155 = vsel %vm1154, %v1139, %v1147
  %v1156 = vsel %vm1154, %v1141, %v1149
  %v1157 = vsel %vm1154, %v1143, %v1151
  %v1158 = vsel %vm1154, %v1145, %v1153
  %v1159 = vsel %vm1154, %v1131, %v1139
  %v1160 = vsel %vm1154, %v1133, %v1141
  %v1161 = vsel %vm1154, %v1135, %v1143
  %v1162 = vsel %vm1154, %v1137, %v1145
  %v1163 = vsel %vm1154, %v1123, %v1131
  %v1164 = vsel %vm1154, %v1125, %v1133
  %v1165 = vsel %vm1154, %v1127, %v1135
  %v1166 = vsel %vm1154, %v1129, %v1137
  %v1167 = vsel %vm1154, %v1147, %v1123
  %v1168 = vsel %vm1154, %v1149, %v1125
  %v1169 = vsel %vm1154, %v1151, %v1127
  %v1170 = vsel %vm1154, %v1153, %v1129
  %s1171 = scalar_lea.vmem %s1, 32
  %v1172 = vld [vmem:[%s1171] ss:$8 sm:$0xf]
  %v1174 = vlaneseq
  %v1175 = vshrl.u32 %v1174, 7
  %v1176 = vsub.s32 0, %v1175
  %v1177 = vrot.slane %v1172, %v1176
  %v1178 = vlaneseq
  %v1179 = vshrl.u32 %v1178, 7
  %v1180 = vsub.s32 1, %v1179
  %v1181 = vrot.slane %v1172, %v1180
  %v1182 = vlaneseq
  %v1183 = vshrl.u32 %v1182, 7
  %v1184 = vsub.s32 2, %v1183
  %v1185 = vrot.slane %v1172, %v1184
  %v1186 = vlaneseq
  %v1187 = vshrl.u32 %v1186, 7
  %v1188 = vsub.s32 3, %v1187
  %v1189 = vrot.slane %v1172, %v1188
  %v1194 = vmul.f32 %v1163, %v1177
  %v1195 = vmul.f32 %v1159, %v1181
  %v1196 = vmul.f32 %v1155, %v1185
  %v1197 = vmul.f32 %v1167, %v1189
  %v1198 = vmul.f32 %v1164, %v1177
  %v1199 = vmul.f32 %v1160, %v1181
  %v1200 = vmul.f32 %v1156, %v1185
  %v1201 = vmul.f32 %v1168, %v1189
  %v1202 = vmul.f32 %v1165, %v1177
  %v1203 = vmul.f32 %v1161, %v1181
  %v1204 = vmul.f32 %v1157, %v1185
  %v1205 = vmul.f32 %v1169, %v1189
  %v1206 = vmul.f32 %v1166, %v1177
  %v1207 = vmul.f32 %v1162, %v1181
  %v1208 = vmul.f32 %v1158, %v1185
  %v1209 = vmul.f32 %v1170, %v1189
  %v1210 = vld [vmem:[%s5] sm:$0xff]
  %v1211 = vld [vmem:[%s5 + $0x8] sm:$0xff]
  %v1212 = vld [vmem:[%s5 + $0x10] sm:$0xff]
  %v1213 = vld [vmem:[%s4] sm:$0xff]
  %1215 = vset.pattern.permute.xlu0 2
  %1216 = vperm.xlu0 %1215, %v1213
  %v1217 = vpop.permute.xlu0 %1216
  %vm1219 = vcmask 261120
  %v1221 = vsel %vm1219, %v1212, 0
  %1223 = vmatprep.subr.mxu0 %v579
  %1224 = vmatpush1.msra.mxu0 %v578
  %1225 = vmatprep.subr.mxu0 %v583
  %1226 = vmatpush1.msra.mxu0 %v582
  %1227 = vmatprep.subr.mxu0 %v587
  %1228 = vmatpush1.msra.mxu0 %v586
  %1229 = vmatprep.subr.mxu0 %v591
  %1230 = vmatpush1.msra.mxu0 %v590
  %1231 = vmatprep.subr.mxu0 %v667
  %1232 = vmatpush1.msra.mxu0 %v666
  %1233 = vmatprep.subr.mxu0 %v671
  %1234 = vmatpush1.msra.mxu0 %v670
  %1235 = vmatprep.subr.mxu0 %v675
  %1236 = vmatpush1.msra.mxu0 %v674
  %1237 = vmatprep.subr.mxu0 %v679
  %1238 = vmatpush1.msra.mxu0 %v678
  %1239 = vmatprep.subr.mxu0 %v755
  %1240 = vmatpush1.msra.mxu0 %v754
  %1241 = vmatprep.subr.mxu0 %v759
  %1242 = vmatpush1.msra.mxu0 %v758
  %1243 = vmatprep.subr.mxu0 %v763
  %1244 = vmatpush1.msra.mxu0 %v762
  %1245 = vmatprep.subr.mxu0 %v767
  %1246 = vmatpush1.msra.mxu0 %v766
  %1247 = vmatprep.subr.mxu0 %v843
  %1248 = vmatpush1.msra.mxu0 %v842
  %1249 = vmatprep.subr.mxu0 %v847
  %1250 = vmatpush1.msra.mxu0 %v846
  %1251 = vmatprep.subr.mxu0 %v851
  %1252 = vmatpush1.msra.mxu0 %v850
  %1253 = vmatprep.subr.mxu0 %v855
  %1254 = vmatpush1.msra.mxu0 %v854
  %1255 = vmatprep.subr.mxu0 %v490
  %1256 = vmatpush1.msra.mxu0 %v489
  %1257 = vmatprep.subr.mxu0 %v494
  %1258 = vmatpush1.msra.mxu0 %v493
  %1259 = vmatprep.subr.mxu0 %v498
  %1260 = vmatpush1.msra.mxu0 %v497
  %1261 = vmatprep.subr.mxu0 %v502
  %1262 = vmatpush1.msra.mxu0 %v501
  %1263 = vmatprep.subr.mxu0 %v931
  %1264 = vmatpush1.msra.mxu0 %v930
  %1265 = vmatprep.subr.mxu0 %v935
  %1266 = vmatpush1.msra.mxu0 %v934
  %1267 = vmatprep.subr.mxu0 %v939
  %1268 = vmatpush1.msra.mxu0 %v938
  %1269 = vmatprep.subr.mxu0 %v943
  %1270 = vmatpush1.msra.mxu0 %v942
  %1271 = vmatprep.subr.mxu0 %v1019
  %1272 = vmatpush1.msra.mxu0 %v1018
  %1273 = vmatprep.subr.mxu0 %v1023
  %1274 = vmatpush1.msra.mxu0 %v1022
  %1275 = vmatprep.subr.mxu0 %v1027
  %1276 = vmatpush1.msra.mxu0 %v1026
  %1277 = vmatprep.subr.mxu0 %v1031
  %1278 = vmatpush1.msra.mxu0 %v1030
  %1279 = vmatprep.subr.mxu0 %v1107
  %1280 = vmatpush1.msra.mxu0 %v1106
  %1281 = vmatprep.subr.mxu0 %v1111
  %1282 = vmatpush1.msra.mxu0 %v1110
  %1283 = vmatprep.subr.mxu0 %v1115
  %1284 = vmatpush1.msra.mxu0 %v1114
  %1285 = vmatprep.subr.mxu0 %v1119
  %1286 = vmatpush1.msra.mxu0 %v1118
  %1287 = vmatprep.mubr.f32.mxu0 %v1211
  %1288 = vmatmul.mubr.f32.gmra.mrb[0].mxu0 %v1210
  %v1289 = vpop.f32.mrb[0].mxu0
  %v1290 = vadd.f32 %v1217, %v1289
  %v1291 = vpop.f32.mrb[0].mxu0
  %v1292 = vadd.f32 %v1217, %v1291
  %1293 = vdwg.mxu0
  %1294 = vmatprep.subr.mxu0 %v1195
  %1295 = vmatpush1.msra.mxu0 %v1194
  %1296 = vmatprep.subr.mxu0 %v1199
  %1297 = vmatpush1.msra.mxu0 %v1198
  %1298 = vmatprep.subr.mxu0 %v1203
  %1299 = vmatpush1.msra.mxu0 %v1202
  %1300 = vmatprep.subr.mxu0 %v1207
  %1301 = vmatpush1.msra.mxu0 %v1206
  %1302 = vmatprep.subr.mxu0 0.0
  %1303 = vmatpush1.msra.mxu0 0.0
  %1304 = vmatprep.subr.mxu0 0.0
  %1305 = vmatpush1.msra.mxu0 0.0
  %1306 = vmatprep.subr.mxu0 0.0
  %1307 = vmatpush1.msra.mxu0 0.0
  %1308 = vmatprep.subr.mxu0 0.0
  %1309 = vmatpush1.msra.mxu0 0.0
  %1310 = vmatprep.subr.mxu0 0.0
  %1311 = vmatpush1.msra.mxu0 0.0
  %1312 = vmatprep.subr.mxu0 0.0
  %1313 = vmatpush1.msra.mxu0 0.0
  %1314 = vmatprep.subr.mxu0 0.0
  %1315 = vmatpush1.msra.mxu0 0.0
  %1316 = vmatprep.subr.mxu0 0.0
  %1317 = vmatpush1.msra.mxu0 0.0
  %1318 = vmatprep.subr.mxu0 0.0
  %1319 = vmatpush1.msra.mxu0 0.0
  %1320 = vmatprep.subr.mxu0 0.0
  %1321 = vmatpush1.msra.mxu0 0.0
  %1322 = vmatprep.subr.mxu0 0.0
  %1323 = vmatpush1.msra.mxu0 0.0
  %1324 = vmatprep.subr.mxu0 0.0
  %1325 = vmatpush1.msra.mxu0 0.0
  %1326 = vmatprep.subr.mxu0 0.0
  %1327 = vmatpush1.msra.mxu0 0.0
  %1328 = vmatprep.subr.mxu0 0.0
  %1329 = vmatpush1.msra.mxu0 0.0
  %1330 = vmatprep.subr.mxu0 0.0
  %1331 = vmatpush1.msra.mxu0 0.0
  %1332 = vmatprep.subr.mxu0 0.0
  %1333 = vmatpush1.msra.mxu0 0.0
  %1334 = vmatprep.subr.mxu0 0.0
  %1335 = vmatpush1.msra.mxu0 0.0
  %1336 = vmatprep.subr.mxu0 0.0
  %1337 = vmatpush1.msra.mxu0 0.0
  %1338 = vmatprep.subr.mxu0 0.0
  %1339 = vmatpush1.msra.mxu0 0.0
  %1340 = vmatprep.subr.mxu0 0.0
  %1341 = vmatpush1.msra.mxu0 0.0
  %1342 = vmatprep.subr.mxu0 0.0
  %1343 = vmatpush1.msra.mxu0 0.0
  %1344 = vmatprep.subr.mxu0 0.0
  %1345 = vmatpush1.msra.mxu0 0.0
  %1346 = vmatprep.subr.mxu0 0.0
  %1347 = vmatpush1.msra.mxu0 0.0
  %1348 = vmatprep.subr.mxu0 0.0
  %1349 = vmatpush1.msra.mxu0 0.0
  %1350 = vmatprep.subr.mxu0 0.0
  %1351 = vmatpush1.msra.mxu0 0.0
  %1352 = vmatprep.subr.mxu0 0.0
  %1353 = vmatpush1.msra.mxu0 0.0
  %1354 = vmatprep.subr.mxu0 0.0
  %1355 = vmatpush1.msra.mxu0 0.0
  %1356 = vmatprep.subr.mxu0 0.0
  %1357 = vmatpush1.msra.mxu0 0.0
  %1358 = vmatprep.mubr.f32.mxu0 0.0
  %1359 = vmatmul.mubr.f32.gmra.mrb[0].mxu0 %v1221
  %v1360 = vpop.f32.mrb[0].mxu0
  %v1361 = vadd.f32 %v1290, %v1360
  %v1362 = vpop.f32.mrb[0].mxu0
  %v1363 = vadd.f32 %v1292, %v1362
  %1364 = vdwg.mxu0
  %1365 = vmatprep.subr.mxu0 %v581
  %1366 = vmatpush1.msra.mxu0 %v580
  %1367 = vmatprep.subr.mxu0 %v585
  %1368 = vmatpush1.msra.mxu0 %v584
  %1369 = vmatprep.subr.mxu0 %v589
  %1370 = vmatpush1.msra.mxu0 %v588
  %1371 = vmatprep.subr.mxu0 %v593
  %1372 = vmatpush1.msra.mxu0 %v592
  %1373 = vmatprep.subr.mxu0 %v669
  %1374 = vmatpush1.msra.mxu0 %v668
  %1375 = vmatprep.subr.mxu0 %v673
  %1376 = vmatpush1.msra.mxu0 %v672
  %1377 = vmatprep.subr.mxu0 %v677
  %1378 = vmatpush1.msra.mxu0 %v676
  %1379 = vmatprep.subr.mxu0 %v681
  %1380 = vmatpush1.msra.mxu0 %v680
  %1381 = vmatprep.subr.mxu0 %v757
  %1382 = vmatpush1.msra.mxu0 %v756
  %1383 = vmatprep.subr.mxu0 %v761
  %1384 = vmatpush1.msra.mxu0 %v760
  %1385 = vmatprep.subr.mxu0 %v765
  %1386 = vmatpush1.msra.mxu0 %v764
  %1387 = vmatprep.subr.mxu0 %v769
  %1388 = vmatpush1.msra.mxu0 %v768
  %1389 = vmatprep.subr.mxu0 %v845
  %1390 = vmatpush1.msra.mxu0 %v844
  %1391 = vmatprep.subr.mxu0 %v849
  %1392 = vmatpush1.msra.mxu0 %v848
  %1393 = vmatprep.subr.mxu0 %v853
  %1394 = vmatpush1.msra.mxu0 %v852
  %1395 = vmatprep.subr.mxu0 %v857
  %1396 = vmatpush1.msra.mxu0 %v856
  %1397 = vmatprep.subr.mxu0 %v492
  %1398 = vmatpush1.msra.mxu0 %v491
  %1399 = vmatprep.subr.mxu0 %v496
  %1400 = vmatpush1.msra.mxu0 %v495
  %1401 = vmatprep.subr.mxu0 %v500
  %1402 = vmatpush1.msra.mxu0 %v499
  %1403 = vmatprep.subr.mxu0 %v504
  %1404 = vmatpush1.msra.mxu0 %v503
  %1405 = vmatprep.subr.mxu0 %v933
  %1406 = vmatpush1.msra.mxu0 %v932
  %1407 = vmatprep.subr.mxu0 %v937
  %1408 = vmatpush1.msra.mxu0 %v936
  %1409 = vmatprep.subr.mxu0 %v941
  %1410 = vmatpush1.msra.mxu0 %v940
  %1411 = vmatprep.subr.mxu0 %v945
  %1412 = vmatpush1.msra.mxu0 %v944
  %1413 = vmatprep.subr.mxu0 %v1021
  %1414 = vmatpush1.msra.mxu0 %v1020
  %1415 = vmatprep.subr.mxu0 %v1025
  %1416 = vmatpush1.msra.mxu0 %v1024
  %1417 = vmatprep.subr.mxu0 %v1029
  %1418 = vmatpush1.msra.mxu0 %v1028
  %1419 = vmatprep.subr.mxu0 %v1033
  %1420 = vmatpush1.msra.mxu0 %v1032
  %1421 = vmatprep.subr.mxu0 %v1109
  %1422 = vmatpush1.msra.mxu0 %v1108
  %1423 = vmatprep.subr.mxu0 %v1113
  %1424 = vmatpush1.msra.mxu0 %v1112
  %1425 = vmatprep.subr.mxu0 %v1117
  %1426 = vmatpush1.msra.mxu0 %v1116
  %1427 = vmatprep.subr.mxu0 %v1121
  %1428 = vmatpush1.msra.mxu0 %v1120
  %1429 = vmatprep.mubr.f32.mxu0 %v1211
  %1430 = vmatmul.mubr.f32.gmra.mrb[0].mxu0 %v1210
  %v1431 = vpop.f32.mrb[0].mxu0
  %v1432 = vadd.f32 %v1217, %v1431
  %v1433 = vpop.f32.mrb[0].mxu0
  %v1434 = vadd.f32 %v1217, %v1433
  %1435 = vdwg.mxu0
  %1436 = vmatprep.subr.mxu0 %v1197
  %1437 = vmatpush1.msra.mxu0 %v1196
  %1438 = vmatprep.subr.mxu0 %v1201
  %1439 = vmatpush1.msra.mxu0 %v1200
  %1440 = vmatprep.subr.mxu0 %v1205
  %1441 = vmatpush1.msra.mxu0 %v1204
  %1442 = vmatprep.subr.mxu0 %v1209
  %1443 = vmatpush1.msra.mxu0 %v1208
  %1444 = vmatprep.subr.mxu0 0.0
  %1445 = vmatpush1.msra.mxu0 0.0
  %1446 = vmatprep.subr.mxu0 0.0
  %1447 = vmatpush1.msra.mxu0 0.0
  %1448 = vmatprep.subr.mxu0 0.0
  %1449 = vmatpush1.msra.mxu0 0.0
  %1450 = vmatprep.subr.mxu0 0.0
  %1451 = vmatpush1.msra.mxu0 0.0
  %1452 = vmatprep.subr.mxu0 0.0
  %1453 = vmatpush1.msra.mxu0 0.0
  %1454 = vmatprep.subr.mxu0 0.0
  %1455 = vmatpush1.msra.mxu0 0.0
  %1456 = vmatprep.subr.mxu0 0.0
  %1457 = vmatpush1.msra.mxu0 0.0
  %1458 = vmatprep.subr.mxu0 0.0
  %1459 = vmatpush1.msra.mxu0 0.0
  %1460 = vmatprep.subr.mxu0 0.0
  %1461 = vmatpush1.msra.mxu0 0.0
  %1462 = vmatprep.subr.mxu0 0.0
  %1463 = vmatpush1.msra.mxu0 0.0
  %1464 = vmatprep.subr.mxu0 0.0
  %1465 = vmatpush1.msra.mxu0 0.0
  %1466 = vmatprep.subr.mxu0 0.0
  %1467 = vmatpush1.msra.mxu0 0.0
  %1468 = vmatprep.subr.mxu0 0.0
  %1469 = vmatpush1.msra.mxu0 0.0
  %1470 = vmatprep.subr.mxu0 0.0
  %1471 = vmatpush1.msra.mxu0 0.0
  %1472 = vmatprep.subr.mxu0 0.0
  %1473 = vmatpush1.msra.mxu0 0.0
  %1474 = vmatprep.subr.mxu0 0.0
  %1475 = vmatpush1.msra.mxu0 0.0
  %1476 = vmatprep.subr.mxu0 0.0
  %1477 = vmatpush1.msra.mxu0 0.0
  %1478 = vmatprep.subr.mxu0 0.0
  %1479 = vmatpush1.msra.mxu0 0.0
  %1480 = vmatprep.subr.mxu0 0.0
  %1481 = vmatpush1.msra.mxu0 0.0
  %1482 = vmatprep.subr.mxu0 0.0
  %1483 = vmatpush1.msra.mxu0 0.0
  %1484 = vmatprep.subr.mxu0 0.0
  %1485 = vmatpush1.msra.mxu0 0.0
  %1486 = vmatprep.subr.mxu0 0.0
  %1487 = vmatpush1.msra.mxu0 0.0
  %1488 = vmatprep.subr.mxu0 0.0
  %1489 = vmatpush1.msra.mxu0 0.0
  %1490 = vmatprep.subr.mxu0 0.0
  %1491 = vmatpush1.msra.mxu0 0.0
  %1492 = vmatprep.subr.mxu0 0.0
  %1493 = vmatpush1.msra.mxu0 0.0
  %1494 = vmatprep.subr.mxu0 0.0
  %1495 = vmatpush1.msra.mxu0 0.0
  %1496 = vmatprep.subr.mxu0 0.0
  %1497 = vmatpush1.msra.mxu0 0.0
  %1498 = vmatprep.subr.mxu0 0.0
  %1499 = vmatpush1.msra.mxu0 0.0
  %1500 = vmatprep.mubr.f32.mxu0 0.0
  %1501 = vmatmul.mubr.f32.gmra.mrb[0].mxu0 %v1221
  %v1502 = vpop.f32.mrb[0].mxu0
  %v1503 = vadd.f32 %v1432, %v1502
  %v1504 = vpop.f32.mrb[0].mxu0
  %v1505 = vadd.f32 %v1434, %v1504
  %1506 = vdwg.mxu0
  %1507 = vst [vmem:[%s14 + $0x20] sm:$0xff] %v1361
  %1508 = vst [vmem:[%s14 + $0x28] sm:$0xff] %v1363
  %1509 = vst [vmem:[%s14 + $0x30] sm:$0xff] %v1503
  %1510 = vst [vmem:[%s14 + $0x38] sm:$0xff] %v1505
  %v1511 = vld [vmem:[%s14] sm:$0xff]
  %v1512 = vld [vmem:[%s14 + $0x8] sm:$0xff]
  %v1513 = vld [vmem:[%s14 + $0x10] sm:$0xff]
  %v1514 = vld [vmem:[%s14 + $0x18] sm:$0xff]
  %v1515 = vld [vmem:[%s14 + $0x20] sm:$0xff]
  %v1516 = vld [vmem:[%s14 + $0x28] sm:$0xff]
  %v1517 = vld [vmem:[%s14 + $0x30] sm:$0xff]
  %v1518 = vld [vmem:[%s14 + $0x38] sm:$0xff]
  %v1519 = vadd.f32 %v1511, %v1512
  %v1520 = vadd.f32 %v1519, %v1513
  %v1521 = vadd.f32 %v1520, %v1514
  %1522 = vadd.xlane.f32.xlu0 %v1521
  %v1523 = vpop.xlane.xlu0 %1522
  %v1524 = vadd.f32 %v1515, %v1516
  %v1525 = vadd.f32 %v1524, %v1517
  %v1526 = vadd.f32 %v1525, %v1518
  %1527 = vadd.xlane.f32.xlu0 %v1526
  %v1528 = vpop.xlane.xlu0 %1527
  %v1529 = vmul.f32 %v1523, %v64
  %v1530 = vmul.f32 %v1528, %v64
  %v1531 = vmul.f32 %v1511, %v1511
  %v1532 = vmul.f32 %v1512, %v1512
  %v1533 = vmul.f32 %v1513, %v1513
  %v1534 = vmul.f32 %v1514, %v1514
  %v1535 = vmul.f32 %v1515, %v1515
  %v1536 = vmul.f32 %v1516, %v1516
  %v1537 = vmul.f32 %v1517, %v1517
  %v1538 = vmul.f32 %v1518, %v1518
  %v1539 = vadd.f32 %v1531, %v1532
  %v1540 = vadd.f32 %v1539, %v1533
  %v1541 = vadd.f32 %v1540, %v1534
  %1542 = vadd.xlane.f32.xlu0 %v1541
  %v1543 = vpop.xlane.xlu0 %1542
  %v1544 = vadd.f32 %v1535, %v1536
  %v1545 = vadd.f32 %v1544, %v1537
  %v1546 = vadd.f32 %v1545, %v1538
  %1547 = vadd.xlane.f32.xlu0 %v1546
  %v1548 = vpop.xlane.xlu0 %1547
  %v1549 = vmul.f32 %v1543, %v64
  %v1550 = vmul.f32 %v1548, %v64
  %v1551 = vmul.f32 %v1529, %v1529
  %v1552 = vmul.f32 %v1530, %v1530
  %v1553 = vsub.f32 %v1549, %v1551
  %v1554 = vsub.f32 %v1550, %v1552
  %v1555 = vld [vmem:[%s6] sm:$0xff]
  %v1556 = vld [vmem:[%s6 + $0x8] sm:$0xff]
  %v1557 = vadd.f32 %v1553, 1e-05
  %v1558 = vadd.f32 %v1554, 1e-05
  %v1559 = vrsqrt.pop %v1557
  %v1560 = vrsqrt.pop %v1558
  %v1561 = vmul.f32 %v1555, %v1559
  %v1562 = vmul.f32 %v1556, %v1560
  %v1563 = vmul.f32 %v1529, %v1561
  %v1564 = vmul.f32 %v1530, %v1562
  %1567 = vrot.lane.b32.xlu0 %v1563, 1
  %v1568 = vpop.permute.xlu0 %1567
  %1569 = vrot.lane.b32.xlu0 %v1564, 1
  %v1570 = vpop.permute.xlu0 %1569
  %v1573 = vsub.f32 %v1555, %v1568
  %v1574 = vsub.f32 %v1556, %v1570
  %1576 = vset.pattern.permute.xlu0 0
  %1577 = vperm.xlu0 %1576, %v1561
  %v1578 = vpop.permute.xlu0 %1577
  %1581 = vset.pattern.permute.xlu0 0
  %1582 = vperm.xlu0 %1581, %v1562
  %v1583 = vpop.permute.xlu0 %1582
  %v1585 = vmul.f32 %v1511, %v1578
  %v1586 = vmul.f32 %v1512, %v1578
  %v1587 = vmul.f32 %v1513, %v1578
  %v1588 = vmul.f32 %v1514, %v1578
  %v1589 = vmul.f32 %v1515, %v1583
  %v1590 = vmul.f32 %v1516, %v1583
  %v1591 = vmul.f32 %v1517, %v1583
  %v1592 = vmul.f32 %v1518, %v1583
  %1594 = vset.pattern.permute.xlu0 1
  %1595 = vperm.xlu0 %1594, %v1573
  %v1596 = vpop.permute.xlu0 %1595
  %1599 = vset.pattern.permute.xlu0 1
  %1600 = vperm.xlu0 %1599, %v1574
  %v1601 = vpop.permute.xlu0 %1600
  %v1603 = vadd.f32 %v1585, %v1596
  %v1604 = vadd.f32 %v1586, %v1596
  %v1605 = vadd.f32 %v1587, %v1596
  %v1606 = vadd.f32 %v1588, %v1596
  %v1607 = vadd.f32 %v1589, %v1601
  %v1608 = vadd.f32 %v1590, %v1601
  %v1609 = vadd.f32 %v1591, %v1601
  %v1610 = vadd.f32 %v1592, %v1601
  %v1611 = vmax.f32 %v1603, 0.0
  %v1612 = vmax.f32 %v1604, 0.0
  %v1613 = vmax.f32 %v1605, 0.0
  %v1614 = vmax.f32 %v1606, 0.0
  %v1615 = vmax.f32 %v1607, 0.0
  %v1616 = vmax.f32 %v1608, 0.0
  %v1617 = vmax.f32 %v1609, 0.0
  %v1618 = vmax.f32 %v1610, 0.0
  %v1619 = vld [vmem:[%s7] sm:$0xff]
  %v1620 = vld [vmem:[%s7 + $0x8] sm:$0xff]
  %v1621 = vld [vmem:[%s7 + $0x10] sm:$0xff]
  %v1622 = vld [vmem:[%s7 + $0x18] sm:$0xff]
  %vm1623 = vcmask 130048
  %v1625 = vsel %vm1623, %v1619, 0
  %v1628 = vsel %vm1623, %v1620, 0
  %v1631 = vsel %vm1623, %v1621, 0
  %v1634 = vsel %vm1623, %v1622, 0
  %1636 = vmatprep.subr.mxu0 %v1612
  %1637 = vmatpush1.msra.mxu0 %v1611
  %1638 = vmatprep.subr.mxu0 %v1616
  %1639 = vmatpush1.msra.mxu0 %v1615
  %1640 = vmatprep.subr.mxu0 0.0
  %1641 = vmatpush1.msra.mxu0 0.0
  %1642 = vmatprep.subr.mxu0 0.0
  %1643 = vmatpush1.msra.mxu0 0.0
  %1644 = vmatprep.subr.mxu0 0.0
  %1645 = vmatpush1.msra.mxu0 0.0
  %1646 = vmatprep.subr.mxu0 0.0
  %1647 = vmatpush1.msra.mxu0 0.0
  %1648 = vmatprep.subr.mxu0 0.0
  %1649 = vmatpush1.msra.mxu0 0.0
  %1650 = vmatprep.subr.mxu0 0.0
  %1651 = vmatpush1.msra.mxu0 0.0
  %1652 = vmatprep.subr.mxu0 0.0
  %1653 = vmatpush1.msra.mxu0 0.0
  %1654 = vmatprep.subr.mxu0 0.0
  %1655 = vmatpush1.msra.mxu0 0.0
  %1656 = vmatprep.subr.mxu0 0.0
  %1657 = vmatpush1.msra.mxu0 0.0
  %1658 = vmatprep.subr.mxu0 0.0
  %1659 = vmatpush1.msra.mxu0 0.0
  %1660 = vmatprep.subr.mxu0 0.0
  %1661 = vmatpush1.msra.mxu0 0.0
  %1662 = vmatprep.subr.mxu0 0.0
  %1663 = vmatpush1.msra.mxu0 0.0
  %1664 = vmatprep.subr.mxu0 0.0
  %1665 = vmatpush1.msra.mxu0 0.0
  %1666 = vmatprep.subr.mxu0 0.0
  %1667 = vmatpush1.msra.mxu0 0.0
  %1668 = vmatprep.subr.mxu0 0.0
  %1669 = vmatpush1.msra.mxu0 0.0
  %1670 = vmatprep.subr.mxu0 0.0
  %1671 = vmatpush1.msra.mxu0 0.0
  %1672 = vmatprep.subr.mxu0 0.0
  %1673 = vmatpush1.msra.mxu0 0.0
  %1674 = vmatprep.subr.mxu0 0.0
  %1675 = vmatpush1.msra.mxu0 0.0
  %1676 = vmatprep.subr.mxu0 0.0
  %1677 = vmatpush1.msra.mxu0 0.0
  %1678 = vmatprep.subr.mxu0 0.0
  %1679 = vmatpush1.msra.mxu0 0.0
  %1680 = vmatprep.subr.mxu0 0.0
  %1681 = vmatpush1.msra.mxu0 0.0
  %1682 = vmatprep.subr.mxu0 0.0
  %1683 = vmatpush1.msra.mxu0 0.0
  %1684 = vmatprep.subr.mxu0 0.0
  %1685 = vmatpush1.msra.mxu0 0.0
  %1686 = vmatprep.subr.mxu0 0.0
  %1687 = vmatpush1.msra.mxu0 0.0
  %1688 = vmatprep.subr.mxu0 0.0
  %1689 = vmatpush1.msra.mxu0 0.0
  %1690 = vmatprep.subr.mxu0 0.0
  %1691 = vmatpush1.msra.mxu0 0.0
  %1692 = vmatprep.subr.mxu0 0.0
  %1693 = vmatpush1.msra.mxu0 0.0
  %1694 = vmatprep.subr.mxu0 0.0
  %1695 = vmatpush1.msra.mxu0 0.0
  %1696 = vmatprep.subr.mxu0 0.0
  %1697 = vmatpush1.msra.mxu0 0.0
  %1698 = vmatprep.subr.mxu0 0.0
  %1699 = vmatpush1.msra.mxu0 0.0
  %1700 = vmatprep.mubr.f32.mxu0 0.0
  %1701 = vmatmul.mubr.f32.gmra.mrb[0].mxu0 %v1625
  %v1702 = vpop.f32.mrb[0].mxu0
  %v1703 = vadd.f32 0.0, %v1702
  %v1704 = vpop.f32.mrb[0].mxu0
  %v1705 = vadd.f32 0.0, %v1704
  %1706 = vmatprep.mubr.f32.mxu0 0.0
  %1707 = vmatmul.mubr.f32.gmra.mrb[0].mxu0 %v1628
  %v1708 = vpop.f32.mrb[0].mxu0
  %v1709 = vadd.f32 0.0, %v1708
  %v1710 = vpop.f32.mrb[0].mxu0
  %v1711 = vadd.f32 0.0, %v1710
  %1712 = vmatprep.mubr.f32.mxu0 0.0
  %1713 = vmatmul.mubr.f32.gmra.mrb[0].mxu0 %v1631
  %v1714 = vpop.f32.mrb[0].mxu0
  %v1715 = vadd.f32 0.0, %v1714
  %v1716 = vpop.f32.mrb[0].mxu0
  %v1717 = vadd.f32 0.0, %v1716
  %1718 = vmatprep.mubr.f32.mxu0 0.0
  %1719 = vmatmul.mubr.f32.gmra.mrb[0].mxu0 %v1634
  %v1720 = vpop.f32.mrb[0].mxu0
  %v1721 = vadd.f32 0.0, %v1720
  %v1722 = vpop.f32.mrb[0].mxu0
  %v1723 = vadd.f32 0.0, %v1722
  %1724 = vdwg.mxu0
  %1725 = vmatprep.subr.mxu0 %v1614
  %1726 = vmatpush1.msra.mxu0 %v1613
  %1727 = vmatprep.subr.mxu0 %v1618
  %1728 = vmatpush1.msra.mxu0 %v1617
  %1729 = vmatprep.subr.mxu0 0.0
  %1730 = vmatpush1.msra.mxu0 0.0
  %1731 = vmatprep.subr.mxu0 0.0
  %1732 = vmatpush1.msra.mxu0 0.0
  %1733 = vmatprep.subr.mxu0 0.0
  %1734 = vmatpush1.msra.mxu0 0.0
  %1735 = vmatprep.subr.mxu0 0.0
  %1736 = vmatpush1.msra.mxu0 0.0
  %1737 = vmatprep.subr.mxu0 0.0
  %1738 = vmatpush1.msra.mxu0 0.0
  %1739 = vmatprep.subr.mxu0 0.0
  %1740 = vmatpush1.msra.mxu0 0.0
  %1741 = vmatprep.subr.mxu0 0.0
  %1742 = vmatpush1.msra.mxu0 0.0
  %1743 = vmatprep.subr.mxu0 0.0
  %1744 = vmatpush1.msra.mxu0 0.0
  %1745 = vmatprep.subr.mxu0 0.0
  %1746 = vmatpush1.msra.mxu0 0.0
  %1747 = vmatprep.subr.mxu0 0.0
  %1748 = vmatpush1.msra.mxu0 0.0
  %1749 = vmatprep.subr.mxu0 0.0
  %1750 = vmatpush1.msra.mxu0 0.0
  %1751 = vmatprep.subr.mxu0 0.0
  %1752 = vmatpush1.msra.mxu0 0.0
  %1753 = vmatprep.subr.mxu0 0.0
  %1754 = vmatpush1.msra.mxu0 0.0
  %1755 = vmatprep.subr.mxu0 0.0
  %1756 = vmatpush1.msra.mxu0 0.0
  %1757 = vmatprep.subr.mxu0 0.0
  %1758 = vmatpush1.msra.mxu0 0.0
  %1759 = vmatprep.subr.mxu0 0.0
  %1760 = vmatpush1.msra.mxu0 0.0
  %1761 = vmatprep.subr.mxu0 0.0
  %1762 = vmatpush1.msra.mxu0 0.0
  %1763 = vmatprep.subr.mxu0 0.0
  %1764 = vmatpush1.msra.mxu0 0.0
  %1765 = vmatprep.subr.mxu0 0.0
  %1766 = vmatpush1.msra.mxu0 0.0
  %1767 = vmatprep.subr.mxu0 0.0
  %1768 = vmatpush1.msra.mxu0 0.0
  %1769 = vmatprep.subr.mxu0 0.0
  %1770 = vmatpush1.msra.mxu0 0.0
  %1771 = vmatprep.subr.mxu0 0.0
  %1772 = vmatpush1.msra.mxu0 0.0
  %1773 = vmatprep.subr.mxu0 0.0
  %1774 = vmatpush1.msra.mxu0 0.0
  %1775 = vmatprep.subr.mxu0 0.0
  %1776 = vmatpush1.msra.mxu0 0.0
  %1777 = vmatprep.subr.mxu0 0.0
  %1778 = vmatpush1.msra.mxu0 0.0
  %1779 = vmatprep.subr.mxu0 0.0
  %1780 = vmatpush1.msra.mxu0 0.0
  %1781 = vmatprep.subr.mxu0 0.0
  %1782 = vmatpush1.msra.mxu0 0.0
  %1783 = vmatprep.subr.mxu0 0.0
  %1784 = vmatpush1.msra.mxu0 0.0
  %1785 = vmatprep.subr.mxu0 0.0
  %1786 = vmatpush1.msra.mxu0 0.0
  %1787 = vmatprep.subr.mxu0 0.0
  %1788 = vmatpush1.msra.mxu0 0.0
  %1789 = vmatprep.mubr.f32.mxu0 0.0
  %1790 = vmatmul.mubr.f32.gmra.mrb[0].mxu0 %v1625
  %v1791 = vpop.f32.mrb[0].mxu0
  %v1792 = vadd.f32 0.0, %v1791
  %v1793 = vpop.f32.mrb[0].mxu0
  %v1794 = vadd.f32 0.0, %v1793
  %1795 = vmatprep.mubr.f32.mxu0 0.0
  %1796 = vmatmul.mubr.f32.gmra.mrb[0].mxu0 %v1628
  %v1797 = vpop.f32.mrb[0].mxu0
  %v1798 = vadd.f32 0.0, %v1797
  %v1799 = vpop.f32.mrb[0].mxu0
  %v1800 = vadd.f32 0.0, %v1799
  %1801 = vmatprep.mubr.f32.mxu0 0.0
  %1802 = vmatmul.mubr.f32.gmra.mrb[0].mxu0 %v1631
  %v1803 = vpop.f32.mrb[0].mxu0
  %v1804 = vadd.f32 0.0, %v1803
  %v1805 = vpop.f32.mrb[0].mxu0
  %v1806 = vadd.f32 0.0, %v1805
  %1807 = vmatprep.mubr.f32.mxu0 0.0
  %1808 = vmatmul.mubr.f32.gmra.mrb[0].mxu0 %v1634
  %v1809 = vpop.f32.mrb[0].mxu0
  %v1810 = vadd.f32 0.0, %v1809
  %v1811 = vpop.f32.mrb[0].mxu0
  %v1812 = vadd.f32 0.0, %v1811
  %1813 = vdwg.mxu0
  %v1814 = vadd.f32 %v1703, %v1705
  %v1815 = vadd.f32 %v1814, %v1792
  %v1816 = vadd.f32 %v1815, %v1794
  %1817 = vadd.xlane.f32.xlu0 %v1816
  %v1818 = vpop.xlane.xlu0 %1817
  %v1819 = vadd.f32 %v1709, %v1711
  %v1820 = vadd.f32 %v1819, %v1798
  %v1821 = vadd.f32 %v1820, %v1800
  %1822 = vadd.xlane.f32.xlu0 %v1821
  %v1823 = vpop.xlane.xlu0 %1822
  %v1824 = vadd.f32 %v1715, %v1717
  %v1825 = vadd.f32 %v1824, %v1804
  %v1826 = vadd.f32 %v1825, %v1806
  %1827 = vadd.xlane.f32.xlu0 %v1826
  %v1828 = vpop.xlane.xlu0 %1827
  %v1829 = vadd.f32 %v1721, %v1723
  %v1830 = vadd.f32 %v1829, %v1810
  %v1831 = vadd.f32 %v1830, %v1812
  %1832 = vadd.xlane.f32.xlu0 %v1831
  %v1833 = vpop.xlane.xlu0 %1832
  %v1834 = vmul.f32 %v1818, %v64
  %v1835 = vmul.f32 %v1823, %v64
  %v1836 = vmul.f32 %v1828, %v64
  %v1837 = vmul.f32 %v1833, %v64
  %v1838 = vmul.f32 %v1703, %v1703
  %v1839 = vmul.f32 %v1705, %v1705
  %v1840 = vmul.f32 %v1792, %v1792
  %v1841 = vmul.f32 %v1794, %v1794
  %v1842 = vmul.f32 %v1709, %v1709
  %v1843 = vmul.f32 %v1711, %v1711
  %v1844 = vmul.f32 %v1798, %v1798
  %v1845 = vmul.f32 %v1800, %v1800
  %v1846 = vmul.f32 %v1715, %v1715
  %v1847 = vmul.f32 %v1717, %v1717
  %v1848 = vmul.f32 %v1804, %v1804
  %v1849 = vmul.f32 %v1806, %v1806
  %v1850 = vmul.f32 %v1721, %v1721
  %v1851 = vmul.f32 %v1723, %v1723
  %v1852 = vmul.f32 %v1810, %v1810
  %v1853 = vmul.f32 %v1812, %v1812
  %v1854 = vadd.f32 %v1838, %v1839
  %v1855 = vadd.f32 %v1854, %v1840
  %v1856 = vadd.f32 %v1855, %v1841
  %1857 = vadd.xlane.f32.xlu0 %v1856
  %v1858 = vpop.xlane.xlu0 %1857
  %v1859 = vadd.f32 %v1842, %v1843
  %v1860 = vadd.f32 %v1859, %v1844
  %v1861 = vadd.f32 %v1860, %v1845
  %1862 = vadd.xlane.f32.xlu0 %v1861
  %v1863 = vpop.xlane.xlu0 %1862
  %v1864 = vadd.f32 %v1846, %v1847
  %v1865 = vadd.f32 %v1864, %v1848
  %v1866 = vadd.f32 %v1865, %v1849
  %1867 = vadd.xlane.f32.xlu0 %v1866
  %v1868 = vpop.xlane.xlu0 %1867
  %v1869 = vadd.f32 %v1850, %v1851
  %v1870 = vadd.f32 %v1869, %v1852
  %v1871 = vadd.f32 %v1870, %v1853
  %1872 = vadd.xlane.f32.xlu0 %v1871
  %v1873 = vpop.xlane.xlu0 %1872
  %v1874 = vmul.f32 %v1858, %v64
  %v1875 = vmul.f32 %v1863, %v64
  %v1876 = vmul.f32 %v1868, %v64
  %v1877 = vmul.f32 %v1873, %v64
  %v1878 = vmul.f32 %v1834, %v1834
  %v1879 = vmul.f32 %v1835, %v1835
  %v1880 = vmul.f32 %v1836, %v1836
  %v1881 = vmul.f32 %v1837, %v1837
  %v1882 = vsub.f32 %v1874, %v1878
  %v1883 = vsub.f32 %v1875, %v1879
  %v1884 = vsub.f32 %v1876, %v1880
  %v1885 = vsub.f32 %v1877, %v1881
  %v1886 = vld [vmem:[%s8] sm:$0xff]
  %v1887 = vld [vmem:[%s8 + $0x8] sm:$0xff]
  %v1888 = vld [vmem:[%s8 + $0x10] sm:$0xff]
  %v1889 = vld [vmem:[%s8 + $0x18] sm:$0xff]
  %v1890 = vadd.f32 %v1882, 1e-05
  %v1891 = vadd.f32 %v1883, 1e-05
  %v1892 = vadd.f32 %v1884, 1e-05
  %v1893 = vadd.f32 %v1885, 1e-05
  %v1894 = vrsqrt.pop %v1890
  %v1895 = vrsqrt.pop %v1891
  %v1896 = vrsqrt.pop %v1892
  %v1897 = vrsqrt.pop %v1893
  %v1898 = vmul.f32 %v1886, %v1894
  %v1899 = vmul.f32 %v1887, %v1895
  %v1900 = vmul.f32 %v1888, %v1896
  %v1901 = vmul.f32 %v1889, %v1897
  %v1902 = vmul.f32 %v1834, %v1898
  %v1903 = vmul.f32 %v1835, %v1899
  %v1904 = vmul.f32 %v1836, %v1900
  %v1905 = vmul.f32 %v1837, %v1901
  %1910 = vrot.lane.b32.xlu0 %v1902, 1
  %v1911 = vpop.permute.xlu0 %1910
  %1912 = vrot.lane.b32.xlu0 %v1903, 1
  %v1913 = vpop.permute.xlu0 %1912
  %1914 = vrot.lane.b32.xlu0 %v1904, 1
  %v1915 = vpop.permute.xlu0 %1914
  %1916 = vrot.lane.b32.xlu0 %v1905, 1
  %v1917 = vpop.permute.xlu0 %1916
  %v1922 = vsub.f32 %v1886, %v1911
  %v1923 = vsub.f32 %v1887, %v1913
  %v1924 = vsub.f32 %v1888, %v1915
  %v1925 = vsub.f32 %v1889, %v1917
  %1927 = vset.pattern.permute.xlu0 0
  %1928 = vperm.xlu0 %1927, %v1898
  %v1929 = vpop.permute.xlu0 %1928
  %1932 = vset.pattern.permute.xlu0 0
  %1933 = vperm.xlu0 %1932, %v1899
  %v1934 = vpop.permute.xlu0 %1933
  %1937 = vset.pattern.permute.xlu0 0
  %1938 = vperm.xlu0 %1937, %v1900
  %v1939 = vpop.permute.xlu0 %1938
  %1942 = vset.pattern.permute.xlu0 0
  %1943 = vperm.xlu0 %1942, %v1901
  %v1944 = vpop.permute.xlu0 %1943
  %v1946 = vmul.f32 %v1703, %v1929
  %v1947 = vmul.f32 %v1705, %v1929
  %v1948 = vmul.f32 %v1792, %v1929
  %v1949 = vmul.f32 %v1794, %v1929
  %v1950 = vmul.f32 %v1709, %v1934
  %v1951 = vmul.f32 %v1711, %v1934
  %v1952 = vmul.f32 %v1798, %v1934
  %v1953 = vmul.f32 %v1800, %v1934
  %v1954 = vmul.f32 %v1715, %v1939
  %v1955 = vmul.f32 %v1717, %v1939
  %v1956 = vmul.f32 %v1804, %v1939
  %v1957 = vmul.f32 %v1806, %v1939
  %v1958 = vmul.f32 %v1721, %v1944
  %v1959 = vmul.f32 %v1723, %v1944
  %v1960 = vmul.f32 %v1810, %v1944
  %v1961 = vmul.f32 %v1812, %v1944
  %1963 = vset.pattern.permute.xlu0 1
  %1964 = vperm.xlu0 %1963, %v1922
  %v1965 = vpop.permute.xlu0 %1964
  %1968 = vset.pattern.permute.xlu0 1
  %1969 = vperm.xlu0 %1968, %v1923
  %v1970 = vpop.permute.xlu0 %1969
  %1973 = vset.pattern.permute.xlu0 1
  %1974 = vperm.xlu0 %1973, %v1924
  %v1975 = vpop.permute.xlu0 %1974
  %1978 = vset.pattern.permute.xlu0 1
  %1979 = vperm.xlu0 %1978, %v1925
  %v1980 = vpop.permute.xlu0 %1979
  %v1982 = vadd.f32 %v1946, %v1965
  %v1983 = vadd.f32 %v1947, %v1965
  %v1984 = vadd.f32 %v1948, %v1965
  %v1985 = vadd.f32 %v1949, %v1965
  %v1986 = vadd.f32 %v1950, %v1970
  %v1987 = vadd.f32 %v1951, %v1970
  %v1988 = vadd.f32 %v1952, %v1970
  %v1989 = vadd.f32 %v1953, %v1970
  %v1990 = vadd.f32 %v1954, %v1975
  %v1991 = vadd.f32 %v1955, %v1975
  %v1992 = vadd.f32 %v1956, %v1975
  %v1993 = vadd.f32 %v1957, %v1975
  %v1994 = vadd.f32 %v1958, %v1980
  %v1995 = vadd.f32 %v1959, %v1980
  %v1996 = vadd.f32 %v1960, %v1980
  %v1997 = vadd.f32 %v1961, %v1980
  %v1998 = vmax.f32 %v1982, 0.0
  %v1999 = vmax.f32 %v1983, 0.0
  %v2000 = vmax.f32 %v1984, 0.0
  %v2001 = vmax.f32 %v1985, 0.0
  %v2002 = vmax.f32 %v1986, 0.0
  %v2003 = vmax.f32 %v1987, 0.0
  %v2004 = vmax.f32 %v1988, 0.0
  %v2005 = vmax.f32 %v1989, 0.0
  %v2006 = vmax.f32 %v1990, 0.0
  %v2007 = vmax.f32 %v1991, 0.0
  %v2008 = vmax.f32 %v1992, 0.0
  %v2009 = vmax.f32 %v1993, 0.0
  %v2010 = vmax.f32 %v1994, 0.0
  %v2011 = vmax.f32 %v1995, 0.0
  %v2012 = vmax.f32 %v1996, 0.0
  %v2013 = vmax.f32 %v1997, 0.0
  %2014 = vrot.lane.b32.xlu0 %v1998, 17
  %v2015 = vpop.permute.xlu0 %2014
  %2016 = vrot.lane.b32.xlu0 %v2002, 17
  %v2017 = vpop.permute.xlu0 %2016
  %2018 = vrot.lane.b32.xlu0 %v2006, 17
  %v2019 = vpop.permute.xlu0 %2018
  %2020 = vrot.lane.b32.xlu0 %v2010, 17
  %v2021 = vpop.permute.xlu0 %2020
  %2022 = vrot.lane.b32.xlu0 %v1999, 17
  %v2023 = vpop.permute.xlu0 %2022
  %2024 = vrot.lane.b32.xlu0 %v2003, 17
  %v2025 = vpop.permute.xlu0 %2024
  %2026 = vrot.lane.b32.xlu0 %v2007, 17
  %v2027 = vpop.permute.xlu0 %2026
  %2028 = vrot.lane.b32.xlu0 %v2011, 17
  %v2029 = vpop.permute.xlu0 %2028
  %2030 = vrot.lane.b32.xlu0 %v2000, 17
  %v2031 = vpop.permute.xlu0 %2030
  %2032 = vrot.lane.b32.xlu0 %v2004, 17
  %v2033 = vpop.permute.xlu0 %2032
  %2034 = vrot.lane.b32.xlu0 %v2008, 17
  %v2035 = vpop.permute.xlu0 %2034
  %2036 = vrot.lane.b32.xlu0 %v2012, 17
  %v2037 = vpop.permute.xlu0 %2036
  %2038 = vrot.lane.b32.xlu0 %v2001, 17
  %v2039 = vpop.permute.xlu0 %2038
  %2040 = vrot.lane.b32.xlu0 %v2005, 17
  %v2041 = vpop.permute.xlu0 %2040
  %2042 = vrot.lane.b32.xlu0 %v2009, 17
  %v2043 = vpop.permute.xlu0 %2042
  %2044 = vrot.lane.b32.xlu0 %v2013, 17
  %v2045 = vpop.permute.xlu0 %2044
  %v2046 = vsel %vm539, %v2031, %v2039
  %v2047 = vsel %vm539, %v2033, %v2041
  %v2048 = vsel %vm539, %v2035, %v2043
  %v2049 = vsel %vm539, %v2037, %v2045
  %v2050 = vsel %vm539, %v2023, %v2031
  %v2051 = vsel %vm539, %v2025, %v2033
  %v2052 = vsel %vm539, %v2027, %v2035
  %v2053 = vsel %vm539, %v2029, %v2037
  %v2054 = vsel %vm539, %v2015, %v2023
  %v2055 = vsel %vm539, %v2017, %v2025
  %v2056 = vsel %vm539, %v2019, %v2027
  %v2057 = vsel %vm539, %v2021, %v2029
  %v2058 = vsel %vm539, %v2039, %v2015
  %v2059 = vsel %vm539, %v2041, %v2017
  %v2060 = vsel %vm539, %v2043, %v2019
  %v2061 = vsel %vm539, %v2045, %v2021
  %v2062 = vld [vmem:[%s1] ss:$8 sm:$0xf]
  %v2064 = vlaneseq
  %v2065 = vshrl.u32 %v2064, 7
  %v2066 = vsub.s32 0, %v2065
  %v2067 = vrot.slane %v2062, %v2066
  %v2068 = vlaneseq
  %v2069 = vshrl.u32 %v2068, 7
  %v2070 = vsub.s32 1, %v2069
  %v2071 = vrot.slane %v2062, %v2070
  %v2072 = vlaneseq
  %v2073 = vshrl.u32 %v2072, 7
  %v2074 = vsub.s32 2, %v2073
  %v2075 = vrot.slane %v2062, %v2074
  %v2076 = vlaneseq
  %v2077 = vshrl.u32 %v2076, 7
  %v2078 = vsub.s32 3, %v2077
  %v2079 = vrot.slane %v2062, %v2078
  %v2084 = vmul.f32 %v2058, %v2067
  %v2085 = vmul.f32 %v2054, %v2071
  %v2086 = vmul.f32 %v2050, %v2075
  %v2087 = vmul.f32 %v2046, %v2079
  %v2088 = vmul.f32 %v2059, %v2067
  %v2089 = vmul.f32 %v2055, %v2071
  %v2090 = vmul.f32 %v2051, %v2075
  %v2091 = vmul.f32 %v2047, %v2079
  %v2092 = vmul.f32 %v2060, %v2067
  %v2093 = vmul.f32 %v2056, %v2071
  %v2094 = vmul.f32 %v2052, %v2075
  %v2095 = vmul.f32 %v2048, %v2079
  %v2096 = vmul.f32 %v2061, %v2067
  %v2097 = vmul.f32 %v2057, %v2071
  %v2098 = vmul.f32 %v2053, %v2075
  %v2099 = vmul.f32 %v2049, %v2079
  %2100 = vrot.lane.b32.xlu0 %v1998, 16
  %v2101 = vpop.permute.xlu0 %2100
  %2102 = vrot.lane.b32.xlu0 %v2002, 16
  %v2103 = vpop.permute.xlu0 %2102
  %2104 = vrot.lane.b32.xlu0 %v2006, 16
  %v2105 = vpop.permute.xlu0 %2104
  %2106 = vrot.lane.b32.xlu0 %v2010, 16
  %v2107 = vpop.permute.xlu0 %2106
  %2108 = vrot.lane.b32.xlu0 %v1999, 16
  %v2109 = vpop.permute.xlu0 %2108
  %2110 = vrot.lane.b32.xlu0 %v2003, 16
  %v2111 = vpop.permute.xlu0 %2110
  %2112 = vrot.lane.b32.xlu0 %v2007, 16
  %v2113 = vpop.permute.xlu0 %2112
  %2114 = vrot.lane.b32.xlu0 %v2011, 16
  %v2115 = vpop.permute.xlu0 %2114
  %2116 = vrot.lane.b32.xlu0 %v2000, 16
  %v2117 = vpop.permute.xlu0 %2116
  %2118 = vrot.lane.b32.xlu0 %v2004, 16
  %v2119 = vpop.permute.xlu0 %2118
  %2120 = vrot.lane.b32.xlu0 %v2008, 16
  %v2121 = vpop.permute.xlu0 %2120
  %2122 = vrot.lane.b32.xlu0 %v2012, 16
  %v2123 = vpop.permute.xlu0 %2122
  %2124 = vrot.lane.b32.xlu0 %v2001, 16
  %v2125 = vpop.permute.xlu0 %2124
  %2126 = vrot.lane.b32.xlu0 %v2005, 16
  %v2127 = vpop.permute.xlu0 %2126
  %2128 = vrot.lane.b32.xlu0 %v2009, 16
  %v2129 = vpop.permute.xlu0 %2128
  %2130 = vrot.lane.b32.xlu0 %v2013, 16
  %v2131 = vpop.permute.xlu0 %2130
  %v2132 = vsel %vm626, %v2117, %v2125
  %v2133 = vsel %vm626, %v2119, %v2127
  %v2134 = vsel %vm626, %v2121, %v2129
  %v2135 = vsel %vm626, %v2123, %v2131
  %v2136 = vsel %vm626, %v2109, %v2117
  %v2137 = vsel %vm626, %v2111, %v2119
  %v2138 = vsel %vm626, %v2113, %v2121
  %v2139 = vsel %vm626, %v2115, %v2123
  %v2140 = vsel %vm626, %v2101, %v2109
  %v2141 = vsel %vm626, %v2103, %v2111
  %v2142 = vsel %vm626, %v2105, %v2113
  %v2143 = vsel %vm626, %v2107, %v2115
  %v2144 = vsel %vm626, %v2125, %v2101
  %v2145 = vsel %vm626, %v2127, %v2103
  %v2146 = vsel %vm626, %v2129, %v2105
  %v2147 = vsel %vm626, %v2131, %v2107
  %v2148 = vld [vmem:[%s643] ss:$8 sm:$0xf]
  %v2150 = vlaneseq
  %v2151 = vshrl.u32 %v2150, 7
  %v2152 = vsub.s32 0, %v2151
  %v2153 = vrot.slane %v2148, %v2152
  %v2154 = vlaneseq
  %v2155 = vshrl.u32 %v2154, 7
  %v2156 = vsub.s32 1, %v2155
  %v2157 = vrot.slane %v2148, %v2156
  %v2158 = vlaneseq
  %v2159 = vshrl.u32 %v2158, 7
  %v2160 = vsub.s32 2, %v2159
  %v2161 = vrot.slane %v2148, %v2160
  %v2162 = vlaneseq
  %v2163 = vshrl.u32 %v2162, 7
  %v2164 = vsub.s32 3, %v2163
  %v2165 = vrot.slane %v2148, %v2164
  %v2170 = vmul.f32 %v2144, %v2153
  %v2171 = vmul.f32 %v2140, %v2157
  %v2172 = vmul.f32 %v2136, %v2161
  %v2173 = vmul.f32 %v2132, %v2165
  %v2174 = vmul.f32 %v2145, %v2153
  %v2175 = vmul.f32 %v2141, %v2157
  %v2176 = vmul.f32 %v2137, %v2161
  %v2177 = vmul.f32 %v2133, %v2165
  %v2178 = vmul.f32 %v2146, %v2153
  %v2179 = vmul.f32 %v2142, %v2157
  %v2180 = vmul.f32 %v2138, %v2161
  %v2181 = vmul.f32 %v2134, %v2165
  %v2182 = vmul.f32 %v2147, %v2153
  %v2183 = vmul.f32 %v2143, %v2157
  %v2184 = vmul.f32 %v2139, %v2161
  %v2185 = vmul.f32 %v2135, %v2165
  %2186 = vrot.lane.b32.xlu0 %v1998, 15
  %v2187 = vpop.permute.xlu0 %2186
  %2188 = vrot.lane.b32.xlu0 %v2002, 15
  %v2189 = vpop.permute.xlu0 %2188
  %2190 = vrot.lane.b32.xlu0 %v2006, 15
  %v2191 = vpop.permute.xlu0 %2190
  %2192 = vrot.lane.b32.xlu0 %v2010, 15
  %v2193 = vpop.permute.xlu0 %2192
  %2194 = vrot.lane.b32.xlu0 %v1999, 15
  %v2195 = vpop.permute.xlu0 %2194
  %2196 = vrot.lane.b32.xlu0 %v2003, 15
  %v2197 = vpop.permute.xlu0 %2196
  %2198 = vrot.lane.b32.xlu0 %v2007, 15
  %v2199 = vpop.permute.xlu0 %2198
  %2200 = vrot.lane.b32.xlu0 %v2011, 15
  %v2201 = vpop.permute.xlu0 %2200
  %2202 = vrot.lane.b32.xlu0 %v2000, 15
  %v2203 = vpop.permute.xlu0 %2202
  %2204 = vrot.lane.b32.xlu0 %v2004, 15
  %v2205 = vpop.permute.xlu0 %2204
  %2206 = vrot.lane.b32.xlu0 %v2008, 15
  %v2207 = vpop.permute.xlu0 %2206
  %2208 = vrot.lane.b32.xlu0 %v2012, 15
  %v2209 = vpop.permute.xlu0 %2208
  %2210 = vrot.lane.b32.xlu0 %v2001, 15
  %v2211 = vpop.permute.xlu0 %2210
  %2212 = vrot.lane.b32.xlu0 %v2005, 15
  %v2213 = vpop.permute.xlu0 %2212
  %2214 = vrot.lane.b32.xlu0 %v2009, 15
  %v2215 = vpop.permute.xlu0 %2214
  %2216 = vrot.lane.b32.xlu0 %v2013, 15
  %v2217 = vpop.permute.xlu0 %2216
  %v2218 = vsel %vm714, %v2203, %v2211
  %v2219 = vsel %vm714, %v2205, %v2213
  %v2220 = vsel %vm714, %v2207, %v2215
  %v2221 = vsel %vm714, %v2209, %v2217
  %v2222 = vsel %vm714, %v2195, %v2203
  %v2223 = vsel %vm714, %v2197, %v2205
  %v2224 = vsel %vm714, %v2199, %v2207
  %v2225 = vsel %vm714, %v2201, %v2209
  %v2226 = vsel %vm714, %v2187, %v2195
  %v2227 = vsel %vm714, %v2189, %v2197
  %v2228 = vsel %vm714, %v2191, %v2199
  %v2229 = vsel %vm714, %v2193, %v2201
  %v2230 = vsel %vm714, %v2211, %v2187
  %v2231 = vsel %vm714, %v2213, %v2189
  %v2232 = vsel %vm714, %v2215, %v2191
  %v2233 = vsel %vm714, %v2217, %v2193
  %v2234 = vld [vmem:[%s731] ss:$8 sm:$0xf]
  %v2236 = vlaneseq
  %v2237 = vshrl.u32 %v2236, 7
  %v2238 = vsub.s32 0, %v2237
  %v2239 = vrot.slane %v2234, %v2238
  %v2240 = vlaneseq
  %v2241 = vshrl.u32 %v2240, 7
  %v2242 = vsub.s32 1, %v2241
  %v2243 = vrot.slane %v2234, %v2242
  %v2244 = vlaneseq
  %v2245 = vshrl.u32 %v2244, 7
  %v2246 = vsub.s32 2, %v2245
  %v2247 = vrot.slane %v2234, %v2246
  %v2248 = vlaneseq
  %v2249 = vshrl.u32 %v2248, 7
  %v2250 = vsub.s32 3, %v2249
  %v2251 = vrot.slane %v2234, %v2250
  %v2256 = vmul.f32 %v2230, %v2239
  %v2257 = vmul.f32 %v2226, %v2243
  %v2258 = vmul.f32 %v2222, %v2247
  %v2259 = vmul.f32 %v2218, %v2251
  %v2260 = vmul.f32 %v2231, %v2239
  %v2261 = vmul.f32 %v2227, %v2243
  %v2262 = vmul.f32 %v2223, %v2247
  %v2263 = vmul.f32 %v2219, %v2251
  %v2264 = vmul.f32 %v2232, %v2239
  %v2265 = vmul.f32 %v2228, %v2243
  %v2266 = vmul.f32 %v2224, %v2247
  %v2267 = vmul.f32 %v2220, %v2251
  %v2268 = vmul.f32 %v2233, %v2239
  %v2269 = vmul.f32 %v2229, %v2243
  %v2270 = vmul.f32 %v2225, %v2247
  %v2271 = vmul.f32 %v2221, %v2251
  %2272 = vrot.lane.b32.xlu0 %v1998, 1
  %v2273 = vpop.permute.xlu0 %2272
  %2274 = vrot.lane.b32.xlu0 %v2002, 1
  %v2275 = vpop.permute.xlu0 %2274
  %2276 = vrot.lane.b32.xlu0 %v2006, 1
  %v2277 = vpop.permute.xlu0 %2276
  %2278 = vrot.lane.b32.xlu0 %v2010, 1
  %v2279 = vpop.permute.xlu0 %2278
  %2280 = vrot.lane.b32.xlu0 %v1999, 1
  %v2281 = vpop.permute.xlu0 %2280
  %2282 = vrot.lane.b32.xlu0 %v2003, 1
  %v2283 = vpop.permute.xlu0 %2282
  %2284 = vrot.lane.b32.xlu0 %v2007, 1
  %v2285 = vpop.permute.xlu0 %2284
  %2286 = vrot.lane.b32.xlu0 %v2011, 1
  %v2287 = vpop.permute.xlu0 %2286
  %2288 = vrot.lane.b32.xlu0 %v2000, 1
  %v2289 = vpop.permute.xlu0 %2288
  %2290 = vrot.lane.b32.xlu0 %v2004, 1
  %v2291 = vpop.permute.xlu0 %2290
  %2292 = vrot.lane.b32.xlu0 %v2008, 1
  %v2293 = vpop.permute.xlu0 %2292
  %2294 = vrot.lane.b32.xlu0 %v2012, 1
  %v2295 = vpop.permute.xlu0 %2294
  %2296 = vrot.lane.b32.xlu0 %v2001, 1
  %v2297 = vpop.permute.xlu0 %2296
  %2298 = vrot.lane.b32.xlu0 %v2005, 1
  %v2299 = vpop.permute.xlu0 %2298
  %2300 = vrot.lane.b32.xlu0 %v2009, 1
  %v2301 = vpop.permute.xlu0 %2300
  %2302 = vrot.lane.b32.xlu0 %v2013, 1
  %v2303 = vpop.permute.xlu0 %2302
  %v2304 = vsel %vm802, %v2289, %v2297
  %v2305 = vsel %vm802, %v2291, %v2299
  %v2306 = vsel %vm802, %v2293, %v2301
  %v2307 = vsel %vm802, %v2295, %v2303
  %v2308 = vsel %vm802, %v2281, %v2289
  %v2309 = vsel %vm802, %v2283, %v2291
  %v2310 = vsel %vm802, %v2285, %v2293
  %v2311 = vsel %vm802, %v2287, %v2295
  %v2312 = vsel %vm802, %v2273, %v2281
  %v2313 = vsel %vm802, %v2275, %v2283
  %v2314 = vsel %vm802, %v2277, %v2285
  %v2315 = vsel %vm802, %v2279, %v2287
  %v2316 = vsel %vm802, %v2297, %v2273
  %v2317 = vsel %vm802, %v2299, %v2275
  %v2318 = vsel %vm802, %v2301, %v2277
  %v2319 = vsel %vm802, %v2303, %v2279
  %v2320 = vld [vmem:[%s819] ss:$8 sm:$0xf]
  %v2322 = vlaneseq
  %v2323 = vshrl.u32 %v2322, 7
  %v2324 = vsub.s32 0, %v2323
  %v2325 = vrot.slane %v2320, %v2324
  %v2326 = vlaneseq
  %v2327 = vshrl.u32 %v2326, 7
  %v2328 = vsub.s32 1, %v2327
  %v2329 = vrot.slane %v2320, %v2328
  %v2330 = vlaneseq
  %v2331 = vshrl.u32 %v2330, 7
  %v2332 = vsub.s32 2, %v2331
  %v2333 = vrot.slane %v2320, %v2332
  %v2334 = vlaneseq
  %v2335 = vshrl.u32 %v2334, 7
  %v2336 = vsub.s32 3, %v2335
  %v2337 = vrot.slane %v2320, %v2336
  %v2342 = vmul.f32 %v2316, %v2325
  %v2343 = vmul.f32 %v2312, %v2329
  %v2344 = vmul.f32 %v2308, %v2333
  %v2345 = vmul.f32 %v2304, %v2337
  %v2346 = vmul.f32 %v2317, %v2325
  %v2347 = vmul.f32 %v2313, %v2329
  %v2348 = vmul.f32 %v2309, %v2333
  %v2349 = vmul.f32 %v2305, %v2337
  %v2350 = vmul.f32 %v2318, %v2325
  %v2351 = vmul.f32 %v2314, %v2329
  %v2352 = vmul.f32 %v2310, %v2333
  %v2353 = vmul.f32 %v2306, %v2337
  %v2354 = vmul.f32 %v2319, %v2325
  %v2355 = vmul.f32 %v2315, %v2329
  %v2356 = vmul.f32 %v2311, %v2333
  %v2357 = vmul.f32 %v2307, %v2337
  %2358 = vrot.lane.b32.xlu0 %v1998, 127
  %v2359 = vpop.permute.xlu0 %2358
  %2360 = vrot.lane.b32.xlu0 %v2002, 127
  %v2361 = vpop.permute.xlu0 %2360
  %2362 = vrot.lane.b32.xlu0 %v2006, 127
  %v2363 = vpop.permute.xlu0 %2362
  %2364 = vrot.lane.b32.xlu0 %v2010, 127
  %v2365 = vpop.permute.xlu0 %2364
  %2366 = vrot.lane.b32.xlu0 %v1999, 127
  %v2367 = vpop.permute.xlu0 %2366
  %2368 = vrot.lane.b32.xlu0 %v2003, 127
  %v2369 = vpop.permute.xlu0 %2368
  %2370 = vrot.lane.b32.xlu0 %v2007, 127
  %v2371 = vpop.permute.xlu0 %2370
  %2372 = vrot.lane.b32.xlu0 %v2011, 127
  %v2373 = vpop.permute.xlu0 %2372
  %2374 = vrot.lane.b32.xlu0 %v2000, 127
  %v2375 = vpop.permute.xlu0 %2374
  %2376 = vrot.lane.b32.xlu0 %v2004, 127
  %v2377 = vpop.permute.xlu0 %2376
  %2378 = vrot.lane.b32.xlu0 %v2008, 127
  %v2379 = vpop.permute.xlu0 %2378
  %2380 = vrot.lane.b32.xlu0 %v2012, 127
  %v2381 = vpop.permute.xlu0 %2380
  %2382 = vrot.lane.b32.xlu0 %v2001, 127
  %v2383 = vpop.permute.xlu0 %2382
  %2384 = vrot.lane.b32.xlu0 %v2005, 127
  %v2385 = vpop.permute.xlu0 %2384
  %2386 = vrot.lane.b32.xlu0 %v2009, 127
  %v2387 = vpop.permute.xlu0 %2386
  %2388 = vrot.lane.b32.xlu0 %v2013, 127
  %v2389 = vpop.permute.xlu0 %2388
  %v2390 = vsel %vm890, %v2375, %v2383
  %v2391 = vsel %vm890, %v2377, %v2385
  %v2392 = vsel %vm890, %v2379, %v2387
  %v2393 = vsel %vm890, %v2381, %v2389
  %v2394 = vsel %vm890, %v2367, %v2375
  %v2395 = vsel %vm890, %v2369, %v2377
  %v2396 = vsel %vm890, %v2371, %v2379
  %v2397 = vsel %vm890, %v2373, %v2381
  %v2398 = vsel %vm890, %v2359, %v2367
  %v2399 = vsel %vm890, %v2361, %v2369
  %v2400 = vsel %vm890, %v2363, %v2371
  %v2401 = vsel %vm890, %v2365, %v2373
  %v2402 = vsel %vm890, %v2383, %v2359
  %v2403 = vsel %vm890, %v2385, %v2361
  %v2404 = vsel %vm890, %v2387, %v2363
  %v2405 = vsel %vm890, %v2389, %v2365
  %v2406 = vld [vmem:[%s907] ss:$8 sm:$0xf]
  %v2408 = vlaneseq
  %v2409 = vshrl.u32 %v2408, 7
  %v2410 = vsub.s32 0, %v2409
  %v2411 = vrot.slane %v2406, %v2410
  %v2412 = vlaneseq
  %v2413 = vshrl.u32 %v2412, 7
  %v2414 = vsub.s32 1, %v2413
  %v2415 = vrot.slane %v2406, %v2414
  %v2416 = vlaneseq
  %v2417 = vshrl.u32 %v2416, 7
  %v2418 = vsub.s32 2, %v2417
  %v2419 = vrot.slane %v2406, %v2418
  %v2420 = vlaneseq
  %v2421 = vshrl.u32 %v2420, 7
  %v2422 = vsub.s32 3, %v2421
  %v2423 = vrot.slane %v2406, %v2422
  %v2428 = vmul.f32 %v2398, %v2411
  %v2429 = vmul.f32 %v2394, %v2415
  %v2430 = vmul.f32 %v2390, %v2419
  %v2431 = vmul.f32 %v2402, %v2423
  %v2432 = vmul.f32 %v2399, %v2411
  %v2433 = vmul.f32 %v2395, %v2415
  %v2434 = vmul.f32 %v2391, %v2419
  %v2435 = vmul.f32 %v2403, %v2423
  %v2436 = vmul.f32 %v2400, %v2411
  %v2437 = vmul.f32 %v2396, %v2415
  %v2438 = vmul.f32 %v2392, %v2419
  %v2439 = vmul.f32 %v2404, %v2423
  %v2440 = vmul.f32 %v2401, %v2411
  %v2441 = vmul.f32 %v2397, %v2415
  %v2442 = vmul.f32 %v2393, %v2419
  %v2443 = vmul.f32 %v2405, %v2423
  %2444 = vrot.lane.b32.xlu0 %v1998, 113
  %v2445 = vpop.permute.xlu0 %2444
  %2446 = vrot.lane.b32.xlu0 %v2002, 113
  %v2447 = vpop.permute.xlu0 %2446
  %2448 = vrot.lane.b32.xlu0 %v2006, 113
  %v2449 = vpop.permute.xlu0 %2448
  %2450 = vrot.lane.b32.xlu0 %v2010, 113
  %v2451 = vpop.permute.xlu0 %2450
  %2452 = vrot.lane.b32.xlu0 %v1999, 113
  %v2453 = vpop.permute.xlu0 %2452
  %2454 = vrot.lane.b32.xlu0 %v2003, 113
  %v2455 = vpop.permute.xlu0 %2454
  %2456 = vrot.lane.b32.xlu0 %v2007, 113
  %v2457 = vpop.permute.xlu0 %2456
  %2458 = vrot.lane.b32.xlu0 %v2011, 113
  %v2459 = vpop.permute.xlu0 %2458
  %2460 = vrot.lane.b32.xlu0 %v2000, 113
  %v2461 = vpop.permute.xlu0 %2460
  %2462 = vrot.lane.b32.xlu0 %v2004, 113
  %v2463 = vpop.permute.xlu0 %2462
  %2464 = vrot.lane.b32.xlu0 %v2008, 113
  %v2465 = vpop.permute.xlu0 %2464
  %2466 = vrot.lane.b32.xlu0 %v2012, 113
  %v2467 = vpop.permute.xlu0 %2466
  %2468 = vrot.lane.b32.xlu0 %v2001, 113
  %v2469 = vpop.permute.xlu0 %2468
  %2470 = vrot.lane.b32.xlu0 %v2005, 113
  %v2471 = vpop.permute.xlu0 %2470
  %2472 = vrot.lane.b32.xlu0 %v2009, 113
  %v2473 = vpop.permute.xlu0 %2472
  %2474 = vrot.lane.b32.xlu0 %v2013, 113
  %v2475 = vpop.permute.xlu0 %2474
  %v2476 = vsel %vm978, %v2461, %v2469
  %v2477 = vsel %vm978, %v2463, %v2471
  %v2478 = vsel %vm978, %v2465, %v2473
  %v2479 = vsel %vm978, %v2467, %v2475
  %v2480 = vsel %vm978, %v2453, %v2461
  %v2481 = vsel %vm978, %v2455, %v2463
  %v2482 = vsel %vm978, %v2457, %v2465
  %v2483 = vsel %vm978, %v2459, %v2467
  %v2484 = vsel %vm978, %v2445, %v2453
  %v2485 = vsel %vm978, %v2447, %v2455
  %v2486 = vsel %vm978, %v2449, %v2457
  %v2487 = vsel %vm978, %v2451, %v2459
  %v2488 = vsel %vm978, %v2469, %v2445
  %v2489 = vsel %vm978, %v2471, %v2447
  %v2490 = vsel %vm978, %v2473, %v2449
  %v2491 = vsel %vm978, %v2475, %v2451
  %v2492 = vld [vmem:[%s995] ss:$8 sm:$0xf]
  %v2494 = vlaneseq
  %v2495 = vshrl.u32 %v2494, 7
  %v2496 = vsub.s32 0, %v2495
  %v2497 = vrot.slane %v2492, %v2496
  %v2498 = vlaneseq
  %v2499 = vshrl.u32 %v2498, 7
  %v2500 = vsub.s32 1, %v2499
  %v2501 = vrot.slane %v2492, %v2500
  %v2502 = vlaneseq
  %v2503 = vshrl.u32 %v2502, 7
  %v2504 = vsub.s32 2, %v2503
  %v2505 = vrot.slane %v2492, %v2504
  %v2506 = vlaneseq
  %v2507 = vshrl.u32 %v2506, 7
  %v2508 = vsub.s32 3, %v2507
  %v2509 = vrot.slane %v2492, %v2508
  %v2514 = vmul.f32 %v2484, %v2497
  %v2515 = vmul.f32 %v2480, %v2501
  %v2516 = vmul.f32 %v2476, %v2505
  %v2517 = vmul.f32 %v2488, %v2509
  %v2518 = vmul.f32 %v2485, %v2497
  %v2519 = vmul.f32 %v2481, %v2501
  %v2520 = vmul.f32 %v2477, %v2505
  %v2521 = vmul.f32 %v2489, %v2509
  %v2522 = vmul.f32 %v2486, %v2497
  %v2523 = vmul.f32 %v2482, %v2501
  %v2524 = vmul.f32 %v2478, %v2505
  %v2525 = vmul.f32 %v2490, %v2509
  %v2526 = vmul.f32 %v2487, %v2497
  %v2527 = vmul.f32 %v2483, %v2501
  %v2528 = vmul.f32 %v2479, %v2505
  %v2529 = vmul.f32 %v2491, %v2509
  %2530 = vrot.lane.b32.xlu0 %v1998, 112
  %v2531 = vpop.permute.xlu0 %2530
  %2532 = vrot.lane.b32.xlu0 %v2002, 112
  %v2533 = vpop.permute.xlu0 %2532
  %2534 = vrot.lane.b32.xlu0 %v2006, 112
  %v2535 = vpop.permute.xlu0 %2534
  %2536 = vrot.lane.b32.xlu0 %v2010, 112
  %v2537 = vpop.permute.xlu0 %2536
  %2538 = vrot.lane.b32.xlu0 %v1999, 112
  %v2539 = vpop.permute.xlu0 %2538
  %2540 = vrot.lane.b32.xlu0 %v2003, 112
  %v2541 = vpop.permute.xlu0 %2540
  %2542 = vrot.lane.b32.xlu0 %v2007, 112
  %v2543 = vpop.permute.xlu0 %2542
  %2544 = vrot.lane.b32.xlu0 %v2011, 112
  %v2545 = vpop.permute.xlu0 %2544
  %2546 = vrot.lane.b32.xlu0 %v2000, 112
  %v2547 = vpop.permute.xlu0 %2546
  %2548 = vrot.lane.b32.xlu0 %v2004, 112
  %v2549 = vpop.permute.xlu0 %2548
  %2550 = vrot.lane.b32.xlu0 %v2008, 112
  %v2551 = vpop.permute.xlu0 %2550
  %2552 = vrot.lane.b32.xlu0 %v2012, 112
  %v2553 = vpop.permute.xlu0 %2552
  %2554 = vrot.lane.b32.xlu0 %v2001, 112
  %v2555 = vpop.permute.xlu0 %2554
  %2556 = vrot.lane.b32.xlu0 %v2005, 112
  %v2557 = vpop.permute.xlu0 %2556
  %2558 = vrot.lane.b32.xlu0 %v2009, 112
  %v2559 = vpop.permute.xlu0 %2558
  %2560 = vrot.lane.b32.xlu0 %v2013, 112
  %v2561 = vpop.permute.xlu0 %2560
  %v2562 = vsel %vm1066, %v2547, %v2555
  %v2563 = vsel %vm1066, %v2549, %v2557
  %v2564 = vsel %vm1066, %v2551, %v2559
  %v2565 = vsel %vm1066, %v2553, %v2561
  %v2566 = vsel %vm1066, %v2539, %v2547
  %v2567 = vsel %vm1066, %v2541, %v2549
  %v2568 = vsel %vm1066, %v2543, %v2551
  %v2569 = vsel %vm1066, %v2545, %v2553
  %v2570 = vsel %vm1066, %v2531, %v2539
  %v2571 = vsel %vm1066, %v2533, %v2541
  %v2572 = vsel %vm1066, %v2535, %v2543
  %v2573 = vsel %vm1066, %v2537, %v2545
  %v2574 = vsel %vm1066, %v2555, %v2531
  %v2575 = vsel %vm1066, %v2557, %v2533
  %v2576 = vsel %vm1066, %v2559, %v2535
  %v2577 = vsel %vm1066, %v2561, %v2537
  %v2578 = vld [vmem:[%s1083] ss:$8 sm:$0xf]
  %v2580 = vlaneseq
  %v2581 = vshrl.u32 %v2580, 7
  %v2582 = vsub.s32 0, %v2581
  %v2583 = vrot.slane %v2578, %v2582
  %v2584 = vlaneseq
  %v2585 = vshrl.u32 %v2584, 7
  %v2586 = vsub.s32 1, %v2585
  %v2587 = vrot.slane %v2578, %v2586
  %v2588 = vlaneseq
  %v2589 = vshrl.u32 %v2588, 7
  %v2590 = vsub.s32 2, %v2589
  %v2591 = vrot.slane %v2578, %v2590
  %v2592 = vlaneseq
  %v2593 = vshrl.u32 %v2592, 7
  %v2594 = vsub.s32 3, %v2593
  %v2595 = vrot.slane %v2578, %v2594
  %v2600 = vmul.f32 %v2570, %v2583
  %v2601 = vmul.f32 %v2566, %v2587
  %v2602 = vmul.f32 %v2562, %v2591
  %v2603 = vmul.f32 %v2574, %v2595
  %v2604 = vmul.f32 %v2571, %v2583
  %v2605 = vmul.f32 %v2567, %v2587
  %v2606 = vmul.f32 %v2563, %v2591
  %v2607 = vmul.f32 %v2575, %v2595
  %v2608 = vmul.f32 %v2572, %v2583
  %v2609 = vmul.f32 %v2568, %v2587
  %v2610 = vmul.f32 %v2564, %v2591
  %v2611 = vmul.f32 %v2576, %v2595
  %v2612 = vmul.f32 %v2573, %v2583
  %v2613 = vmul.f32 %v2569, %v2587
  %v2614 = vmul.f32 %v2565, %v2591
  %v2615 = vmul.f32 %v2577, %v2595
  %2616 = vrot.lane.b32.xlu0 %v1998, 111
  %v2617 = vpop.permute.xlu0 %2616
  %2618 = vrot.lane.b32.xlu0 %v2002, 111
  %v2619 = vpop.permute.xlu0 %2618
  %2620 = vrot.lane.b32.xlu0 %v2006, 111
  %v2621 = vpop.permute.xlu0 %2620
  %2622 = vrot.lane.b32.xlu0 %v2010, 111
  %v2623 = vpop.permute.xlu0 %2622
  %2624 = vrot.lane.b32.xlu0 %v1999, 111
  %v2625 = vpop.permute.xlu0 %2624
  %2626 = vrot.lane.b32.xlu0 %v2003, 111
  %v2627 = vpop.permute.xlu0 %2626
  %2628 = vrot.lane.b32.xlu0 %v2007, 111
  %v2629 = vpop.permute.xlu0 %2628
  %2630 = vrot.lane.b32.xlu0 %v2011, 111
  %v2631 = vpop.permute.xlu0 %2630
  %2632 = vrot.lane.b32.xlu0 %v2000, 111
  %v2633 = vpop.permute.xlu0 %2632
  %2634 = vrot.lane.b32.xlu0 %v2004, 111
  %v2635 = vpop.permute.xlu0 %2634
  %2636 = vrot.lane.b32.xlu0 %v2008, 111
  %v2637 = vpop.permute.xlu0 %2636
  %2638 = vrot.lane.b32.xlu0 %v2012, 111
  %v2639 = vpop.permute.xlu0 %2638
  %2640 = vrot.lane.b32.xlu0 %v2001, 111
  %v2641 = vpop.permute.xlu0 %2640
  %2642 = vrot.lane.b32.xlu0 %v2005, 111
  %v2643 = vpop.permute.xlu0 %2642
  %2644 = vrot.lane.b32.xlu0 %v2009, 111
  %v2645 = vpop.permute.xlu0 %2644
  %2646 = vrot.lane.b32.xlu0 %v2013, 111
  %v2647 = vpop.permute.xlu0 %2646
  %v2648 = vsel %vm1154, %v2633, %v2641
  %v2649 = vsel %vm1154, %v2635, %v2643
  %v2650 = vsel %vm1154, %v2637, %v2645
  %v2651 = vsel %vm1154, %v2639, %v2647
  %v2652 = vsel %vm1154, %v2625, %v2633
  %v2653 = vsel %vm1154, %v2627, %v2635
  %v2654 = vsel %vm1154, %v2629, %v2637
  %v2655 = vsel %vm1154, %v2631, %v2639
  %v2656 = vsel %vm1154, %v2617, %v2625
  %v2657 = vsel %vm1154, %v2619, %v2627
  %v2658 = vsel %vm1154, %v2621, %v2629
  %v2659 = vsel %vm1154, %v2623, %v2631
  %v2660 = vsel %vm1154, %v2641, %v2617
  %v2661 = vsel %vm1154, %v2643, %v2619
  %v2662 = vsel %vm1154, %v2645, %v2621
  %v2663 = vsel %vm1154, %v2647, %v2623
  %v2664 = vld [vmem:[%s1171] ss:$8 sm:$0xf]
  %v2666 = vlaneseq
  %v2667 = vshrl.u32 %v2666, 7
  %v2668 = vsub.s32 0, %v2667
  %v2669 = vrot.slane %v2664, %v2668
  %v2670 = vlaneseq
  %v2671 = vshrl.u32 %v2670, 7
  %v2672 = vsub.s32 1, %v2671
  %v2673 = vrot.slane %v2664, %v2672
  %v2674 = vlaneseq
  %v2675 = vshrl.u32 %v2674, 7
  %v2676 = vsub.s32 2, %v2675
  %v2677 = vrot.slane %v2664, %v2676
  %v2678 = vlaneseq
  %v2679 = vshrl.u32 %v2678, 7
  %v2680 = vsub.s32 3, %v2679
  %v2681 = vrot.slane %v2664, %v2680
  %v2686 = vmul.f32 %v2656, %v2669
  %v2687 = vmul.f32 %v2652, %v2673
  %v2688 = vmul.f32 %v2648, %v2677
  %v2689 = vmul.f32 %v2660, %v2681
  %v2690 = vmul.f32 %v2657, %v2669
  %v2691 = vmul.f32 %v2653, %v2673
  %v2692 = vmul.f32 %v2649, %v2677
  %v2693 = vmul.f32 %v2661, %v2681
  %v2694 = vmul.f32 %v2658, %v2669
  %v2695 = vmul.f32 %v2654, %v2673
  %v2696 = vmul.f32 %v2650, %v2677
  %v2697 = vmul.f32 %v2662, %v2681
  %v2698 = vmul.f32 %v2659, %v2669
  %v2699 = vmul.f32 %v2655, %v2673
  %v2700 = vmul.f32 %v2651, %v2677
  %v2701 = vmul.f32 %v2663, %v2681
  %v2702 = vld [vmem:[%s9] sm:$0xff]
  %v2703 = vld [vmem:[%s9 + $0x8] sm:$0xff]
  %v2704 = vld [vmem:[%s9 + $0x10] sm:$0xff]
  %v2705 = vld [vmem:[%s8] sm:$0xff]
  %2707 = vset.pattern.permute.xlu0 2
  %2708 = vperm.xlu0 %2707, %v2705
  %v2709 = vpop.permute.xlu0 %2708
  %v2712 = vsel %vm1219, %v2704, 0
  %2714 = vmatprep.subr.mxu0 %v2085
  %2715 = vmatpush1.msra.mxu0 %v2084
  %2716 = vmatprep.subr.mxu0 %v2089
  %2717 = vmatpush1.msra.mxu0 %v2088
  %2718 = vmatprep.subr.mxu0 %v2093
  %2719 = vmatpush1.msra.mxu0 %v2092
  %2720 = vmatprep.subr.mxu0 %v2097
  %2721 = vmatpush1.msra.mxu0 %v2096
  %2722 = vmatprep.subr.mxu0 %v2171
  %2723 = vmatpush1.msra.mxu0 %v2170
  %2724 = vmatprep.subr.mxu0 %v2175
  %2725 = vmatpush1.msra.mxu0 %v2174
  %2726 = vmatprep.subr.mxu0 %v2179
  %2727 = vmatpush1.msra.mxu0 %v2178
  %2728 = vmatprep.subr.mxu0 %v2183
  %2729 = vmatpush1.msra.mxu0 %v2182
  %2730 = vmatprep.subr.mxu0 %v2257
  %2731 = vmatpush1.msra.mxu0 %v2256
  %2732 = vmatprep.subr.mxu0 %v2261
  %2733 = vmatpush1.msra.mxu0 %v2260
  %2734 = vmatprep.subr.mxu0 %v2265
  %2735 = vmatpush1.msra.mxu0 %v2264
  %2736 = vmatprep.subr.mxu0 %v2269
  %2737 = vmatpush1.msra.mxu0 %v2268
  %2738 = vmatprep.subr.mxu0 %v2343
  %2739 = vmatpush1.msra.mxu0 %v2342
  %2740 = vmatprep.subr.mxu0 %v2347
  %2741 = vmatpush1.msra.mxu0 %v2346
  %2742 = vmatprep.subr.mxu0 %v2351
  %2743 = vmatpush1.msra.mxu0 %v2350
  %2744 = vmatprep.subr.mxu0 %v2355
  %2745 = vmatpush1.msra.mxu0 %v2354
  %2746 = vmatprep.subr.mxu0 %v1999
  %2747 = vmatpush1.msra.mxu0 %v1998
  %2748 = vmatprep.subr.mxu0 %v2003
  %2749 = vmatpush1.msra.mxu0 %v2002
  %2750 = vmatprep.subr.mxu0 %v2007
  %2751 = vmatpush1.msra.mxu0 %v2006
  %2752 = vmatprep.subr.mxu0 %v2011
  %2753 = vmatpush1.msra.mxu0 %v2010
  %2754 = vmatprep.subr.mxu0 %v2429
  %2755 = vmatpush1.msra.mxu0 %v2428
  %2756 = vmatprep.subr.mxu0 %v2433
  %2757 = vmatpush1.msra.mxu0 %v2432
  %2758 = vmatprep.subr.mxu0 %v2437
  %2759 = vmatpush1.msra.mxu0 %v2436
  %2760 = vmatprep.subr.mxu0 %v2441
  %2761 = vmatpush1.msra.mxu0 %v2440
  %2762 = vmatprep.subr.mxu0 %v2515
  %2763 = vmatpush1.msra.mxu0 %v2514
  %2764 = vmatprep.subr.mxu0 %v2519
  %2765 = vmatpush1.msra.mxu0 %v2518
  %2766 = vmatprep.subr.mxu0 %v2523
  %2767 = vmatpush1.msra.mxu0 %v2522
  %2768 = vmatprep.subr.mxu0 %v2527
  %2769 = vmatpush1.msra.mxu0 %v2526
  %2770 = vmatprep.subr.mxu0 %v2601
  %2771 = vmatpush1.msra.mxu0 %v2600
  %2772 = vmatprep.subr.mxu0 %v2605
  %2773 = vmatpush1.msra.mxu0 %v2604
  %2774 = vmatprep.subr.mxu0 %v2609
  %2775 = vmatpush1.msra.mxu0 %v2608
  %2776 = vmatprep.subr.mxu0 %v2613
  %2777 = vmatpush1.msra.mxu0 %v2612
  %2778 = vmatprep.mubr.f32.mxu0 %v2703
  %2779 = vmatmul.mubr.f32.gmra.mrb[0].mxu0 %v2702
  %v2780 = vpop.f32.mrb[0].mxu0
  %v2781 = vadd.f32 %v2709, %v2780
  %v2782 = vpop.f32.mrb[0].mxu0
  %v2783 = vadd.f32 %v2709, %v2782
  %2784 = vdwg.mxu0
  %2785 = vmatprep.subr.mxu0 %v2687
  %2786 = vmatpush1.msra.mxu0 %v2686
  %2787 = vmatprep.subr.mxu0 %v2691
  %2788 = vmatpush1.msra.mxu0 %v2690
  %2789 = vmatprep.subr.mxu0 %v2695
  %2790 = vmatpush1.msra.mxu0 %v2694
  %2791 = vmatprep.subr.mxu0 %v2699
  %2792 = vmatpush1.msra.mxu0 %v2698
  %2793 = vmatprep.subr.mxu0 0.0
  %2794 = vmatpush1.msra.mxu0 0.0
  %2795 = vmatprep.subr.mxu0 0.0
  %2796 = vmatpush1.msra.mxu0 0.0
  %2797 = vmatprep.subr.mxu0 0.0
  %2798 = vmatpush1.msra.mxu0 0.0
  %2799 = vmatprep.subr.mxu0 0.0
  %2800 = vmatpush1.msra.mxu0 0.0
  %2801 = vmatprep.subr.mxu0 0.0
  %2802 = vmatpush1.msra.mxu0 0.0
  %2803 = vmatprep.subr.mxu0 0.0
  %2804 = vmatpush1.msra.mxu0 0.0
  %2805 = vmatprep.subr.mxu0 0.0
  %2806 = vmatpush1.msra.mxu0 0.0
  %2807 = vmatprep.subr.mxu0 0.0
  %2808 = vmatpush1.msra.mxu0 0.0
  %2809 = vmatprep.subr.mxu0 0.0
  %2810 = vmatpush1.msra.mxu0 0.0
  %2811 = vmatprep.subr.mxu0 0.0
  %2812 = vmatpush1.msra.mxu0 0.0
  %2813 = vmatprep.subr.mxu0 0.0
  %2814 = vmatpush1.msra.mxu0 0.0
  %2815 = vmatprep.subr.mxu0 0.0
  %2816 = vmatpush1.msra.mxu0 0.0
  %2817 = vmatprep.subr.mxu0 0.0
  %2818 = vmatpush1.msra.mxu0 0.0
  %2819 = vmatprep.subr.mxu0 0.0
  %2820 = vmatpush1.msra.mxu0 0.0
  %2821 = vmatprep.subr.mxu0 0.0
  %2822 = vmatpush1.msra.mxu0 0.0
  %2823 = vmatprep.subr.mxu0 0.0
  %2824 = vmatpush1.msra.mxu0 0.0
  %2825 = vmatprep.subr.mxu0 0.0
  %2826 = vmatpush1.msra.mxu0 0.0
  %2827 = vmatprep.subr.mxu0 0.0
  %2828 = vmatpush1.msra.mxu0 0.0
  %2829 = vmatprep.subr.mxu0 0.0
  %2830 = vmatpush1.msra.mxu0 0.0
  %2831 = vmatprep.subr.mxu0 0.0
  %2832 = vmatpush1.msra.mxu0 0.0
  %2833 = vmatprep.subr.mxu0 0.0
  %2834 = vmatpush1.msra.mxu0 0.0
  %2835 = vmatprep.subr.mxu0 0.0
  %2836 = vmatpush1.msra.mxu0 0.0
  %2837 = vmatprep.subr.mxu0 0.0
  %2838 = vmatpush1.msra.mxu0 0.0
  %2839 = vmatprep.subr.mxu0 0.0
  %2840 = vmatpush1.msra.mxu0 0.0
  %2841 = vmatprep.subr.mxu0 0.0
  %2842 = vmatpush1.msra.mxu0 0.0
  %2843 = vmatprep.subr.mxu0 0.0
  %2844 = vmatpush1.msra.mxu0 0.0
  %2845 = vmatprep.subr.mxu0 0.0
  %2846 = vmatpush1.msra.mxu0 0.0
  %2847 = vmatprep.subr.mxu0 0.0
  %2848 = vmatpush1.msra.mxu0 0.0
  %2849 = vmatprep.mubr.f32.mxu0 0.0
  %2850 = vmatmul.mubr.f32.gmra.mrb[0].mxu0 %v2712
  %v2851 = vpop.f32.mrb[0].mxu0
  %v2852 = vadd.f32 %v2781, %v2851
  %v2853 = vpop.f32.mrb[0].mxu0
  %v2854 = vadd.f32 %v2783, %v2853
  %2855 = vdwg.mxu0
  %2856 = vmatprep.subr.mxu0 %v2087
  %2857 = vmatpush1.msra.mxu0 %v2086
  %2858 = vmatprep.subr.mxu0 %v2091
  %2859 = vmatpush1.msra.mxu0 %v2090
  %2860 = vmatprep.subr.mxu0 %v2095
  %2861 = vmatpush1.msra.mxu0 %v2094
  %2862 = vmatprep.subr.mxu0 %v2099
  %2863 = vmatpush1.msra.mxu0 %v2098
  %2864 = vmatprep.subr.mxu0 %v2173
  %2865 = vmatpush1.msra.mxu0 %v2172
  %2866 = vmatprep.subr.mxu0 %v2177
  %2867 = vmatpush1.msra.mxu0 %v2176
  %2868 = vmatprep.subr.mxu0 %v2181
  %2869 = vmatpush1.msra.mxu0 %v2180
  %2870 = vmatprep.subr.mxu0 %v2185
  %2871 = vmatpush1.msra.mxu0 %v2184
  %2872 = vmatprep.subr.mxu0 %v2259
  %2873 = vmatpush1.msra.mxu0 %v2258
  %2874 = vmatprep.subr.mxu0 %v2263
  %2875 = vmatpush1.msra.mxu0 %v2262
  %2876 = vmatprep.subr.mxu0 %v2267
  %2877 = vmatpush1.msra.mxu0 %v2266
  %2878 = vmatprep.subr.mxu0 %v2271
  %2879 = vmatpush1.msra.mxu0 %v2270
  %2880 = vmatprep.subr.mxu0 %v2345
  %2881 = vmatpush1.msra.mxu0 %v2344
  %2882 = vmatprep.subr.mxu0 %v2349
  %2883 = vmatpush1.msra.mxu0 %v2348
  %2884 = vmatprep.subr.mxu0 %v2353
  %2885 = vmatpush1.msra.mxu0 %v2352
  %2886 = vmatprep.subr.mxu0 %v2357
  %2887 = vmatpush1.msra.mxu0 %v2356
  %2888 = vmatprep.subr.mxu0 %v2001
  %2889 = vmatpush1.msra.mxu0 %v2000
  %2890 = vmatprep.subr.mxu0 %v2005
  %2891 = vmatpush1.msra.mxu0 %v2004
  %2892 = vmatprep.subr.mxu0 %v2009
  %2893 = vmatpush1.msra.mxu0 %v2008
  %2894 = vmatprep.subr.mxu0 %v2013
  %2895 = vmatpush1.msra.mxu0 %v2012
  %2896 = vmatprep.subr.mxu0 %v2431
  %2897 = vmatpush1.msra.mxu0 %v2430
  %2898 = vmatprep.subr.mxu0 %v2435
  %2899 = vmatpush1.msra.mxu0 %v2434
  %2900 = vmatprep.subr.mxu0 %v2439
  %2901 = vmatpush1.msra.mxu0 %v2438
  %2902 = vmatprep.subr.mxu0 %v2443
  %2903 = vmatpush1.msra.mxu0 %v2442
  %2904 = vmatprep.subr.mxu0 %v2517
  %2905 = vmatpush1.msra.mxu0 %v2516
  %2906 = vmatprep.subr.mxu0 %v2521
  %2907 = vmatpush1.msra.mxu0 %v2520
  %2908 = vmatprep.subr.mxu0 %v2525
  %2909 = vmatpush1.msra.mxu0 %v2524
  %2910 = vmatprep.subr.mxu0 %v2529
  %2911 = vmatpush1.msra.mxu0 %v2528
  %2912 = vmatprep.subr.mxu0 %v2603
  %2913 = vmatpush1.msra.mxu0 %v2602
  %2914 = vmatprep.subr.mxu0 %v2607
  %2915 = vmatpush1.msra.mxu0 %v2606
  %2916 = vmatprep.subr.mxu0 %v2611
  %2917 = vmatpush1.msra.mxu0 %v2610
  %2918 = vmatprep.subr.mxu0 %v2615
  %2919 = vmatpush1.msra.mxu0 %v2614
  %2920 = vmatprep.mubr.f32.mxu0 %v2703
  %2921 = vmatmul.mubr.f32.gmra.mrb[0].mxu0 %v2702
  %v2922 = vpop.f32.mrb[0].mxu0
  %v2923 = vadd.f32 %v2709, %v2922
  %v2924 = vpop.f32.mrb[0].mxu0
  %v2925 = vadd.f32 %v2709, %v2924
  %2926 = vdwg.mxu0
  %2927 = vmatprep.subr.mxu0 %v2689
  %2928 = vmatpush1.msra.mxu0 %v2688
  %2929 = vmatprep.subr.mxu0 %v2693
  %2930 = vmatpush1.msra.mxu0 %v2692
  %2931 = vmatprep.subr.mxu0 %v2697
  %2932 = vmatpush1.msra.mxu0 %v2696
  %2933 = vmatprep.subr.mxu0 %v2701
  %2934 = vmatpush1.msra.mxu0 %v2700
  %2935 = vmatprep.subr.mxu0 0.0
  %2936 = vmatpush1.msra.mxu0 0.0
  %2937 = vmatprep.subr.mxu0 0.0
  %2938 = vmatpush1.msra.mxu0 0.0
  %2939 = vmatprep.subr.mxu0 0.0
  %2940 = vmatpush1.msra.mxu0 0.0
  %2941 = vmatprep.subr.mxu0 0.0
  %2942 = vmatpush1.msra.mxu0 0.0
  %2943 = vmatprep.subr.mxu0 0.0
  %2944 = vmatpush1.msra.mxu0 0.0
  %2945 = vmatprep.subr.mxu0 0.0
  %2946 = vmatpush1.msra.mxu0 0.0
  %2947 = vmatprep.subr.mxu0 0.0
  %2948 = vmatpush1.msra.mxu0 0.0
  %2949 = vmatprep.subr.mxu0 0.0
  %2950 = vmatpush1.msra.mxu0 0.0
  %2951 = vmatprep.subr.mxu0 0.0
  %2952 = vmatpush1.msra.mxu0 0.0
  %2953 = vmatprep.subr.mxu0 0.0
  %2954 = vmatpush1.msra.mxu0 0.0
  %2955 = vmatprep.subr.mxu0 0.0
  %2956 = vmatpush1.msra.mxu0 0.0
  %2957 = vmatprep.subr.mxu0 0.0
  %2958 = vmatpush1.msra.mxu0 0.0
  %2959 = vmatprep.subr.mxu0 0.0
  %2960 = vmatpush1.msra.mxu0 0.0
  %2961 = vmatprep.subr.mxu0 0.0
  %2962 = vmatpush1.msra.mxu0 0.0
  %2963 = vmatprep.subr.mxu0 0.0
  %2964 = vmatpush1.msra.mxu0 0.0
  %2965 = vmatprep.subr.mxu0 0.0
  %2966 = vmatpush1.msra.mxu0 0.0
  %2967 = vmatprep.subr.mxu0 0.0
  %2968 = vmatpush1.msra.mxu0 0.0
  %2969 = vmatprep.subr.mxu0 0.0
  %2970 = vmatpush1.msra.mxu0 0.0
  %2971 = vmatprep.subr.mxu0 0.0
  %2972 = vmatpush1.msra.mxu0 0.0
  %2973 = vmatprep.subr.mxu0 0.0
  %2974 = vmatpush1.msra.mxu0 0.0
  %2975 = vmatprep.subr.mxu0 0.0
  %2976 = vmatpush1.msra.mxu0 0.0
  %2977 = vmatprep.subr.mxu0 0.0
  %2978 = vmatpush1.msra.mxu0 0.0
  %2979 = vmatprep.subr.mxu0 0.0
  %2980 = vmatpush1.msra.mxu0 0.0
  %2981 = vmatprep.subr.mxu0 0.0
  %2982 = vmatpush1.msra.mxu0 0.0
  %2983 = vmatprep.subr.mxu0 0.0
  %2984 = vmatpush1.msra.mxu0 0.0
  %2985 = vmatprep.subr.mxu0 0.0
  %2986 = vmatpush1.msra.mxu0 0.0
  %2987 = vmatprep.subr.mxu0 0.0
  %2988 = vmatpush1.msra.mxu0 0.0
  %2989 = vmatprep.subr.mxu0 0.0
  %2990 = vmatpush1.msra.mxu0 0.0
  %2991 = vmatprep.mubr.f32.mxu0 0.0
  %2992 = vmatmul.mubr.f32.gmra.mrb[0].mxu0 %v2712
  %v2993 = vpop.f32.mrb[0].mxu0
  %v2994 = vadd.f32 %v2923, %v2993
  %v2995 = vpop.f32.mrb[0].mxu0
  %v2996 = vadd.f32 %v2925, %v2995
  %2997 = vdwg.mxu0
  %2998 = vst [vmem:[%s14 + $0x40] sm:$0xff] %v2852
  %2999 = vst [vmem:[%s14 + $0x48] sm:$0xff] %v2854
  %3000 = vst [vmem:[%s14 + $0x50] sm:$0xff] %v2994
  %3001 = vst [vmem:[%s14 + $0x58] sm:$0xff] %v2996
  %v3002 = vld [vmem:[%s14] sm:$0xff]
  %v3003 = vld [vmem:[%s14 + $0x8] sm:$0xff]
  %v3004 = vld [vmem:[%s14 + $0x10] sm:$0xff]
  %v3005 = vld [vmem:[%s14 + $0x18] sm:$0xff]
  %v3006 = vld [vmem:[%s14 + $0x20] sm:$0xff]
  %v3007 = vld [vmem:[%s14 + $0x28] sm:$0xff]
  %v3008 = vld [vmem:[%s14 + $0x30] sm:$0xff]
  %v3009 = vld [vmem:[%s14 + $0x38] sm:$0xff]
  %v3010 = vld [vmem:[%s14 + $0x40] sm:$0xff]
  %v3011 = vld [vmem:[%s14 + $0x48] sm:$0xff]
  %v3012 = vld [vmem:[%s14 + $0x50] sm:$0xff]
  %v3013 = vld [vmem:[%s14 + $0x58] sm:$0xff]
  %v3014 = vadd.f32 %v3002, %v3003
  %v3015 = vadd.f32 %v3014, %v3004
  %v3016 = vadd.f32 %v3015, %v3005
  %3017 = vadd.xlane.f32.xlu0 %v3016
  %v3018 = vpop.xlane.xlu0 %3017
  %v3019 = vadd.f32 %v3006, %v3007
  %v3020 = vadd.f32 %v3019, %v3008
  %v3021 = vadd.f32 %v3020, %v3009
  %3022 = vadd.xlane.f32.xlu0 %v3021
  %v3023 = vpop.xlane.xlu0 %3022
  %v3024 = vadd.f32 %v3010, %v3011
  %v3025 = vadd.f32 %v3024, %v3012
  %v3026 = vadd.f32 %v3025, %v3013
  %3027 = vadd.xlane.f32.xlu0 %v3026
  %v3028 = vpop.xlane.xlu0 %3027
  %v3029 = vmul.f32 %v3018, %v64
  %v3030 = vmul.f32 %v3023, %v64
  %v3031 = vmul.f32 %v3028, %v64
  %v3032 = vmul.f32 %v3002, %v3002
  %v3033 = vmul.f32 %v3003, %v3003
  %v3034 = vmul.f32 %v3004, %v3004
  %v3035 = vmul.f32 %v3005, %v3005
  %v3036 = vmul.f32 %v3006, %v3006
  %v3037 = vmul.f32 %v3007, %v3007
  %v3038 = vmul.f32 %v3008, %v3008
  %v3039 = vmul.f32 %v3009, %v3009
  %v3040 = vmul.f32 %v3010, %v3010
  %v3041 = vmul.f32 %v3011, %v3011
  %v3042 = vmul.f32 %v3012, %v3012
  %v3043 = vmul.f32 %v3013, %v3013
  %v3044 = vadd.f32 %v3032, %v3033
  %v3045 = vadd.f32 %v3044, %v3034
  %v3046 = vadd.f32 %v3045, %v3035
  %3047 = vadd.xlane.f32.xlu0 %v3046
  %v3048 = vpop.xlane.xlu0 %3047
  %v3049 = vadd.f32 %v3036, %v3037
  %v3050 = vadd.f32 %v3049, %v3038
  %v3051 = vadd.f32 %v3050, %v3039
  %3052 = vadd.xlane.f32.xlu0 %v3051
  %v3053 = vpop.xlane.xlu0 %3052
  %v3054 = vadd.f32 %v3040, %v3041
  %v3055 = vadd.f32 %v3054, %v3042
  %v3056 = vadd.f32 %v3055, %v3043
  %3057 = vadd.xlane.f32.xlu0 %v3056
  %v3058 = vpop.xlane.xlu0 %3057
  %v3059 = vmul.f32 %v3048, %v64
  %v3060 = vmul.f32 %v3053, %v64
  %v3061 = vmul.f32 %v3058, %v64
  %v3062 = vmul.f32 %v3029, %v3029
  %v3063 = vmul.f32 %v3030, %v3030
  %v3064 = vmul.f32 %v3031, %v3031
  %v3065 = vsub.f32 %v3059, %v3062
  %v3066 = vsub.f32 %v3060, %v3063
  %v3067 = vsub.f32 %v3061, %v3064
  %v3068 = vld [vmem:[%s10] sm:$0xff]
  %v3069 = vld [vmem:[%s10 + $0x8] sm:$0xff]
  %v3070 = vld [vmem:[%s10 + $0x10] sm:$0xff]
  %v3071 = vadd.f32 %v3065, 1e-05
  %v3072 = vadd.f32 %v3066, 1e-05
  %v3073 = vadd.f32 %v3067, 1e-05
  %v3074 = vrsqrt.pop %v3071
  %v3075 = vrsqrt.pop %v3072
  %v3076 = vrsqrt.pop %v3073
  %v3077 = vmul.f32 %v3068, %v3074
  %v3078 = vmul.f32 %v3069, %v3075
  %v3079 = vmul.f32 %v3070, %v3076
  %v3080 = vmul.f32 %v3029, %v3077
  %v3081 = vmul.f32 %v3030, %v3078
  %v3082 = vmul.f32 %v3031, %v3079
  %3086 = vrot.lane.b32.xlu0 %v3080, 1
  %v3087 = vpop.permute.xlu0 %3086
  %3088 = vrot.lane.b32.xlu0 %v3081, 1
  %v3089 = vpop.permute.xlu0 %3088
  %3090 = vrot.lane.b32.xlu0 %v3082, 1
  %v3091 = vpop.permute.xlu0 %3090
  %v3095 = vsub.f32 %v3068, %v3087
  %v3096 = vsub.f32 %v3069, %v3089
  %v3097 = vsub.f32 %v3070, %v3091
  %3099 = vset.pattern.permute.xlu0 0
  %3100 = vperm.xlu0 %3099, %v3077
  %v3101 = vpop.permute.xlu0 %3100
  %3104 = vset.pattern.permute.xlu0 0
  %3105 = vperm.xlu0 %3104, %v3078
  %v3106 = vpop.permute.xlu0 %3105
  %3109 = vset.pattern.permute.xlu0 0
  %3110 = vperm.xlu0 %3109, %v3079
  %v3111 = vpop.permute.xlu0 %3110
  %v3113 = vmul.f32 %v3002, %v3101
  %v3114 = vmul.f32 %v3003, %v3101
  %v3115 = vmul.f32 %v3004, %v3101
  %v3116 = vmul.f32 %v3005, %v3101
  %v3117 = vmul.f32 %v3006, %v3106
  %v3118 = vmul.f32 %v3007, %v3106
  %v3119 = vmul.f32 %v3008, %v3106
  %v3120 = vmul.f32 %v3009, %v3106
  %v3121 = vmul.f32 %v3010, %v3111
  %v3122 = vmul.f32 %v3011, %v3111
  %v3123 = vmul.f32 %v3012, %v3111
  %v3124 = vmul.f32 %v3013, %v3111
  %3126 = vset.pattern.permute.xlu0 1
  %3127 = vperm.xlu0 %3126, %v3095
  %v3128 = vpop.permute.xlu0 %3127
  %3131 = vset.pattern.permute.xlu0 1
  %3132 = vperm.xlu0 %3131, %v3096
  %v3133 = vpop.permute.xlu0 %3132
  %3136 = vset.pattern.permute.xlu0 1
  %3137 = vperm.xlu0 %3136, %v3097
  %v3138 = vpop.permute.xlu0 %3137
  %v3140 = vadd.f32 %v3113, %v3128
  %v3141 = vadd.f32 %v3114, %v3128
  %v3142 = vadd.f32 %v3115, %v3128
  %v3143 = vadd.f32 %v3116, %v3128
  %v3144 = vadd.f32 %v3117, %v3133
  %v3145 = vadd.f32 %v3118, %v3133
  %v3146 = vadd.f32 %v3119, %v3133
  %v3147 = vadd.f32 %v3120, %v3133
  %v3148 = vadd.f32 %v3121, %v3138
  %v3149 = vadd.f32 %v3122, %v3138
  %v3150 = vadd.f32 %v3123, %v3138
  %v3151 = vadd.f32 %v3124, %v3138
  %v3152 = vmax.f32 %v3140, 0.0
  %v3153 = vmax.f32 %v3141, 0.0
  %v3154 = vmax.f32 %v3142, 0.0
  %v3155 = vmax.f32 %v3143, 0.0
  %v3156 = vmax.f32 %v3144, 0.0
  %v3157 = vmax.f32 %v3145, 0.0
  %v3158 = vmax.f32 %v3146, 0.0
  %v3159 = vmax.f32 %v3147, 0.0
  %v3160 = vmax.f32 %v3148, 0.0
  %v3161 = vmax.f32 %v3149, 0.0
  %v3162 = vmax.f32 %v3150, 0.0
  %v3163 = vmax.f32 %v3151, 0.0
  %v3164 = vld [vmem:[%s11] sm:$0xff]
  %v3165 = vld [vmem:[%s11 + $0x8] sm:$0xff]
  %v3166 = vld [vmem:[%s11 + $0x10] sm:$0xff]
  %v3167 = vld [vmem:[%s11 + $0x18] sm:$0xff]
  %vm3168 = vcmask 195584
  %v3170 = vsel %vm3168, %v3164, 0
  %v3173 = vsel %vm3168, %v3165, 0
  %v3176 = vsel %vm3168, %v3166, 0
  %v3179 = vsel %vm3168, %v3167, 0
  %3181 = vmatprep.subr.mxu0 %v3153
  %3182 = vmatpush1.msra.mxu0 %v3152
  %3183 = vmatprep.subr.mxu0 %v3157
  %3184 = vmatpush1.msra.mxu0 %v3156
  %3185 = vmatprep.subr.mxu0 %v3161
  %3186 = vmatpush1.msra.mxu0 %v3160
  %3187 = vmatprep.subr.mxu0 0.0
  %3188 = vmatpush1.msra.mxu0 0.0
  %3189 = vmatprep.subr.mxu0 0.0
  %3190 = vmatpush1.msra.mxu0 0.0
  %3191 = vmatprep.subr.mxu0 0.0
  %3192 = vmatpush1.msra.mxu0 0.0
  %3193 = vmatprep.subr.mxu0 0.0
  %3194 = vmatpush1.msra.mxu0 0.0
  %3195 = vmatprep.subr.mxu0 0.0
  %3196 = vmatpush1.msra.mxu0 0.0
  %3197 = vmatprep.subr.mxu0 0.0
  %3198 = vmatpush1.msra.mxu0 0.0
  %3199 = vmatprep.subr.mxu0 0.0
  %3200 = vmatpush1.msra.mxu0 0.0
  %3201 = vmatprep.subr.mxu0 0.0
  %3202 = vmatpush1.msra.mxu0 0.0
  %3203 = vmatprep.subr.mxu0 0.0
  %3204 = vmatpush1.msra.mxu0 0.0
  %3205 = vmatprep.subr.mxu0 0.0
  %3206 = vmatpush1.msra.mxu0 0.0
  %3207 = vmatprep.subr.mxu0 0.0
  %3208 = vmatpush1.msra.mxu0 0.0
  %3209 = vmatprep.subr.mxu0 0.0
  %3210 = vmatpush1.msra.mxu0 0.0
  %3211 = vmatprep.subr.mxu0 0.0
  %3212 = vmatpush1.msra.mxu0 0.0
  %3213 = vmatprep.subr.mxu0 0.0
  %3214 = vmatpush1.msra.mxu0 0.0
  %3215 = vmatprep.subr.mxu0 0.0
  %3216 = vmatpush1.msra.mxu0 0.0
  %3217 = vmatprep.subr.mxu0 0.0
  %3218 = vmatpush1.msra.mxu0 0.0
  %3219 = vmatprep.subr.mxu0 0.0
  %3220 = vmatpush1.msra.mxu0 0.0
  %3221 = vmatprep.subr.mxu0 0.0
  %3222 = vmatpush1.msra.mxu0 0.0
  %3223 = vmatprep.subr.mxu0 0.0
  %3224 = vmatpush1.msra.mxu0 0.0
  %3225 = vmatprep.subr.mxu0 0.0
  %3226 = vmatpush1.msra.mxu0 0.0
  %3227 = vmatprep.subr.mxu0 0.0
  %3228 = vmatpush1.msra.mxu0 0.0
  %3229 = vmatprep.subr.mxu0 0.0
  %3230 = vmatpush1.msra.mxu0 0.0
  %3231 = vmatprep.subr.mxu0 0.0
  %3232 = vmatpush1.msra.mxu0 0.0
  %3233 = vmatprep.subr.mxu0 0.0
  %3234 = vmatpush1.msra.mxu0 0.0
  %3235 = vmatprep.subr.mxu0 0.0
  %3236 = vmatpush1.msra.mxu0 0.0
  %3237 = vmatprep.subr.mxu0 0.0
  %3238 = vmatpush1.msra.mxu0 0.0
  %3239 = vmatprep.subr.mxu0 0.0
  %3240 = vmatpush1.msra.mxu0 0.0
  %3241 = vmatprep.subr.mxu0 0.0
  %3242 = vmatpush1.msra.mxu0 0.0
  %3243 = vmatprep.subr.mxu0 0.0
  %3244 = vmatpush1.msra.mxu0 0.0
  %3245 = vmatprep.mubr.f32.mxu0 0.0
  %3246 = vmatmul.mubr.f32.gmra.mrb[0].mxu0 %v3170
  %v3247 = vpop.f32.mrb[0].mxu0
  %v3248 = vadd.f32 0.0, %v3247
  %v3249 = vpop.f32.mrb[0].mxu0
  %v3250 = vadd.f32 0.0, %v3249
  %3251 = vmatprep.mubr.f32.mxu0 0.0
  %3252 = vmatmul.mubr.f32.gmra.mrb[0].mxu0 %v3173
  %v3253 = vpop.f32.mrb[0].mxu0
  %v3254 = vadd.f32 0.0, %v3253
  %v3255 = vpop.f32.mrb[0].mxu0
  %v3256 = vadd.f32 0.0, %v3255
  %3257 = vmatprep.mubr.f32.mxu0 0.0
  %3258 = vmatmul.mubr.f32.gmra.mrb[0].mxu0 %v3176
  %v3259 = vpop.f32.mrb[0].mxu0
  %v3260 = vadd.f32 0.0, %v3259
  %v3261 = vpop.f32.mrb[0].mxu0
  %v3262 = vadd.f32 0.0, %v3261
  %3263 = vmatprep.mubr.f32.mxu0 0.0
  %3264 = vmatmul.mubr.f32.gmra.mrb[0].mxu0 %v3179
  %v3265 = vpop.f32.mrb[0].mxu0
  %v3266 = vadd.f32 0.0, %v3265
  %v3267 = vpop.f32.mrb[0].mxu0
  %v3268 = vadd.f32 0.0, %v3267
  %3269 = vdwg.mxu0
  %3270 = vmatprep.subr.mxu0 %v3155
  %3271 = vmatpush1.msra.mxu0 %v3154
  %3272 = vmatprep.subr.mxu0 %v3159
  %3273 = vmatpush1.msra.mxu0 %v3158
  %3274 = vmatprep.subr.mxu0 %v3163
  %3275 = vmatpush1.msra.mxu0 %v3162
  %3276 = vmatprep.subr.mxu0 0.0
  %3277 = vmatpush1.msra.mxu0 0.0
  %3278 = vmatprep.subr.mxu0 0.0
  %3279 = vmatpush1.msra.mxu0 0.0
  %3280 = vmatprep.subr.mxu0 0.0
  %3281 = vmatpush1.msra.mxu0 0.0
  %3282 = vmatprep.subr.mxu0 0.0
  %3283 = vmatpush1.msra.mxu0 0.0
  %3284 = vmatprep.subr.mxu0 0.0
  %3285 = vmatpush1.msra.mxu0 0.0
  %3286 = vmatprep.subr.mxu0 0.0
  %3287 = vmatpush1.msra.mxu0 0.0
  %3288 = vmatprep.subr.mxu0 0.0
  %3289 = vmatpush1.msra.mxu0 0.0
  %3290 = vmatprep.subr.mxu0 0.0
  %3291 = vmatpush1.msra.mxu0 0.0
  %3292 = vmatprep.subr.mxu0 0.0
  %3293 = vmatpush1.msra.mxu0 0.0
  %3294 = vmatprep.subr.mxu0 0.0
  %3295 = vmatpush1.msra.mxu0 0.0
  %3296 = vmatprep.subr.mxu0 0.0
  %3297 = vmatpush1.msra.mxu0 0.0
  %3298 = vmatprep.subr.mxu0 0.0
  %3299 = vmatpush1.msra.mxu0 0.0
  %3300 = vmatprep.subr.mxu0 0.0
  %3301 = vmatpush1.msra.mxu0 0.0
  %3302 = vmatprep.subr.mxu0 0.0
  %3303 = vmatpush1.msra.mxu0 0.0
  %3304 = vmatprep.subr.mxu0 0.0
  %3305 = vmatpush1.msra.mxu0 0.0
  %3306 = vmatprep.subr.mxu0 0.0
  %3307 = vmatpush1.msra.mxu0 0.0
  %3308 = vmatprep.subr.mxu0 0.0
  %3309 = vmatpush1.msra.mxu0 0.0
  %3310 = vmatprep.subr.mxu0 0.0
  %3311 = vmatpush1.msra.mxu0 0.0
  %3312 = vmatprep.subr.mxu0 0.0
  %3313 = vmatpush1.msra.mxu0 0.0
  %3314 = vmatprep.subr.mxu0 0.0
  %3315 = vmatpush1.msra.mxu0 0.0
  %3316 = vmatprep.subr.mxu0 0.0
  %3317 = vmatpush1.msra.mxu0 0.0
  %3318 = vmatprep.subr.mxu0 0.0
  %3319 = vmatpush1.msra.mxu0 0.0
  %3320 = vmatprep.subr.mxu0 0.0
  %3321 = vmatpush1.msra.mxu0 0.0
  %3322 = vmatprep.subr.mxu0 0.0
  %3323 = vmatpush1.msra.mxu0 0.0
  %3324 = vmatprep.subr.mxu0 0.0
  %3325 = vmatpush1.msra.mxu0 0.0
  %3326 = vmatprep.subr.mxu0 0.0
  %3327 = vmatpush1.msra.mxu0 0.0
  %3328 = vmatprep.subr.mxu0 0.0
  %3329 = vmatpush1.msra.mxu0 0.0
  %3330 = vmatprep.subr.mxu0 0.0
  %3331 = vmatpush1.msra.mxu0 0.0
  %3332 = vmatprep.subr.mxu0 0.0
  %3333 = vmatpush1.msra.mxu0 0.0
  %3334 = vmatprep.mubr.f32.mxu0 0.0
  %3335 = vmatmul.mubr.f32.gmra.mrb[0].mxu0 %v3170
  %v3336 = vpop.f32.mrb[0].mxu0
  %v3337 = vadd.f32 0.0, %v3336
  %v3338 = vpop.f32.mrb[0].mxu0
  %v3339 = vadd.f32 0.0, %v3338
  %3340 = vmatprep.mubr.f32.mxu0 0.0
  %3341 = vmatmul.mubr.f32.gmra.mrb[0].mxu0 %v3173
  %v3342 = vpop.f32.mrb[0].mxu0
  %v3343 = vadd.f32 0.0, %v3342
  %v3344 = vpop.f32.mrb[0].mxu0
  %v3345 = vadd.f32 0.0, %v3344
  %3346 = vmatprep.mubr.f32.mxu0 0.0
  %3347 = vmatmul.mubr.f32.gmra.mrb[0].mxu0 %v3176
  %v3348 = vpop.f32.mrb[0].mxu0
  %v3349 = vadd.f32 0.0, %v3348
  %v3350 = vpop.f32.mrb[0].mxu0
  %v3351 = vadd.f32 0.0, %v3350
  %3352 = vmatprep.mubr.f32.mxu0 0.0
  %3353 = vmatmul.mubr.f32.gmra.mrb[0].mxu0 %v3179
  %v3354 = vpop.f32.mrb[0].mxu0
  %v3355 = vadd.f32 0.0, %v3354
  %v3356 = vpop.f32.mrb[0].mxu0
  %v3357 = vadd.f32 0.0, %v3356
  %3358 = vdwg.mxu0
  %v3359 = vadd.f32 %v3248, %v3250
  %v3360 = vadd.f32 %v3359, %v3337
  %v3361 = vadd.f32 %v3360, %v3339
  %3362 = vadd.xlane.f32.xlu0 %v3361
  %v3363 = vpop.xlane.xlu0 %3362
  %v3364 = vadd.f32 %v3254, %v3256
  %v3365 = vadd.f32 %v3364, %v3343
  %v3366 = vadd.f32 %v3365, %v3345
  %3367 = vadd.xlane.f32.xlu0 %v3366
  %v3368 = vpop.xlane.xlu0 %3367
  %v3369 = vadd.f32 %v3260, %v3262
  %v3370 = vadd.f32 %v3369, %v3349
  %v3371 = vadd.f32 %v3370, %v3351
  %3372 = vadd.xlane.f32.xlu0 %v3371
  %v3373 = vpop.xlane.xlu0 %3372
  %v3374 = vadd.f32 %v3266, %v3268
  %v3375 = vadd.f32 %v3374, %v3355
  %v3376 = vadd.f32 %v3375, %v3357
  %3377 = vadd.xlane.f32.xlu0 %v3376
  %v3378 = vpop.xlane.xlu0 %3377
  %v3379 = vmul.f32 %v3363, %v64
  %v3380 = vmul.f32 %v3368, %v64
  %v3381 = vmul.f32 %v3373, %v64
  %v3382 = vmul.f32 %v3378, %v64
  %v3383 = vmul.f32 %v3248, %v3248
  %v3384 = vmul.f32 %v3250, %v3250
  %v3385 = vmul.f32 %v3337, %v3337
  %v3386 = vmul.f32 %v3339, %v3339
  %v3387 = vmul.f32 %v3254, %v3254
  %v3388 = vmul.f32 %v3256, %v3256
  %v3389 = vmul.f32 %v3343, %v3343
  %v3390 = vmul.f32 %v3345, %v3345
  %v3391 = vmul.f32 %v3260, %v3260
  %v3392 = vmul.f32 %v3262, %v3262
  %v3393 = vmul.f32 %v3349, %v3349
  %v3394 = vmul.f32 %v3351, %v3351
  %v3395 = vmul.f32 %v3266, %v3266
  %v3396 = vmul.f32 %v3268, %v3268
  %v3397 = vmul.f32 %v3355, %v3355
  %v3398 = vmul.f32 %v3357, %v3357
  %v3399 = vadd.f32 %v3383, %v3384
  %v3400 = vadd.f32 %v3399, %v3385
  %v3401 = vadd.f32 %v3400, %v3386
  %3402 = vadd.xlane.f32.xlu0 %v3401
  %v3403 = vpop.xlane.xlu0 %3402
  %v3404 = vadd.f32 %v3387, %v3388
  %v3405 = vadd.f32 %v3404, %v3389
  %v3406 = vadd.f32 %v3405, %v3390
  %3407 = vadd.xlane.f32.xlu0 %v3406
  %v3408 = vpop.xlane.xlu0 %3407
  %v3409 = vadd.f32 %v3391, %v3392
  %v3410 = vadd.f32 %v3409, %v3393
  %v3411 = vadd.f32 %v3410, %v3394
  %3412 = vadd.xlane.f32.xlu0 %v3411
  %v3413 = vpop.xlane.xlu0 %3412
  %v3414 = vadd.f32 %v3395, %v3396
  %v3415 = vadd.f32 %v3414, %v3397
  %v3416 = vadd.f32 %v3415, %v3398
  %3417 = vadd.xlane.f32.xlu0 %v3416
  %v3418 = vpop.xlane.xlu0 %3417
  %v3419 = vmul.f32 %v3403, %v64
  %v3420 = vmul.f32 %v3408, %v64
  %v3421 = vmul.f32 %v3413, %v64
  %v3422 = vmul.f32 %v3418, %v64
  %v3423 = vmul.f32 %v3379, %v3379
  %v3424 = vmul.f32 %v3380, %v3380
  %v3425 = vmul.f32 %v3381, %v3381
  %v3426 = vmul.f32 %v3382, %v3382
  %v3427 = vsub.f32 %v3419, %v3423
  %v3428 = vsub.f32 %v3420, %v3424
  %v3429 = vsub.f32 %v3421, %v3425
  %v3430 = vsub.f32 %v3422, %v3426
  %v3431 = vld [vmem:[%s12] sm:$0xff]
  %v3432 = vld [vmem:[%s12 + $0x8] sm:$0xff]
  %v3433 = vld [vmem:[%s12 + $0x10] sm:$0xff]
  %v3434 = vld [vmem:[%s12 + $0x18] sm:$0xff]
  %v3435 = vadd.f32 %v3427, 1e-05
  %v3436 = vadd.f32 %v3428, 1e-05
  %v3437 = vadd.f32 %v3429, 1e-05
  %v3438 = vadd.f32 %v3430, 1e-05
  %v3439 = vrsqrt.pop %v3435
  %v3440 = vrsqrt.pop %v3436
  %v3441 = vrsqrt.pop %v3437
  %v3442 = vrsqrt.pop %v3438
  %v3443 = vmul.f32 %v3431, %v3439
  %v3444 = vmul.f32 %v3432, %v3440
  %v3445 = vmul.f32 %v3433, %v3441
  %v3446 = vmul.f32 %v3434, %v3442
  %v3447 = vmul.f32 %v3379, %v3443
  %v3448 = vmul.f32 %v3380, %v3444
  %v3449 = vmul.f32 %v3381, %v3445
  %v3450 = vmul.f32 %v3382, %v3446
  %3455 = vrot.lane.b32.xlu0 %v3447, 1
  %v3456 = vpop.permute.xlu0 %3455
  %3457 = vrot.lane.b32.xlu0 %v3448, 1
  %v3458 = vpop.permute.xlu0 %3457
  %3459 = vrot.lane.b32.xlu0 %v3449, 1
  %v3460 = vpop.permute.xlu0 %3459
  %3461 = vrot.lane.b32.xlu0 %v3450, 1
  %v3462 = vpop.permute.xlu0 %3461
  %v3467 = vsub.f32 %v3431, %v3456
  %v3468 = vsub.f32 %v3432, %v3458
  %v3469 = vsub.f32 %v3433, %v3460
  %v3470 = vsub.f32 %v3434, %v3462
  %3472 = vset.pattern.permute.xlu0 0
  %3473 = vperm.xlu0 %3472, %v3443
  %v3474 = vpop.permute.xlu0 %3473
  %3477 = vset.pattern.permute.xlu0 0
  %3478 = vperm.xlu0 %3477, %v3444
  %v3479 = vpop.permute.xlu0 %3478
  %3482 = vset.pattern.permute.xlu0 0
  %3483 = vperm.xlu0 %3482, %v3445
  %v3484 = vpop.permute.xlu0 %3483
  %3487 = vset.pattern.permute.xlu0 0
  %3488 = vperm.xlu0 %3487, %v3446
  %v3489 = vpop.permute.xlu0 %3488
  %v3491 = vmul.f32 %v3248, %v3474
  %v3492 = vmul.f32 %v3250, %v3474
  %v3493 = vmul.f32 %v3337, %v3474
  %v3494 = vmul.f32 %v3339, %v3474
  %v3495 = vmul.f32 %v3254, %v3479
  %v3496 = vmul.f32 %v3256, %v3479
  %v3497 = vmul.f32 %v3343, %v3479
  %v3498 = vmul.f32 %v3345, %v3479
  %v3499 = vmul.f32 %v3260, %v3484
  %v3500 = vmul.f32 %v3262, %v3484
  %v3501 = vmul.f32 %v3349, %v3484
  %v3502 = vmul.f32 %v3351, %v3484
  %v3503 = vmul.f32 %v3266, %v3489
  %v3504 = vmul.f32 %v3268, %v3489
  %v3505 = vmul.f32 %v3355, %v3489
  %v3506 = vmul.f32 %v3357, %v3489
  %3508 = vset.pattern.permute.xlu0 1
  %3509 = vperm.xlu0 %3508, %v3467
  %v3510 = vpop.permute.xlu0 %3509
  %3513 = vset.pattern.permute.xlu0 1
  %3514 = vperm.xlu0 %3513, %v3468
  %v3515 = vpop.permute.xlu0 %3514
  %3518 = vset.pattern.permute.xlu0 1
  %3519 = vperm.xlu0 %3518, %v3469
  %v3520 = vpop.permute.xlu0 %3519
  %3523 = vset.pattern.permute.xlu0 1
  %3524 = vperm.xlu0 %3523, %v3470
  %v3525 = vpop.permute.xlu0 %3524
  %v3527 = vadd.f32 %v3491, %v3510
  %v3528 = vadd.f32 %v3492, %v3510
  %v3529 = vadd.f32 %v3493, %v3510
  %v3530 = vadd.f32 %v3494, %v3510
  %v3531 = vadd.f32 %v3495, %v3515
  %v3532 = vadd.f32 %v3496, %v3515
  %v3533 = vadd.f32 %v3497, %v3515
  %v3534 = vadd.f32 %v3498, %v3515
  %v3535 = vadd.f32 %v3499, %v3520
  %v3536 = vadd.f32 %v3500, %v3520
  %v3537 = vadd.f32 %v3501, %v3520
  %v3538 = vadd.f32 %v3502, %v3520
  %v3539 = vadd.f32 %v3503, %v3525
  %v3540 = vadd.f32 %v3504, %v3525
  %v3541 = vadd.f32 %v3505, %v3525
  %v3542 = vadd.f32 %v3506, %v3525
  %v3543 = vmax.f32 %v3527, 0.0
  %v3544 = vmax.f32 %v3528, 0.0
  %v3545 = vmax.f32 %v3529, 0.0
  %v3546 = vmax.f32 %v3530, 0.0
  %v3547 = vmax.f32 %v3531, 0.0
  %v3548 = vmax.f32 %v3532, 0.0
  %v3549 = vmax.f32 %v3533, 0.0
  %v3550 = vmax.f32 %v3534, 0.0
  %v3551 = vmax.f32 %v3535, 0.0
  %v3552 = vmax.f32 %v3536, 0.0
  %v3553 = vmax.f32 %v3537, 0.0
  %v3554 = vmax.f32 %v3538, 0.0
  %v3555 = vmax.f32 %v3539, 0.0
  %v3556 = vmax.f32 %v3540, 0.0
  %v3557 = vmax.f32 %v3541, 0.0
  %v3558 = vmax.f32 %v3542, 0.0
  %3559 = vrot.lane.b32.xlu0 %v3543, 17
  %v3560 = vpop.permute.xlu0 %3559
  %3561 = vrot.lane.b32.xlu0 %v3547, 17
  %v3562 = vpop.permute.xlu0 %3561
  %3563 = vrot.lane.b32.xlu0 %v3551, 17
  %v3564 = vpop.permute.xlu0 %3563
  %3565 = vrot.lane.b32.xlu0 %v3555, 17
  %v3566 = vpop.permute.xlu0 %3565
  %3567 = vrot.lane.b32.xlu0 %v3544, 17
  %v3568 = vpop.permute.xlu0 %3567
  %3569 = vrot.lane.b32.xlu0 %v3548, 17
  %v3570 = vpop.permute.xlu0 %3569
  %3571 = vrot.lane.b32.xlu0 %v3552, 17
  %v3572 = vpop.permute.xlu0 %3571
  %3573 = vrot.lane.b32.xlu0 %v3556, 17
  %v3574 = vpop.permute.xlu0 %3573
  %3575 = vrot.lane.b32.xlu0 %v3545, 17
  %v3576 = vpop.permute.xlu0 %3575
  %3577 = vrot.lane.b32.xlu0 %v3549, 17
  %v3578 = vpop.permute.xlu0 %3577
  %3579 = vrot.lane.b32.xlu0 %v3553, 17
  %v3580 = vpop.permute.xlu0 %3579
  %3581 = vrot.lane.b32.xlu0 %v3557, 17
  %v3582 = vpop.permute.xlu0 %3581
  %3583 = vrot.lane.b32.xlu0 %v3546, 17
  %v3584 = vpop.permute.xlu0 %3583
  %3585 = vrot.lane.b32.xlu0 %v3550, 17
  %v3586 = vpop.permute.xlu0 %3585
  %3587 = vrot.lane.b32.xlu0 %v3554, 17
  %v3588 = vpop.permute.xlu0 %3587
  %3589 = vrot.lane.b32.xlu0 %v3558, 17
  %v3590 = vpop.permute.xlu0 %3589
  %v3591 = vsel %vm539, %v3576, %v3584
  %v3592 = vsel %vm539, %v3578, %v3586
  %v3593 = vsel %vm539, %v3580, %v3588
  %v3594 = vsel %vm539, %v3582, %v3590
  %v3595 = vsel %vm539, %v3568, %v3576
  %v3596 = vsel %vm539, %v3570, %v3578
  %v3597 = vsel %vm539, %v3572, %v3580
  %v3598 = vsel %vm539, %v3574, %v3582
  %v3599 = vsel %vm539, %v3560, %v3568
  %v3600 = vsel %vm539, %v3562, %v3570
  %v3601 = vsel %vm539, %v3564, %v3572
  %v3602 = vsel %vm539, %v3566, %v3574
  %v3603 = vsel %vm539, %v3584, %v3560
  %v3604 = vsel %vm539, %v3586, %v3562
  %v3605 = vsel %vm539, %v3588, %v3564
  %v3606 = vsel %vm539, %v3590, %v3566
  %v3607 = vld [vmem:[%s1] ss:$8 sm:$0xf]
  %v3609 = vlaneseq
  %v3610 = vshrl.u32 %v3609, 7
  %v3611 = vsub.s32 0, %v3610
  %v3612 = vrot.slane %v3607, %v3611
  %v3613 = vlaneseq
  %v3614 = vshrl.u32 %v3613, 7
  %v3615 = vsub.s32 1, %v3614
  %v3616 = vrot.slane %v3607, %v3615
  %v3617 = vlaneseq
  %v3618 = vshrl.u32 %v3617, 7
  %v3619 = vsub.s32 2, %v3618
  %v3620 = vrot.slane %v3607, %v3619
  %v3621 = vlaneseq
  %v3622 = vshrl.u32 %v3621, 7
  %v3623 = vsub.s32 3, %v3622
  %v3624 = vrot.slane %v3607, %v3623
  %v3629 = vmul.f32 %v3603, %v3612
  %v3630 = vmul.f32 %v3599, %v3616
  %v3631 = vmul.f32 %v3595, %v3620
  %v3632 = vmul.f32 %v3591, %v3624
  %v3633 = vmul.f32 %v3604, %v3612
  %v3634 = vmul.f32 %v3600, %v3616
  %v3635 = vmul.f32 %v3596, %v3620
  %v3636 = vmul.f32 %v3592, %v3624
  %v3637 = vmul.f32 %v3605, %v3612
  %v3638 = vmul.f32 %v3601, %v3616
  %v3639 = vmul.f32 %v3597, %v3620
  %v3640 = vmul.f32 %v3593, %v3624
  %v3641 = vmul.f32 %v3606, %v3612
  %v3642 = vmul.f32 %v3602, %v3616
  %v3643 = vmul.f32 %v3598, %v3620
  %v3644 = vmul.f32 %v3594, %v3624
  %3645 = vrot.lane.b32.xlu0 %v3543, 16
  %v3646 = vpop.permute.xlu0 %3645
  %3647 = vrot.lane.b32.xlu0 %v3547, 16
  %v3648 = vpop.permute.xlu0 %3647
  %3649 = vrot.lane.b32.xlu0 %v3551, 16
  %v3650 = vpop.permute.xlu0 %3649
  %3651 = vrot.lane.b32.xlu0 %v3555, 16
  %v3652 = vpop.permute.xlu0 %3651
  %3653 = vrot.lane.b32.xlu0 %v3544, 16
  %v3654 = vpop.permute.xlu0 %3653
  %3655 = vrot.lane.b32.xlu0 %v3548, 16
  %v3656 = vpop.permute.xlu0 %3655
  %3657 = vrot.lane.b32.xlu0 %v3552, 16
  %v3658 = vpop.permute.xlu0 %3657
  %3659 = vrot.lane.b32.xlu0 %v3556, 16
  %v3660 = vpop.permute.xlu0 %3659
  %3661 = vrot.lane.b32.xlu0 %v3545, 16
  %v3662 = vpop.permute.xlu0 %3661
  %3663 = vrot.lane.b32.xlu0 %v3549, 16
  %v3664 = vpop.permute.xlu0 %3663
  %3665 = vrot.lane.b32.xlu0 %v3553, 16
  %v3666 = vpop.permute.xlu0 %3665
  %3667 = vrot.lane.b32.xlu0 %v3557, 16
  %v3668 = vpop.permute.xlu0 %3667
  %3669 = vrot.lane.b32.xlu0 %v3546, 16
  %v3670 = vpop.permute.xlu0 %3669
  %3671 = vrot.lane.b32.xlu0 %v3550, 16
  %v3672 = vpop.permute.xlu0 %3671
  %3673 = vrot.lane.b32.xlu0 %v3554, 16
  %v3674 = vpop.permute.xlu0 %3673
  %3675 = vrot.lane.b32.xlu0 %v3558, 16
  %v3676 = vpop.permute.xlu0 %3675
  %v3677 = vsel %vm626, %v3662, %v3670
  %v3678 = vsel %vm626, %v3664, %v3672
  %v3679 = vsel %vm626, %v3666, %v3674
  %v3680 = vsel %vm626, %v3668, %v3676
  %v3681 = vsel %vm626, %v3654, %v3662
  %v3682 = vsel %vm626, %v3656, %v3664
  %v3683 = vsel %vm626, %v3658, %v3666
  %v3684 = vsel %vm626, %v3660, %v3668
  %v3685 = vsel %vm626, %v3646, %v3654
  %v3686 = vsel %vm626, %v3648, %v3656
  %v3687 = vsel %vm626, %v3650, %v3658
  %v3688 = vsel %vm626, %v3652, %v3660
  %v3689 = vsel %vm626, %v3670, %v3646
  %v3690 = vsel %vm626, %v3672, %v3648
  %v3691 = vsel %vm626, %v3674, %v3650
  %v3692 = vsel %vm626, %v3676, %v3652
  %v3693 = vld [vmem:[%s643] ss:$8 sm:$0xf]
  %v3695 = vlaneseq
  %v3696 = vshrl.u32 %v3695, 7
  %v3697 = vsub.s32 0, %v3696
  %v3698 = vrot.slane %v3693, %v3697
  %v3699 = vlaneseq
  %v3700 = vshrl.u32 %v3699, 7
  %v3701 = vsub.s32 1, %v3700
  %v3702 = vrot.slane %v3693, %v3701
  %v3703 = vlaneseq
  %v3704 = vshrl.u32 %v3703, 7
  %v3705 = vsub.s32 2, %v3704
  %v3706 = vrot.slane %v3693, %v3705
  %v3707 = vlaneseq
  %v3708 = vshrl.u32 %v3707, 7
  %v3709 = vsub.s32 3, %v3708
  %v3710 = vrot.slane %v3693, %v3709
  %v3715 = vmul.f32 %v3689, %v3698
  %v3716 = vmul.f32 %v3685, %v3702
  %v3717 = vmul.f32 %v3681, %v3706
  %v3718 = vmul.f32 %v3677, %v3710
  %v3719 = vmul.f32 %v3690, %v3698
  %v3720 = vmul.f32 %v3686, %v3702
  %v3721 = vmul.f32 %v3682, %v3706
  %v3722 = vmul.f32 %v3678, %v3710
  %v3723 = vmul.f32 %v3691, %v3698
  %v3724 = vmul.f32 %v3687, %v3702
  %v3725 = vmul.f32 %v3683, %v3706
  %v3726 = vmul.f32 %v3679, %v3710
  %v3727 = vmul.f32 %v3692, %v3698
  %v3728 = vmul.f32 %v3688, %v3702
  %v3729 = vmul.f32 %v3684, %v3706
  %v3730 = vmul.f32 %v3680, %v3710
  %3731 = vrot.lane.b32.xlu0 %v3543, 15
  %v3732 = vpop.permute.xlu0 %3731
  %3733 = vrot.lane.b32.xlu0 %v3547, 15
  %v3734 = vpop.permute.xlu0 %3733
  %3735 = vrot.lane.b32.xlu0 %v3551, 15
  %v3736 = vpop.permute.xlu0 %3735
  %3737 = vrot.lane.b32.xlu0 %v3555, 15
  %v3738 = vpop.permute.xlu0 %3737
  %3739 = vrot.lane.b32.xlu0 %v3544, 15
  %v3740 = vpop.permute.xlu0 %3739
  %3741 = vrot.lane.b32.xlu0 %v3548, 15
  %v3742 = vpop.permute.xlu0 %3741
  %3743 = vrot.lane.b32.xlu0 %v3552, 15
  %v3744 = vpop.permute.xlu0 %3743
  %3745 = vrot.lane.b32.xlu0 %v3556, 15
  %v3746 = vpop.permute.xlu0 %3745
  %3747 = vrot.lane.b32.xlu0 %v3545, 15
  %v3748 = vpop.permute.xlu0 %3747
  %3749 = vrot.lane.b32.xlu0 %v3549, 15
  %v3750 = vpop.permute.xlu0 %3749
  %3751 = vrot.lane.b32.xlu0 %v3553, 15
  %v3752 = vpop.permute.xlu0 %3751
  %3753 = vrot.lane.b32.xlu0 %v3557, 15
  %v3754 = vpop.permute.xlu0 %3753
  %3755 = vrot.lane.b32.xlu0 %v3546, 15
  %v3756 = vpop.permute.xlu0 %3755
  %3757 = vrot.lane.b32.xlu0 %v3550, 15
  %v3758 = vpop.permute.xlu0 %3757
  %3759 = vrot.lane.b32.xlu0 %v3554, 15
  %v3760 = vpop.permute.xlu0 %3759
  %3761 = vrot.lane.b32.xlu0 %v3558, 15
  %v3762 = vpop.permute.xlu0 %3761
  %v3763 = vsel %vm714, %v3748, %v3756
  %v3764 = vsel %vm714, %v3750, %v3758
  %v3765 = vsel %vm714, %v3752, %v3760
  %v3766 = vsel %vm714, %v3754, %v3762
  %v3767 = vsel %vm714, %v3740, %v3748
  %v3768 = vsel %vm714, %v3742, %v3750
  %v3769 = vsel %vm714, %v3744, %v3752
  %v3770 = vsel %vm714, %v3746, %v3754
  %v3771 = vsel %vm714, %v3732, %v3740
  %v3772 = vsel %vm714, %v3734, %v3742
  %v3773 = vsel %vm714, %v3736, %v3744
  %v3774 = vsel %vm714, %v3738, %v3746
  %v3775 = vsel %vm714, %v3756, %v3732
  %v3776 = vsel %vm714, %v3758, %v3734
  %v3777 = vsel %vm714, %v3760, %v3736
  %v3778 = vsel %vm714, %v3762, %v3738
  %v3779 = vld [vmem:[%s731] ss:$8 sm:$0xf]
  %v3781 = vlaneseq
  %v3782 = vshrl.u32 %v3781, 7
  %v3783 = vsub.s32 0, %v3782
  %v3784 = vrot.slane %v3779, %v3783
  %v3785 = vlaneseq
  %v3786 = vshrl.u32 %v3785, 7
  %v3787 = vsub.s32 1, %v3786
  %v3788 = vrot.slane %v3779, %v3787
  %v3789 = vlaneseq
  %v3790 = vshrl.u32 %v3789, 7
  %v3791 = vsub.s32 2, %v3790
  %v3792 = vrot.slane %v3779, %v3791
  %v3793 = vlaneseq
  %v3794 = vshrl.u32 %v3793, 7
  %v3795 = vsub.s32 3, %v3794
  %v3796 = vrot.slane %v3779, %v3795
  %v3801 = vmul.f32 %v3775, %v3784
  %v3802 = vmul.f32 %v3771, %v3788
  %v3803 = vmul.f32 %v3767, %v3792
  %v3804 = vmul.f32 %v3763, %v3796
  %v3805 = vmul.f32 %v3776, %v3784
  %v3806 = vmul.f32 %v3772, %v3788
  %v3807 = vmul.f32 %v3768, %v3792
  %v3808 = vmul.f32 %v3764, %v3796
  %v3809 = vmul.f32 %v3777, %v3784
  %v3810 = vmul.f32 %v3773, %v3788
  %v3811 = vmul.f32 %v3769, %v3792
  %v3812 = vmul.f32 %v3765, %v3796
  %v3813 = vmul.f32 %v3778, %v3784
  %v3814 = vmul.f32 %v3774, %v3788
  %v3815 = vmul.f32 %v3770, %v3792
  %v3816 = vmul.f32 %v3766, %v3796
  %3817 = vrot.lane.b32.xlu0 %v3543, 1
  %v3818 = vpop.permute.xlu0 %3817
  %3819 = vrot.lane.b32.xlu0 %v3547, 1
  %v3820 = vpop.permute.xlu0 %3819
  %3821 = vrot.lane.b32.xlu0 %v3551, 1
  %v3822 = vpop.permute.xlu0 %3821
  %3823 = vrot.lane.b32.xlu0 %v3555, 1
  %v3824 = vpop.permute.xlu0 %3823
  %3825 = vrot.lane.b32.xlu0 %v3544, 1
  %v3826 = vpop.permute.xlu0 %3825
  %3827 = vrot.lane.b32.xlu0 %v3548, 1
  %v3828 = vpop.permute.xlu0 %3827
  %3829 = vrot.lane.b32.xlu0 %v3552, 1
  %v3830 = vpop.permute.xlu0 %3829
  %3831 = vrot.lane.b32.xlu0 %v3556, 1
  %v3832 = vpop.permute.xlu0 %3831
  %3833 = vrot.lane.b32.xlu0 %v3545, 1
  %v3834 = vpop.permute.xlu0 %3833
  %3835 = vrot.lane.b32.xlu0 %v3549, 1
  %v3836 = vpop.permute.xlu0 %3835
  %3837 = vrot.lane.b32.xlu0 %v3553, 1
  %v3838 = vpop.permute.xlu0 %3837
  %3839 = vrot.lane.b32.xlu0 %v3557, 1
  %v3840 = vpop.permute.xlu0 %3839
  %3841 = vrot.lane.b32.xlu0 %v3546, 1
  %v3842 = vpop.permute.xlu0 %3841
  %3843 = vrot.lane.b32.xlu0 %v3550, 1
  %v3844 = vpop.permute.xlu0 %3843
  %3845 = vrot.lane.b32.xlu0 %v3554, 1
  %v3846 = vpop.permute.xlu0 %3845
  %3847 = vrot.lane.b32.xlu0 %v3558, 1
  %v3848 = vpop.permute.xlu0 %3847
  %v3849 = vsel %vm802, %v3834, %v3842
  %v3850 = vsel %vm802, %v3836, %v3844
  %v3851 = vsel %vm802, %v3838, %v3846
  %v3852 = vsel %vm802, %v3840, %v3848
  %v3853 = vsel %vm802, %v3826, %v3834
  %v3854 = vsel %vm802, %v3828, %v3836
  %v3855 = vsel %vm802, %v3830, %v3838
  %v3856 = vsel %vm802, %v3832, %v3840
  %v3857 = vsel %vm802, %v3818, %v3826
  %v3858 = vsel %vm802, %v3820, %v3828
  %v3859 = vsel %vm802, %v3822, %v3830
  %v3860 = vsel %vm802, %v3824, %v3832
  %v3861 = vsel %vm802, %v3842, %v3818
  %v3862 = vsel %vm802, %v3844, %v3820
  %v3863 = vsel %vm802, %v3846, %v3822
  %v3864 = vsel %vm802, %v3848, %v3824
  %v3865 = vld [vmem:[%s819] ss:$8 sm:$0xf]
  %v3867 = vlaneseq
  %v3868 = vshrl.u32 %v3867, 7
  %v3869 = vsub.s32 0, %v3868
  %v3870 = vrot.slane %v3865, %v3869
  %v3871 = vlaneseq
  %v3872 = vshrl.u32 %v3871, 7
  %v3873 = vsub.s32 1, %v3872
  %v3874 = vrot.slane %v3865, %v3873
  %v3875 = vlaneseq
  %v3876 = vshrl.u32 %v3875, 7
  %v3877 = vsub.s32 2, %v3876
  %v3878 = vrot.slane %v3865, %v3877
  %v3879 = vlaneseq
  %v3880 = vshrl.u32 %v3879, 7
  %v3881 = vsub.s32 3, %v3880
  %v3882 = vrot.slane %v3865, %v3881
  %v3887 = vmul.f32 %v3861, %v3870
  %v3888 = vmul.f32 %v3857, %v3874
  %v3889 = vmul.f32 %v3853, %v3878
  %v3890 = vmul.f32 %v3849, %v3882
  %v3891 = vmul.f32 %v3862, %v3870
  %v3892 = vmul.f32 %v3858, %v3874
  %v3893 = vmul.f32 %v3854, %v3878
  %v3894 = vmul.f32 %v3850, %v3882
  %v3895 = vmul.f32 %v3863, %v3870
  %v3896 = vmul.f32 %v3859, %v3874
  %v3897 = vmul.f32 %v3855, %v3878
  %v3898 = vmul.f32 %v3851, %v3882
  %v3899 = vmul.f32 %v3864, %v3870
  %v3900 = vmul.f32 %v3860, %v3874
  %v3901 = vmul.f32 %v3856, %v3878
  %v3902 = vmul.f32 %v3852, %v3882
  %3903 = vrot.lane.b32.xlu0 %v3543, 127
  %v3904 = vpop.permute.xlu0 %3903
  %3905 = vrot.lane.b32.xlu0 %v3547, 127
  %v3906 = vpop.permute.xlu0 %3905
  %3907 = vrot.lane.b32.xlu0 %v3551, 127
  %v3908 = vpop.permute.xlu0 %3907
  %3909 = vrot.lane.b32.xlu0 %v3555, 127
  %v3910 = vpop.permute.xlu0 %3909
  %3911 = vrot.lane.b32.xlu0 %v3544, 127
  %v3912 = vpop.permute.xlu0 %3911
  %3913 = vrot.lane.b32.xlu0 %v3548, 127
  %v3914 = vpop.permute.xlu0 %3913
  %3915 = vrot.lane.b32.xlu0 %v3552, 127
  %v3916 = vpop.permute.xlu0 %3915
  %3917 = vrot.lane.b32.xlu0 %v3556, 127
  %v3918 = vpop.permute.xlu0 %3917
  %3919 = vrot.lane.b32.xlu0 %v3545, 127
  %v3920 = vpop.permute.xlu0 %3919
  %3921 = vrot.lane.b32.xlu0 %v3549, 127
  %v3922 = vpop.permute.xlu0 %3921
  %3923 = vrot.lane.b32.xlu0 %v3553, 127
  %v3924 = vpop.permute.xlu0 %3923
  %3925 = vrot.lane.b32.xlu0 %v3557, 127
  %v3926 = vpop.permute.xlu0 %3925
  %3927 = vrot.lane.b32.xlu0 %v3546, 127
  %v3928 = vpop.permute.xlu0 %3927
  %3929 = vrot.lane.b32.xlu0 %v3550, 127
  %v3930 = vpop.permute.xlu0 %3929
  %3931 = vrot.lane.b32.xlu0 %v3554, 127
  %v3932 = vpop.permute.xlu0 %3931
  %3933 = vrot.lane.b32.xlu0 %v3558, 127
  %v3934 = vpop.permute.xlu0 %3933
  %v3935 = vsel %vm890, %v3920, %v3928
  %v3936 = vsel %vm890, %v3922, %v3930
  %v3937 = vsel %vm890, %v3924, %v3932
  %v3938 = vsel %vm890, %v3926, %v3934
  %v3939 = vsel %vm890, %v3912, %v3920
  %v3940 = vsel %vm890, %v3914, %v3922
  %v3941 = vsel %vm890, %v3916, %v3924
  %v3942 = vsel %vm890, %v3918, %v3926
  %v3943 = vsel %vm890, %v3904, %v3912
  %v3944 = vsel %vm890, %v3906, %v3914
  %v3945 = vsel %vm890, %v3908, %v3916
  %v3946 = vsel %vm890, %v3910, %v3918
  %v3947 = vsel %vm890, %v3928, %v3904
  %v3948 = vsel %vm890, %v3930, %v3906
  %v3949 = vsel %vm890, %v3932, %v3908
  %v3950 = vsel %vm890, %v3934, %v3910
  %v3951 = vld [vmem:[%s907] ss:$8 sm:$0xf]
  %v3953 = vlaneseq
  %v3954 = vshrl.u32 %v3953, 7
  %v3955 = vsub.s32 0, %v3954
  %v3956 = vrot.slane %v3951, %v3955
  %v3957 = vlaneseq
  %v3958 = vshrl.u32 %v3957, 7
  %v3959 = vsub.s32 1, %v3958
  %v3960 = vrot.slane %v3951, %v3959
  %v3961 = vlaneseq
  %v3962 = vshrl.u32 %v3961, 7
  %v3963 = vsub.s32 2, %v3962
  %v3964 = vrot.slane %v3951, %v3963
  %v3965 = vlaneseq
  %v3966 = vshrl.u32 %v3965, 7
  %v3967 = vsub.s32 3, %v3966
  %v3968 = vrot.slane %v3951, %v3967
  %v3973 = vmul.f32 %v3943, %v3956
  %v3974 = vmul.f32 %v3939, %v3960
  %v3975 = vmul.f32 %v3935, %v3964
  %v3976 = vmul.f32 %v3947, %v3968
  %v3977 = vmul.f32 %v3944, %v3956
  %v3978 = vmul.f32 %v3940, %v3960
  %v3979 = vmul.f32 %v3936, %v3964
  %v3980 = vmul.f32 %v3948, %v3968
  %v3981 = vmul.f32 %v3945, %v3956
  %v3982 = vmul.f32 %v3941, %v3960
  %v3983 = vmul.f32 %v3937, %v3964
  %v3984 = vmul.f32 %v3949, %v3968
  %v3985 = vmul.f32 %v3946, %v3956
  %v3986 = vmul.f32 %v3942, %v3960
  %v3987 = vmul.f32 %v3938, %v3964
  %v3988 = vmul.f32 %v3950, %v3968
  %3989 = vrot.lane.b32.xlu0 %v3543, 113
  %v3990 = vpop.permute.xlu0 %3989
  %3991 = vrot.lane.b32.xlu0 %v3547, 113
  %v3992 = vpop.permute.xlu0 %3991
  %3993 = vrot.lane.b32.xlu0 %v3551, 113
  %v3994 = vpop.permute.xlu0 %3993
  %3995 = vrot.lane.b32.xlu0 %v3555, 113
  %v3996 = vpop.permute.xlu0 %3995
  %3997 = vrot.lane.b32.xlu0 %v3544, 113
  %v3998 = vpop.permute.xlu0 %3997
  %3999 = vrot.lane.b32.xlu0 %v3548, 113
  %v4000 = vpop.permute.xlu0 %3999
  %4001 = vrot.lane.b32.xlu0 %v3552, 113
  %v4002 = vpop.permute.xlu0 %4001
  %4003 = vrot.lane.b32.xlu0 %v3556, 113
  %v4004 = vpop.permute.xlu0 %4003
  %4005 = vrot.lane.b32.xlu0 %v3545, 113
  %v4006 = vpop.permute.xlu0 %4005
  %4007 = vrot.lane.b32.xlu0 %v3549, 113
  %v4008 = vpop.permute.xlu0 %4007
  %4009 = vrot.lane.b32.xlu0 %v3553, 113
  %v4010 = vpop.permute.xlu0 %4009
  %4011 = vrot.lane.b32.xlu0 %v3557, 113
  %v4012 = vpop.permute.xlu0 %4011
  %4013 = vrot.lane.b32.xlu0 %v3546, 113
  %v4014 = vpop.permute.xlu0 %4013
  %4015 = vrot.lane.b32.xlu0 %v3550, 113
  %v4016 = vpop.permute.xlu0 %4015
  %4017 = vrot.lane.b32.xlu0 %v3554, 113
  %v4018 = vpop.permute.xlu0 %4017
  %4019 = vrot.lane.b32.xlu0 %v3558, 113
  %v4020 = vpop.permute.xlu0 %4019
  %v4021 = vsel %vm978, %v4006, %v4014
  %v4022 = vsel %vm978, %v4008, %v4016
  %v4023 = vsel %vm978, %v4010, %v4018
  %v4024 = vsel %vm978, %v4012, %v4020
  %v4025 = vsel %vm978, %v3998, %v4006
  %v4026 = vsel %vm978, %v4000, %v4008
  %v4027 = vsel %vm978, %v4002, %v4010
  %v4028 = vsel %vm978, %v4004, %v4012
  %v4029 = vsel %vm978, %v3990, %v3998
  %v4030 = vsel %vm978, %v3992, %v4000
  %v4031 = vsel %vm978, %v3994, %v4002
  %v4032 = vsel %vm978, %v3996, %v4004
  %v4033 = vsel %vm978, %v4014, %v3990
  %v4034 = vsel %vm978, %v4016, %v3992
  %v4035 = vsel %vm978, %v4018, %v3994
  %v4036 = vsel %vm978, %v4020, %v3996
  %v4037 = vld [vmem:[%s995] ss:$8 sm:$0xf]
  %v4039 = vlaneseq
  %v4040 = vshrl.u32 %v4039, 7
  %v4041 = vsub.s32 0, %v4040
  %v4042 = vrot.slane %v4037, %v4041
  %v4043 = vlaneseq
  %v4044 = vshrl.u32 %v4043, 7
  %v4045 = vsub.s32 1, %v4044
  %v4046 = vrot.slane %v4037, %v4045
  %v4047 = vlaneseq
  %v4048 = vshrl.u32 %v4047, 7
  %v4049 = vsub.s32 2, %v4048
  %v4050 = vrot.slane %v4037, %v4049
  %v4051 = vlaneseq
  %v4052 = vshrl.u32 %v4051, 7
  %v4053 = vsub.s32 3, %v4052
  %v4054 = vrot.slane %v4037, %v4053
  %v4059 = vmul.f32 %v4029, %v4042
  %v4060 = vmul.f32 %v4025, %v4046
  %v4061 = vmul.f32 %v4021, %v4050
  %v4062 = vmul.f32 %v4033, %v4054
  %v4063 = vmul.f32 %v4030, %v4042
  %v4064 = vmul.f32 %v4026, %v4046
  %v4065 = vmul.f32 %v4022, %v4050
  %v4066 = vmul.f32 %v4034, %v4054
  %v4067 = vmul.f32 %v4031, %v4042
  %v4068 = vmul.f32 %v4027, %v4046
  %v4069 = vmul.f32 %v4023, %v4050
  %v4070 = vmul.f32 %v4035, %v4054
  %v4071 = vmul.f32 %v4032, %v4042
  %v4072 = vmul.f32 %v4028, %v4046
  %v4073 = vmul.f32 %v4024, %v4050
  %v4074 = vmul.f32 %v4036, %v4054
  %4075 = vrot.lane.b32.xlu0 %v3543, 112
  %v4076 = vpop.permute.xlu0 %4075
  %4077 = vrot.lane.b32.xlu0 %v3547, 112
  %v4078 = vpop.permute.xlu0 %4077
  %4079 = vrot.lane.b32.xlu0 %v3551, 112
  %v4080 = vpop.permute.xlu0 %4079
  %4081 = vrot.lane.b32.xlu0 %v3555, 112
  %v4082 = vpop.permute.xlu0 %4081
  %4083 = vrot.lane.b32.xlu0 %v3544, 112
  %v4084 = vpop.permute.xlu0 %4083
  %4085 = vrot.lane.b32.xlu0 %v3548, 112
  %v4086 = vpop.permute.xlu0 %4085
  %4087 = vrot.lane.b32.xlu0 %v3552, 112
  %v4088 = vpop.permute.xlu0 %4087
  %4089 = vrot.lane.b32.xlu0 %v3556, 112
  %v4090 = vpop.permute.xlu0 %4089
  %4091 = vrot.lane.b32.xlu0 %v3545, 112
  %v4092 = vpop.permute.xlu0 %4091
  %4093 = vrot.lane.b32.xlu0 %v3549, 112
  %v4094 = vpop.permute.xlu0 %4093
  %4095 = vrot.lane.b32.xlu0 %v3553, 112
  %v4096 = vpop.permute.xlu0 %4095
  %4097 = vrot.lane.b32.xlu0 %v3557, 112
  %v4098 = vpop.permute.xlu0 %4097
  %4099 = vrot.lane.b32.xlu0 %v3546, 112
  %v4100 = vpop.permute.xlu0 %4099
  %4101 = vrot.lane.b32.xlu0 %v3550, 112
  %v4102 = vpop.permute.xlu0 %4101
  %4103 = vrot.lane.b32.xlu0 %v3554, 112
  %v4104 = vpop.permute.xlu0 %4103
  %4105 = vrot.lane.b32.xlu0 %v3558, 112
  %v4106 = vpop.permute.xlu0 %4105
  %v4107 = vsel %vm1066, %v4092, %v4100
  %v4108 = vsel %vm1066, %v4094, %v4102
  %v4109 = vsel %vm1066, %v4096, %v4104
  %v4110 = vsel %vm1066, %v4098, %v4106
  %v4111 = vsel %vm1066, %v4084, %v4092
  %v4112 = vsel %vm1066, %v4086, %v4094
  %v4113 = vsel %vm1066, %v4088, %v4096
  %v4114 = vsel %vm1066, %v4090, %v4098
  %v4115 = vsel %vm1066, %v4076, %v4084
  %v4116 = vsel %vm1066, %v4078, %v4086
  %v4117 = vsel %vm1066, %v4080, %v4088
  %v4118 = vsel %vm1066, %v4082, %v4090
  %v4119 = vsel %vm1066, %v4100, %v4076
  %v4120 = vsel %vm1066, %v4102, %v4078
  %v4121 = vsel %vm1066, %v4104, %v4080
  %v4122 = vsel %vm1066, %v4106, %v4082
  %v4123 = vld [vmem:[%s1083] ss:$8 sm:$0xf]
  %v4125 = vlaneseq
  %v4126 = vshrl.u32 %v4125, 7
  %v4127 = vsub.s32 0, %v4126
  %v4128 = vrot.slane %v4123, %v4127
  %v4129 = vlaneseq
  %v4130 = vshrl.u32 %v4129, 7
  %v4131 = vsub.s32 1, %v4130
  %v4132 = vrot.slane %v4123, %v4131
  %v4133 = vlaneseq
  %v4134 = vshrl.u32 %v4133, 7
  %v4135 = vsub.s32 2, %v4134
  %v4136 = vrot.slane %v4123, %v4135
  %v4137 = vlaneseq
  %v4138 = vshrl.u32 %v4137, 7
  %v4139 = vsub.s32 3, %v4138
  %v4140 = vrot.slane %v4123, %v4139
  %v4145 = vmul.f32 %v4115, %v4128
  %v4146 = vmul.f32 %v4111, %v4132
  %v4147 = vmul.f32 %v4107, %v4136
  %v4148 = vmul.f32 %v4119, %v4140
  %v4149 = vmul.f32 %v4116, %v4128
  %v4150 = vmul.f32 %v4112, %v4132
  %v4151 = vmul.f32 %v4108, %v4136
  %v4152 = vmul.f32 %v4120, %v4140
  %v4153 = vmul.f32 %v4117, %v4128
  %v4154 = vmul.f32 %v4113, %v4132
  %v4155 = vmul.f32 %v4109, %v4136
  %v4156 = vmul.f32 %v4121, %v4140
  %v4157 = vmul.f32 %v4118, %v4128
  %v4158 = vmul.f32 %v4114, %v4132
  %v4159 = vmul.f32 %v4110, %v4136
  %v4160 = vmul.f32 %v4122, %v4140
  %4161 = vrot.lane.b32.xlu0 %v3543, 111
  %v4162 = vpop.permute.xlu0 %4161
  %4163 = vrot.lane.b32.xlu0 %v3547, 111
  %v4164 = vpop.permute.xlu0 %4163
  %4165 = vrot.lane.b32.xlu0 %v3551, 111
  %v4166 = vpop.permute.xlu0 %4165
  %4167 = vrot.lane.b32.xlu0 %v3555, 111
  %v4168 = vpop.permute.xlu0 %4167
  %4169 = vrot.lane.b32.xlu0 %v3544, 111
  %v4170 = vpop.permute.xlu0 %4169
  %4171 = vrot.lane.b32.xlu0 %v3548, 111
  %v4172 = vpop.permute.xlu0 %4171
  %4173 = vrot.lane.b32.xlu0 %v3552, 111
  %v4174 = vpop.permute.xlu0 %4173
  %4175 = vrot.lane.b32.xlu0 %v3556, 111
  %v4176 = vpop.permute.xlu0 %4175
  %4177 = vrot.lane.b32.xlu0 %v3545, 111
  %v4178 = vpop.permute.xlu0 %4177
  %4179 = vrot.lane.b32.xlu0 %v3549, 111
  %v4180 = vpop.permute.xlu0 %4179
  %4181 = vrot.lane.b32.xlu0 %v3553, 111
  %v4182 = vpop.permute.xlu0 %4181
  %4183 = vrot.lane.b32.xlu0 %v3557, 111
  %v4184 = vpop.permute.xlu0 %4183
  %4185 = vrot.lane.b32.xlu0 %v3546, 111
  %v4186 = vpop.permute.xlu0 %4185
  %4187 = vrot.lane.b32.xlu0 %v3550, 111
  %v4188 = vpop.permute.xlu0 %4187
  %4189 = vrot.lane.b32.xlu0 %v3554, 111
  %v4190 = vpop.permute.xlu0 %4189
  %4191 = vrot.lane.b32.xlu0 %v3558, 111
  %v4192 = vpop.permute.xlu0 %4191
  %v4193 = vsel %vm1154, %v4178, %v4186
  %v4194 = vsel %vm1154, %v4180, %v4188
  %v4195 = vsel %vm1154, %v4182, %v4190
  %v4196 = vsel %vm1154, %v4184, %v4192
  %v4197 = vsel %vm1154, %v4170, %v4178
  %v4198 = vsel %vm1154, %v4172, %v4180
  %v4199 = vsel %vm1154, %v4174, %v4182
  %v4200 = vsel %vm1154, %v4176, %v4184
  %v4201 = vsel %vm1154, %v4162, %v4170
  %v4202 = vsel %vm1154, %v4164, %v4172
  %v4203 = vsel %vm1154, %v4166, %v4174
  %v4204 = vsel %vm1154, %v4168, %v4176
  %v4205 = vsel %vm1154, %v4186, %v4162
  %v4206 = vsel %vm1154, %v4188, %v4164
  %v4207 = vsel %vm1154, %v4190, %v4166
  %v4208 = vsel %vm1154, %v4192, %v4168
  %v4209 = vld [vmem:[%s1171] ss:$8 sm:$0xf]
  %v4211 = vlaneseq
  %v4212 = vshrl.u32 %v4211, 7
  %v4213 = vsub.s32 0, %v4212
  %v4214 = vrot.slane %v4209, %v4213
  %v4215 = vlaneseq
  %v4216 = vshrl.u32 %v4215, 7
  %v4217 = vsub.s32 1, %v4216
  %v4218 = vrot.slane %v4209, %v4217
  %v4219 = vlaneseq
  %v4220 = vshrl.u32 %v4219, 7
  %v4221 = vsub.s32 2, %v4220
  %v4222 = vrot.slane %v4209, %v4221
  %v4223 = vlaneseq
  %v4224 = vshrl.u32 %v4223, 7
  %v4225 = vsub.s32 3, %v4224
  %v4226 = vrot.slane %v4209, %v4225
  %v4231 = vmul.f32 %v4201, %v4214
  %v4232 = vmul.f32 %v4197, %v4218
  %v4233 = vmul.f32 %v4193, %v4222
  %v4234 = vmul.f32 %v4205, %v4226
  %v4235 = vmul.f32 %v4202, %v4214
  %v4236 = vmul.f32 %v4198, %v4218
  %v4237 = vmul.f32 %v4194, %v4222
  %v4238 = vmul.f32 %v4206, %v4226
  %v4239 = vmul.f32 %v4203, %v4214
  %v4240 = vmul.f32 %v4199, %v4218
  %v4241 = vmul.f32 %v4195, %v4222
  %v4242 = vmul.f32 %v4207, %v4226
  %v4243 = vmul.f32 %v4204, %v4214
  %v4244 = vmul.f32 %v4200, %v4218
  %v4245 = vmul.f32 %v4196, %v4222
  %v4246 = vmul.f32 %v4208, %v4226
  %v4247 = vld [vmem:[%s13] sm:$0xff]
  %v4248 = vld [vmem:[%s13 + $0x8] sm:$0xff]
  %v4249 = vld [vmem:[%s13 + $0x10] sm:$0xff]
  %v4250 = vld [vmem:[%s12] sm:$0xff]
  %4252 = vset.pattern.permute.xlu0 2
  %4253 = vperm.xlu0 %4252, %v4250
  %v4254 = vpop.permute.xlu0 %4253
  %v4257 = vsel %vm1219, %v4249, 0
  %4259 = vmatprep.subr.mxu0 %v3630
  %4260 = vmatpush1.msra.mxu0 %v3629
  %4261 = vmatprep.subr.mxu0 %v3634
  %4262 = vmatpush1.msra.mxu0 %v3633
  %4263 = vmatprep.subr.mxu0 %v3638
  %4264 = vmatpush1.msra.mxu0 %v3637
  %4265 = vmatprep.subr.mxu0 %v3642
  %4266 = vmatpush1.msra.mxu0 %v3641
  %4267 = vmatprep.subr.mxu0 %v3716
  %4268 = vmatpush1.msra.mxu0 %v3715
  %4269 = vmatprep.subr.mxu0 %v3720
  %4270 = vmatpush1.msra.mxu0 %v3719
  %4271 = vmatprep.subr.mxu0 %v3724
  %4272 = vmatpush1.msra.mxu0 %v3723
  %4273 = vmatprep.subr.mxu0 %v3728
  %4274 = vmatpush1.msra.mxu0 %v3727
  %4275 = vmatprep.subr.mxu0 %v3802
  %4276 = vmatpush1.msra.mxu0 %v3801
  %4277 = vmatprep.subr.mxu0 %v3806
  %4278 = vmatpush1.msra.mxu0 %v3805
  %4279 = vmatprep.subr.mxu0 %v3810
  %4280 = vmatpush1.msra.mxu0 %v3809
  %4281 = vmatprep.subr.mxu0 %v3814
  %4282 = vmatpush1.msra.mxu0 %v3813
  %4283 = vmatprep.subr.mxu0 %v3888
  %4284 = vmatpush1.msra.mxu0 %v3887
  %4285 = vmatprep.subr.mxu0 %v3892
  %4286 = vmatpush1.msra.mxu0 %v3891
  %4287 = vmatprep.subr.mxu0 %v3896
  %4288 = vmatpush1.msra.mxu0 %v3895
  %4289 = vmatprep.subr.mxu0 %v3900
  %4290 = vmatpush1.msra.mxu0 %v3899
  %4291 = vmatprep.subr.mxu0 %v3544
  %4292 = vmatpush1.msra.mxu0 %v3543
  %4293 = vmatprep.subr.mxu0 %v3548
  %4294 = vmatpush1.msra.mxu0 %v3547
  %4295 = vmatprep.subr.mxu0 %v3552
  %4296 = vmatpush1.msra.mxu0 %v3551
  %4297 = vmatprep.subr.mxu0 %v3556
  %4298 = vmatpush1.msra.mxu0 %v3555
  %4299 = vmatprep.subr.mxu0 %v3974
  %4300 = vmatpush1.msra.mxu0 %v3973
  %4301 = vmatprep.subr.mxu0 %v3978
  %4302 = vmatpush1.msra.mxu0 %v3977
  %4303 = vmatprep.subr.mxu0 %v3982
  %4304 = vmatpush1.msra.mxu0 %v3981
  %4305 = vmatprep.subr.mxu0 %v3986
  %4306 = vmatpush1.msra.mxu0 %v3985
  %4307 = vmatprep.subr.mxu0 %v4060
  %4308 = vmatpush1.msra.mxu0 %v4059
  %4309 = vmatprep.subr.mxu0 %v4064
  %4310 = vmatpush1.msra.mxu0 %v4063
  %4311 = vmatprep.subr.mxu0 %v4068
  %4312 = vmatpush1.msra.mxu0 %v4067
  %4313 = vmatprep.subr.mxu0 %v4072
  %4314 = vmatpush1.msra.mxu0 %v4071
  %4315 = vmatprep.subr.mxu0 %v4146
  %4316 = vmatpush1.msra.mxu0 %v4145
  %4317 = vmatprep.subr.mxu0 %v4150
  %4318 = vmatpush1.msra.mxu0 %v4149
  %4319 = vmatprep.subr.mxu0 %v4154
  %4320 = vmatpush1.msra.mxu0 %v4153
  %4321 = vmatprep.subr.mxu0 %v4158
  %4322 = vmatpush1.msra.mxu0 %v4157
  %4323 = vmatprep.mubr.f32.mxu0 %v4248
  %4324 = vmatmul.mubr.f32.gmra.mrb[0].mxu0 %v4247
  %v4325 = vpop.f32.mrb[0].mxu0
  %v4326 = vadd.f32 %v4254, %v4325
  %v4327 = vpop.f32.mrb[0].mxu0
  %v4328 = vadd.f32 %v4254, %v4327
  %4329 = vdwg.mxu0
  %4330 = vmatprep.subr.mxu0 %v4232
  %4331 = vmatpush1.msra.mxu0 %v4231
  %4332 = vmatprep.subr.mxu0 %v4236
  %4333 = vmatpush1.msra.mxu0 %v4235
  %4334 = vmatprep.subr.mxu0 %v4240
  %4335 = vmatpush1.msra.mxu0 %v4239
  %4336 = vmatprep.subr.mxu0 %v4244
  %4337 = vmatpush1.msra.mxu0 %v4243
  %4338 = vmatprep.subr.mxu0 0.0
  %4339 = vmatpush1.msra.mxu0 0.0
  %4340 = vmatprep.subr.mxu0 0.0
  %4341 = vmatpush1.msra.mxu0 0.0
  %4342 = vmatprep.subr.mxu0 0.0
  %4343 = vmatpush1.msra.mxu0 0.0
  %4344 = vmatprep.subr.mxu0 0.0
  %4345 = vmatpush1.msra.mxu0 0.0
  %4346 = vmatprep.subr.mxu0 0.0
  %4347 = vmatpush1.msra.mxu0 0.0
  %4348 = vmatprep.subr.mxu0 0.0
  %4349 = vmatpush1.msra.mxu0 0.0
  %4350 = vmatprep.subr.mxu0 0.0
  %4351 = vmatpush1.msra.mxu0 0.0
  %4352 = vmatprep.subr.mxu0 0.0
  %4353 = vmatpush1.msra.mxu0 0.0
  %4354 = vmatprep.subr.mxu0 0.0
  %4355 = vmatpush1.msra.mxu0 0.0
  %4356 = vmatprep.subr.mxu0 0.0
  %4357 = vmatpush1.msra.mxu0 0.0
  %4358 = vmatprep.subr.mxu0 0.0
  %4359 = vmatpush1.msra.mxu0 0.0
  %4360 = vmatprep.subr.mxu0 0.0
  %4361 = vmatpush1.msra.mxu0 0.0
  %4362 = vmatprep.subr.mxu0 0.0
  %4363 = vmatpush1.msra.mxu0 0.0
  %4364 = vmatprep.subr.mxu0 0.0
  %4365 = vmatpush1.msra.mxu0 0.0
  %4366 = vmatprep.subr.mxu0 0.0
  %4367 = vmatpush1.msra.mxu0 0.0
  %4368 = vmatprep.subr.mxu0 0.0
  %4369 = vmatpush1.msra.mxu0 0.0
  %4370 = vmatprep.subr.mxu0 0.0
  %4371 = vmatpush1.msra.mxu0 0.0
  %4372 = vmatprep.subr.mxu0 0.0
  %4373 = vmatpush1.msra.mxu0 0.0
  %4374 = vmatprep.subr.mxu0 0.0
  %4375 = vmatpush1.msra.mxu0 0.0
  %4376 = vmatprep.subr.mxu0 0.0
  %4377 = vmatpush1.msra.mxu0 0.0
  %4378 = vmatprep.subr.mxu0 0.0
  %4379 = vmatpush1.msra.mxu0 0.0
  %4380 = vmatprep.subr.mxu0 0.0
  %4381 = vmatpush1.msra.mxu0 0.0
  %4382 = vmatprep.subr.mxu0 0.0
  %4383 = vmatpush1.msra.mxu0 0.0
  %4384 = vmatprep.subr.mxu0 0.0
  %4385 = vmatpush1.msra.mxu0 0.0
  %4386 = vmatprep.subr.mxu0 0.0
  %4387 = vmatpush1.msra.mxu0 0.0
  %4388 = vmatprep.subr.mxu0 0.0
  %4389 = vmatpush1.msra.mxu0 0.0
  %4390 = vmatprep.subr.mxu0 0.0
  %4391 = vmatpush1.msra.mxu0 0.0
  %4392 = vmatprep.subr.mxu0 0.0
  %4393 = vmatpush1.msra.mxu0 0.0
  %4394 = vmatprep.mubr.f32.mxu0 0.0
  %4395 = vmatmul.mubr.f32.gmra.mrb[0].mxu0 %v4257
  %v4396 = vpop.f32.mrb[0].mxu0
  %v4397 = vadd.f32 %v4326, %v4396
  %v4398 = vpop.f32.mrb[0].mxu0
  %v4399 = vadd.f32 %v4328, %v4398
  %4400 = vdwg.mxu0
  %4401 = vmatprep.subr.mxu0 %v3632
  %4402 = vmatpush1.msra.mxu0 %v3631
  %4403 = vmatprep.subr.mxu0 %v3636
  %4404 = vmatpush1.msra.mxu0 %v3635
  %4405 = vmatprep.subr.mxu0 %v3640
  %4406 = vmatpush1.msra.mxu0 %v3639
  %4407 = vmatprep.subr.mxu0 %v3644
  %4408 = vmatpush1.msra.mxu0 %v3643
  %4409 = vmatprep.subr.mxu0 %v3718
  %4410 = vmatpush1.msra.mxu0 %v3717
  %4411 = vmatprep.subr.mxu0 %v3722
  %4412 = vmatpush1.msra.mxu0 %v3721
  %4413 = vmatprep.subr.mxu0 %v3726
  %4414 = vmatpush1.msra.mxu0 %v3725
  %4415 = vmatprep.subr.mxu0 %v3730
  %4416 = vmatpush1.msra.mxu0 %v3729
  %4417 = vmatprep.subr.mxu0 %v3804
  %4418 = vmatpush1.msra.mxu0 %v3803
  %4419 = vmatprep.subr.mxu0 %v3808
  %4420 = vmatpush1.msra.mxu0 %v3807
  %4421 = vmatprep.subr.mxu0 %v3812
  %4422 = vmatpush1.msra.mxu0 %v3811
  %4423 = vmatprep.subr.mxu0 %v3816
  %4424 = vmatpush1.msra.mxu0 %v3815
  %4425 = vmatprep.subr.mxu0 %v3890
  %4426 = vmatpush1.msra.mxu0 %v3889
  %4427 = vmatprep.subr.mxu0 %v3894
  %4428 = vmatpush1.msra.mxu0 %v3893
  %4429 = vmatprep.subr.mxu0 %v3898
  %4430 = vmatpush1.msra.mxu0 %v3897
  %4431 = vmatprep.subr.mxu0 %v3902
  %4432 = vmatpush1.msra.mxu0 %v3901
  %4433 = vmatprep.subr.mxu0 %v3546
  %4434 = vmatpush1.msra.mxu0 %v3545
  %4435 = vmatprep.subr.mxu0 %v3550
  %4436 = vmatpush1.msra.mxu0 %v3549
  %4437 = vmatprep.subr.mxu0 %v3554
  %4438 = vmatpush1.msra.mxu0 %v3553
  %4439 = vmatprep.subr.mxu0 %v3558
  %4440 = vmatpush1.msra.mxu0 %v3557
  %4441 = vmatprep.subr.mxu0 %v3976
  %4442 = vmatpush1.msra.mxu0 %v3975
  %4443 = vmatprep.subr.mxu0 %v3980
  %4444 = vmatpush1.msra.mxu0 %v3979
  %4445 = vmatprep.subr.mxu0 %v3984
  %4446 = vmatpush1.msra.mxu0 %v3983
  %4447 = vmatprep.subr.mxu0 %v3988
  %4448 = vmatpush1.msra.mxu0 %v3987
  %4449 = vmatprep.subr.mxu0 %v4062
  %4450 = vmatpush1.msra.mxu0 %v4061
  %4451 = vmatprep.subr.mxu0 %v4066
  %4452 = vmatpush1.msra.mxu0 %v4065
  %4453 = vmatprep.subr.mxu0 %v4070
  %4454 = vmatpush1.msra.mxu0 %v4069
  %4455 = vmatprep.subr.mxu0 %v4074
  %4456 = vmatpush1.msra.mxu0 %v4073
  %4457 = vmatprep.subr.mxu0 %v4148
  %4458 = vmatpush1.msra.mxu0 %v4147
  %4459 = vmatprep.subr.mxu0 %v4152
  %4460 = vmatpush1.msra.mxu0 %v4151
  %4461 = vmatprep.subr.mxu0 %v4156
  %4462 = vmatpush1.msra.mxu0 %v4155
  %4463 = vmatprep.subr.mxu0 %v4160
  %4464 = vmatpush1.msra.mxu0 %v4159
  %4465 = vmatprep.mubr.f32.mxu0 %v4248
  %4466 = vmatmul.mubr.f32.gmra.mrb[0].mxu0 %v4247
  %v4467 = vpop.f32.mrb[0].mxu0
  %v4468 = vadd.f32 %v4254, %v4467
  %v4469 = vpop.f32.mrb[0].mxu0
  %v4470 = vadd.f32 %v4254, %v4469
  %4471 = vdwg.mxu0
  %4472 = vmatprep.subr.mxu0 %v4234
  %4473 = vmatpush1.msra.mxu0 %v4233
  %4474 = vmatprep.subr.mxu0 %v4238
  %4475 = vmatpush1.msra.mxu0 %v4237
  %4476 = vmatprep.subr.mxu0 %v4242
  %4477 = vmatpush1.msra.mxu0 %v4241
  %4478 = vmatprep.subr.mxu0 %v4246
  %4479 = vmatpush1.msra.mxu0 %v4245
  %4480 = vmatprep.subr.mxu0 0.0
  %4481 = vmatpush1.msra.mxu0 0.0
  %4482 = vmatprep.subr.mxu0 0.0
  %4483 = vmatpush1.msra.mxu0 0.0
  %4484 = vmatprep.subr.mxu0 0.0
  %4485 = vmatpush1.msra.mxu0 0.0
  %4486 = vmatprep.subr.mxu0 0.0
  %4487 = vmatpush1.msra.mxu0 0.0
  %4488 = vmatprep.subr.mxu0 0.0
  %4489 = vmatpush1.msra.mxu0 0.0
  %4490 = vmatprep.subr.mxu0 0.0
  %4491 = vmatpush1.msra.mxu0 0.0
  %4492 = vmatprep.subr.mxu0 0.0
  %4493 = vmatpush1.msra.mxu0 0.0
  %4494 = vmatprep.subr.mxu0 0.0
  %4495 = vmatpush1.msra.mxu0 0.0
  %4496 = vmatprep.subr.mxu0 0.0
  %4497 = vmatpush1.msra.mxu0 0.0
  %4498 = vmatprep.subr.mxu0 0.0
  %4499 = vmatpush1.msra.mxu0 0.0
  %4500 = vmatprep.subr.mxu0 0.0
  %4501 = vmatpush1.msra.mxu0 0.0
  %4502 = vmatprep.subr.mxu0 0.0
  %4503 = vmatpush1.msra.mxu0 0.0
  %4504 = vmatprep.subr.mxu0 0.0
  %4505 = vmatpush1.msra.mxu0 0.0
  %4506 = vmatprep.subr.mxu0 0.0
  %4507 = vmatpush1.msra.mxu0 0.0
  %4508 = vmatprep.subr.mxu0 0.0
  %4509 = vmatpush1.msra.mxu0 0.0
  %4510 = vmatprep.subr.mxu0 0.0
  %4511 = vmatpush1.msra.mxu0 0.0
  %4512 = vmatprep.subr.mxu0 0.0
  %4513 = vmatpush1.msra.mxu0 0.0
  %4514 = vmatprep.subr.mxu0 0.0
  %4515 = vmatpush1.msra.mxu0 0.0
  %4516 = vmatprep.subr.mxu0 0.0
  %4517 = vmatpush1.msra.mxu0 0.0
  %4518 = vmatprep.subr.mxu0 0.0
  %4519 = vmatpush1.msra.mxu0 0.0
  %4520 = vmatprep.subr.mxu0 0.0
  %4521 = vmatpush1.msra.mxu0 0.0
  %4522 = vmatprep.subr.mxu0 0.0
  %4523 = vmatpush1.msra.mxu0 0.0
  %4524 = vmatprep.subr.mxu0 0.0
  %4525 = vmatpush1.msra.mxu0 0.0
  %4526 = vmatprep.subr.mxu0 0.0
  %4527 = vmatpush1.msra.mxu0 0.0
  %4528 = vmatprep.subr.mxu0 0.0
  %4529 = vmatpush1.msra.mxu0 0.0
  %4530 = vmatprep.subr.mxu0 0.0
  %4531 = vmatpush1.msra.mxu0 0.0
  %4532 = vmatprep.subr.mxu0 0.0
  %4533 = vmatpush1.msra.mxu0 0.0
  %4534 = vmatprep.subr.mxu0 0.0
  %4535 = vmatpush1.msra.mxu0 0.0
  %4536 = vmatprep.mubr.f32.mxu0 0.0
  %4537 = vmatmul.mubr.f32.gmra.mrb[0].mxu0 %v4257
  %v4538 = vpop.f32.mrb[0].mxu0
  %v4539 = vadd.f32 %v4468, %v4538
  %v4540 = vpop.f32.mrb[0].mxu0
  %v4541 = vadd.f32 %v4470, %v4540
  %4542 = vdwg.mxu0
  %4543 = vst [vmem:[%s14 + $0x60] sm:$0xff] %v4397
  %4544 = vst [vmem:[%s14 + $0x68] sm:$0xff] %v4399
  %4545 = vst [vmem:[%s14 + $0x70] sm:$0xff] %v4539
  %4546 = vst [vmem:[%s14 + $0x78] sm:$0xff] %v4541
  // Predicated region
  $region58: #{dense_block.1} parent=0 // pred_check
    _
  $region59: #{dense_block.1} parent=0 // pred_check_branch
    %4548 = sbr.rel (0) target = $region61
  $region60: #{dense_block.1} parent=0 // pred_region
    _
  $region61: #{dense_block.1} parent=0 // pred_fallthru
    _
  // Predicated region
  $region62: #{dense_block.1} parent=0 // pred_check
    _
  $region63: #{dense_block.1} parent=0 // pred_check_branch
    %4550 = sbr.rel (0) target = $region65
  $region64: #{dense_block.1} parent=0 // pred_region
    _
  $region65: #{dense_block.1} parent=0 // pred_fallthru
    _

</llo_original>
